<compile_context>
chip_gen: v7x
topology: tpu7x:2x2x1
jax: 0.10.0
libtpu: 0.0.40
codegen_flags: <defaults>
</compile_context>

<pallas_src>
import functools
import math

import numpy as np
import jax
import jax.numpy as jnp
from jax.experimental import pallas as pl
from jax.experimental.pallas import tpu as pltpu


# ---------------------------------------------------------------------------
# Host-side (trace-time) helpers, cached per shape
# ---------------------------------------------------------------------------
@functools.lru_cache(maxsize=None)
def _lerp_taps(n_in, n_out):
    """Per output index: (src_lo, w_lo, w_hi) for 1-D bilinear, align_corners=True."""
    if n_in == 1:
        return tuple((0, 1.0, 0.0) for _ in range(n_out))
    scale = (n_in - 1) / (n_out - 1)
    taps = []
    for i in range(n_out):
        src = i * scale
        i0 = min(int(math.floor(src)), n_in - 2)
        f = src - i0
        taps.append((i0, 1.0 - f, f))
    return tuple(taps)


@functools.lru_cache(maxsize=None)
def _upsample_matrix_1d(n_in, n_out):
    """(n_out, n_in) dense 1-D bilinear (align_corners=True) operator."""
    m = np.zeros((n_out, n_in), np.float32)
    for i, (i0, a, b) in enumerate(_lerp_taps(n_in, n_out)):
        m[i, i0] += a
        m[i, min(i0 + 1, n_in - 1)] += b
    return m


def _fold_bn(w, b, gamma, beta, mean, var, eps=1e-5):
    """Fold eval-mode BatchNorm into conv weight/bias."""
    s = gamma / jnp.sqrt(var + eps)
    return w * s[:, None, None, None], (b - mean) * s + beta


def _stack_taps(w_oihw):
    """(O, I, 3, 3) -> (O, 9*I), row index = (ky*3 + kx)*I + c."""
    o, i = w_oihw.shape[0], w_oihw.shape[1]
    return jnp.transpose(w_oihw, (0, 2, 3, 1)).reshape(o, 9 * i)


# ---------------------------------------------------------------------------
# Kernel
# ---------------------------------------------------------------------------
def _upblock_kernel(x1_ref, x2_ref, x3_ref,
                    w1x1_ref, b1x1_ref, uwT_ref,
                    wk1_ref, b1_ref, wk2_ref, b2_ref,
                    out_ref,
                    src_ref, xw_ref, cat_ref, stack_ref,
                    *, h, w, ho, wo):
    f32 = jnp.float32

    x1 = x1_ref[0]                        # (C1, H*W)
    x2 = x2_ref[0]                        # (C2, Ho*Wo)
    c2 = x2.shape[0]
    c3 = x3_ref.shape[1]
    cup = c3 + c2                         # channels that get upsampled
    ccat = cup + c2
    nhw = ho * wo
    cmid = wk1_ref.shape[0]

    # --- 1x1 conv on x1 (low resolution): one MXU matmul --------------------
    y1 = jnp.dot(w1x1_ref[...], x1, preferred_element_type=f32) + b1x1_ref[...]

    # Upsample source = [x3 ; conv1x1(x1)] stacked on sublanes.  (conv-A
    # weights were input-channel permuted on the host to match this order.)
    src_ref[0:c3, :] = x3_ref[0]
    src_ref[c3:cup, :] = y1

    # --- separable 2x bilinear upsample (align_corners=True) ----------------
    # Stage 1 (W direction): (Cup, W) @ (W, Wo) per input row -> xw scratch.
    uwT = uwT_ref[...]                    # (W, Wo)
    for hi in range(h):
        chunk = src_ref[:, hi * w:(hi + 1) * w]
        xw_ref[:, hi * wo:(hi + 1) * wo] = jnp.dot(
            chunk, uwT, preferred_element_type=f32)
    # Stage 2 (H direction): 2-tap lerp per output row, written straight into
    # the concat scratch (rows [0:cup], lane block i*Wo).
    for i, (h0, a0, a1) in enumerate(_lerp_taps(h, ho)):
        r0 = xw_ref[:, h0 * wo:(h0 + 1) * wo]
        r1 = xw_ref[:, (h0 + 1) * wo:(h0 + 2) * wo]
        cat_ref[0:cup, i * wo:(i + 1) * wo] = a0 * r0 + a1 * r1

    # Skip connection x2 occupies the remaining concat rows.
    cat_ref[cup:ccat, :] = x2

    # --- in-kernel boundary masks (no HBM mask tensor, no integer div) ------
    pos = jax.lax.broadcasted_iota(jnp.int32, (1, nhw), 1)
    posf = pos.astype(f32)
    rowf = jnp.floor((posf + 0.5) * (1.0 / wo))        # output row index
    colf = posf - rowf * wo                            # output col index
    row_lo = pos >= wo                                 # row >= 1
    row_hi = pos < (ho - 1) * wo                       # row <= Ho-2
    col_lo = colf > 0.5                                # col >= 1
    col_hi = colf < wo - 1.5                           # col <= Wo-2

    def conv3x3(x_flat, cin, wref, bref):
        # Pack the 9 rolled/masked taps into (9*cin, nhw), then one MXU matmul
        # against the host-stacked (cout, 9*cin) weights.
        t = 0
        for dy in (-1, 0, 1):
            for dx in (-1, 0, 1):
                if dy == 0 and dx == 0:
                    tap = x_flat
                else:
                    shift = (-(dy * wo + dx)) % nhw
                    tap = pltpu.roll(x_flat, shift, axis=1)
                    ok = None
                    if dy == -1:
                        ok = row_lo
                    elif dy == 1:
                        ok = row_hi
                    if dx == -1:
                        ok = col_lo if ok is None else ok & col_lo
                    elif dx == 1:
                        ok = col_hi if ok is None else ok & col_hi
                    tap = jnp.where(ok, tap, 0.0)
                stack_ref[t * cin:(t + 1) * cin, :] = tap
                t += 1
        acc = jnp.dot(wref[...], stack_ref[0:9 * cin, :],
                      preferred_element_type=f32)
        return acc + bref[...]

    def leaky_relu(v):
        return jnp.where(v > 0, v, 0.01 * v)

    hmid = leaky_relu(conv3x3(cat_ref[...], ccat, wk1_ref, b1_ref))
    # TODO(synk): Dropout is the identity here (inference) and BatchNorm uses
    # running stats folded into the conv weights (eval mode); train-mode batch
    # statistics / dropout RNG are not computed in-kernel.
    o = leaky_relu(conv3x3(hmid, cmid, wk2_ref, b2_ref))
    out_ref[0] = o.astype(out_ref.dtype)


# ---------------------------------------------------------------------------
# Wrapper
# ---------------------------------------------------------------------------
def upblock_3input_forward(x1, x2, x3, params):
    n, c1, h, w = x1.shape
    _, c2, ho, wo = x2.shape
    _, c3, h3, w3 = x3.shape
    assert (ho, wo) == (2 * h, 2 * w) and (h3, w3) == (h, w) and c3 == c2, \
        "UpBlock_3input shape contract"
    hw, howo = h * w, ho * wo
    cup = c3 + c2
    ccat = cup + c2
    cmid = params["conv_a_w"].shape[0]
    cout = params["conv_b_w"].shape[0]
    assert params["conv_a_w"].shape[1] == ccat

    # ---- host-side parameter prep (tiny / one-off) ----
    w1x1 = params["conv1x1_w"][:, :, 0, 0]                       # (C2, C1)
    b1x1 = params["conv1x1_b"].reshape(c2, 1)
    wa, ba = _fold_bn(params["conv_a_w"], params["conv_a_b"], params["bn_a_g"],
                      params["bn_a_b"], params["bn_a_m"], params["bn_a_v"])
    wb, bb = _fold_bn(params["conv_b_w"], params["conv_b_b"], params["bn_b_g"],
                      params["bn_b_b"], params["bn_b_m"], params["bn_b_v"])
    # Kernel concat order is [x3_up, x1_up, x2]; PyTorch's is [x3_up, x2, x1_up].
    wa = jnp.concatenate([wa[:, :c3], wa[:, c3 + c2:], wa[:, c3:c3 + c2]], axis=1)
    wk1s, b1 = _stack_taps(wa), ba.reshape(cmid, 1)              # (Cmid, 9*Ccat)
    wk2s, b2 = _stack_taps(wb), bb.reshape(cout, 1)              # (Cout, 9*Cmid)

    uwT = jnp.asarray(_upsample_matrix_1d(w, wo).T)              # (W, Wo), ~2 KiB

    # NCHW stays; merging trailing spatial dims is a free reshape.
    x1f = x1.reshape(n, c1, hw)
    x2f = x2.reshape(n, c2, howo)
    x3f = x3.reshape(n, c3, hw)

    kernel = functools.partial(_upblock_kernel, h=h, w=w, ho=ho, wo=wo)
    stack_rows = 9 * max(ccat, cmid)

    flops_per_n = (2 * c2 * c1 * hw            # 1x1 conv
                   + 2 * cup * h * w * wo      # W-direction upsample matmuls
                   + 4 * cup * howo            # H-direction lerp
                   + 2 * cmid * 9 * ccat * howo
                   + 2 * cout * 9 * cmid * howo)
    bytes_per_n = 4 * (c1 * hw + c2 * howo + c3 * hw + cout * howo)
    weight_bytes = 4 * (c2 * c1 + c2 + w * wo
                        + cmid * 9 * ccat + cmid + cout * 9 * cmid + cout)
    cost = pl.CostEstimate(flops=n * flops_per_n, transcendentals=0,
                           bytes_accessed=n * bytes_per_n + weight_bytes)

    out = pl.pallas_call(
        kernel,
        out_shape=jax.ShapeDtypeStruct((n, cout, howo), jnp.float32),
        grid_spec=pltpu.PrefetchScalarGridSpec(
            num_scalar_prefetch=0,
            grid=(n,),
            in_specs=[
                pl.BlockSpec((1, c1, hw), lambda i: (i, 0, 0)),      # x1
                pl.BlockSpec((1, c2, howo), lambda i: (i, 0, 0)),    # x2
                pl.BlockSpec((1, c3, hw), lambda i: (i, 0, 0)),      # x3
                pl.BlockSpec((c2, c1), lambda i: (0, 0)),            # w1x1
                pl.BlockSpec((c2, 1), lambda i: (0, 0)),             # b1x1
                pl.BlockSpec((w, wo), lambda i: (0, 0)),             # Uw^T
                pl.BlockSpec((cmid, 9 * ccat), lambda i: (0, 0)),    # conv1 stacked W
                pl.BlockSpec((cmid, 1), lambda i: (0, 0)),           # conv1 bias
                pl.BlockSpec((cout, 9 * cmid), lambda i: (0, 0)),    # conv2 stacked W
                pl.BlockSpec((cout, 1), lambda i: (0, 0)),           # conv2 bias
            ],
            out_specs=pl.BlockSpec((1, cout, howo), lambda i: (i, 0, 0)),
            scratch_shapes=[
                pltpu.VMEM((cup, hw), jnp.float32),          # [x3 ; conv1x1(x1)]
                pltpu.VMEM((cup, h * wo), jnp.float32),      # W-upsampled rows
                pltpu.VMEM((ccat, howo), jnp.float32),       # concat buffer
                pltpu.VMEM((stack_rows, howo), jnp.float32),  # 9-tap stack
            ],
        ),
        compiler_params=pltpu.CompilerParams(
            dimension_semantics=("parallel",),
            vmem_limit_bytes=32 * 1024 * 1024),
        cost_estimate=cost,
    )(x1f, x2f, x3f, w1x1, b1x1, uwT, wk1s, b1, wk2s, b2)

    return out.reshape(n, cout, ho, wo)


# ---------------------------------------------------------------------------
# Pure-JAX reference (original PyTorch op order, dense upsample operator)
# ---------------------------------------------------------------------------
def upblock_3input_reference(x1, x2, x3, params):
    n, c1, h, w = x1.shape
    _, c2, ho, wo = x2.shape

    w1x1 = params["conv1x1_w"][:, :, 0, 0]
    wa, ba = _fold_bn(params["conv_a_w"], params["conv_a_b"], params["bn_a_g"],
                      params["bn_a_b"], params["bn_a_m"], params["bn_a_v"])
    wb, bb = _fold_bn(params["conv_b_w"], params["conv_b_b"], params["bn_b_g"],
                      params["bn_b_b"], params["bn_b_m"], params["bn_b_v"])
    up = jnp.asarray(np.kron(_upsample_matrix_1d(h, ho),
                             _upsample_matrix_1d(w, wo)).T)       # (HW, Ho*Wo)

    def upsample(x):
        nn, cc, hh, ww = x.shape
        xf = x.reshape(nn, cc, hh * ww)
        return jnp.einsum("ncp,pq->ncq", xf, up).reshape(nn, cc, 2 * hh, 2 * ww)

    def conv3x3(x, w_oihw, bias):
        _, _, hh, ww = x.shape
        xp = jnp.pad(x, ((0, 0), (0, 0), (1, 1), (1, 1)))
        out = None
        for ky in range(3):
            for kx in range(3):
                xs = xp[:, :, ky:ky + hh, kx:kx + ww]
                part = jnp.einsum("oc,nchw->nohw", w_oihw[:, :, ky, kx], xs)
                out = part if out is None else out + part
        z = out + bias[None, :, None, None]
        return jnp.where(z > 0, z, 0.01 * z)

    y1 = jnp.einsum("oc,nchw->nohw", w1x1, x1) + \
        params["conv1x1_b"][None, :, None, None]
    u1 = upsample(y1)
    u3 = upsample(x3)
    xcat = jnp.concatenate([u3, x2, u1], axis=1)
    hmid = conv3x3(xcat, wa, ba)
    return conv3x3(hmid, wb, bb)


# ---------------------------------------------------------------------------
# Deterministic synthetic parameters (PyTorch layouts)
# ---------------------------------------------------------------------------
def init_params(key, c1, c2, c_out):
    ks = jax.random.split(key, 14)
    f = jnp.float32
    nrm, uni = jax.random.normal, jax.random.uniform
    ccat = 3 * c2
    return {
        "conv1x1_w": 0.2 * nrm(ks[0], (c2, c1, 1, 1), f),
        "conv1x1_b": 0.1 * nrm(ks[1], (c2,), f),
        "conv_a_w": 0.15 * nrm(ks[2], (c_out, ccat, 3, 3), f),
        "conv_a_b": 0.1 * nrm(ks[3], (c_out,), f),
        "bn_a_g": 1.0 + 0.1 * nrm(ks[4], (c_out,), f),
        "bn_a_b": 0.1 * nrm(ks[5], (c_out,), f),
        "bn_a_m": 0.1 * nrm(ks[6], (c_out,), f),
        "bn_a_v": 0.5 + uni(ks[7], (c_out,), f),
        "conv_b_w": 0.15 * nrm(ks[8], (c_out, c_out, 3, 3), f),
        "conv_b_b": 0.1 * nrm(ks[9], (c_out,), f),
        "bn_b_g": 1.0 + 0.1 * nrm(ks[10], (c_out,), f),
        "bn_b_b": 0.1 * nrm(ks[11], (c_out,), f),
        "bn_b_m": 0.1 * nrm(ks[12], (c_out,), f),
        "bn_b_v": 0.5 + uni(ks[13], (c_out,), f),
    }


if __name__ == "__main__":
    # UpBlock_3input(in_channels1=8, in_channels2=4, in_channels3=4,
    #                out_channels=8, mode_upsampling=1, backbone='b2')
    N, C1, C2, C3, COUT, H, W = 2, 8, 4, 4, 8, 16, 16

    key = jax.random.PRNGKey(0)
    k1, k2, k3, kp = jax.random.split(key, 4)
    x1 = jax.random.normal(k1, (N, C1, H, W), jnp.float32)          # low-res feat
    x2 = jax.random.normal(k2, (N, C2, 2 * H, 2 * W), jnp.float32)  # skip (full res)
    x3 = jax.random.normal(k3, (N, C3, H, W), jnp.float32)          # low-res aux feat
    params = init_params(kp, C1, C2, COUT)

    out = jax.block_until_ready(upblock_3input_forward(x1, x2, x3, params))
    ref = jax.block_until_ready(upblock_3input_reference(x1, x2, x3, params))

    assert out.shape == (N, COUT, 2 * H, 2 * W)
    max_err = float(jnp.max(jnp.abs(out - ref)))
    assert jnp.allclose(out, ref, atol=1e-3, rtol=1e-3), f"mismatch: {max_err}"

    print("KERNEL_OK")
</pallas_src>

<mosaic_0001>
module attributes {stable_mosaic.version = 11 : i64} {
  func.func @_upblock_kernel(%arg0: i32, %arg1: memref<1x8x256xf32, #tpu.memory_space<vmem>>, %arg2: memref<1x4x1024xf32, #tpu.memory_space<vmem>>, %arg3: memref<1x4x256xf32, #tpu.memory_space<vmem>>, %arg4: memref<4x8xf32, #tpu.memory_space<vmem>>, %arg5: memref<4x1xf32, #tpu.memory_space<vmem>>, %arg6: memref<16x32xf32, #tpu.memory_space<vmem>>, %arg7: memref<8x108xf32, #tpu.memory_space<vmem>>, %arg8: memref<8x1xf32, #tpu.memory_space<vmem>>, %arg9: memref<8x72xf32, #tpu.memory_space<vmem>>, %arg10: memref<8x1xf32, #tpu.memory_space<vmem>>, %arg11: memref<1x8x1024xf32, #tpu.memory_space<vmem>>, %arg12: memref<8x256xf32, #tpu.memory_space<vmem>>, %arg13: memref<8x512xf32, #tpu.memory_space<vmem>>, %arg14: memref<12x1024xf32, #tpu.memory_space<vmem>>, %arg15: memref<108x1024xf32, #tpu.memory_space<vmem>>) attributes {dimension_semantics = [#tpu.dimension_semantics<parallel>], iteration_bounds = array<i64: 2>, scalar_prefetch = 0 : i64, scratch_operands = 4 : i64, tpu.core_type = #tpu.core_type<tc>, window_params = [{transform_indices = @transform_0, window_bounds = array<i64: 1, 8, 256>}, {transform_indices = @transform_1, window_bounds = array<i64: 1, 4, 1024>}, {transform_indices = @transform_2, window_bounds = array<i64: 1, 4, 256>}, {pipeline_mode = #tpu.pipeline_mode<synchronous>, transform_indices = @transform_3, window_bounds = array<i64: 4, 8>}, {pipeline_mode = #tpu.pipeline_mode<synchronous>, transform_indices = @transform_4, window_bounds = array<i64: 4, 1>}, {pipeline_mode = #tpu.pipeline_mode<synchronous>, transform_indices = @transform_5, window_bounds = array<i64: 16, 32>}, {pipeline_mode = #tpu.pipeline_mode<synchronous>, transform_indices = @transform_6, window_bounds = array<i64: 8, 108>}, {pipeline_mode = #tpu.pipeline_mode<synchronous>, transform_indices = @transform_7, window_bounds = array<i64: 8, 1>}, {pipeline_mode = #tpu.pipeline_mode<synchronous>, transform_indices = @transform_8, window_bounds = array<i64: 8, 72>}, {pipeline_mode = #tpu.pipeline_mode<synchronous>, transform_indices = @transform_9, window_bounds = array<i64: 8, 1>}, {transform_indices = @transform_10, window_bounds = array<i64: 1, 8, 1024>}]} {
    %c0 = arith.constant 0 : index
    %c0_0 = arith.constant 0 : index
    %c0_1 = arith.constant 0 : index
    %0 = vector.load %arg1[%c0, %c0_0, %c0_1] : memref<1x8x256xf32, #tpu.memory_space<vmem>>, vector<1x8x256xf32>
    %1 = vector.shape_cast %0 : vector<1x8x256xf32> to vector<8x256xf32>
    %c0_2 = arith.constant 0 : index
    %c0_3 = arith.constant 0 : index
    %c0_4 = arith.constant 0 : index
    %2 = vector.load %arg2[%c0_2, %c0_3, %c0_4] : memref<1x4x1024xf32, #tpu.memory_space<vmem>>, vector<1x4x1024xf32>
    %3 = vector.shape_cast %2 : vector<1x4x1024xf32> to vector<4x1024xf32>
    %c0_5 = arith.constant 0 : index
    %c0_6 = arith.constant 0 : index
    %4 = vector.load %arg4[%c0_5, %c0_6] : memref<4x8xf32, #tpu.memory_space<vmem>>, vector<4x8xf32>
    %cst = arith.constant dense<0.000000e+00> : vector<4x256xf32>
    %5 = tpu.matmul %4, %1, %cst {dimension_numbers = #tpu.dot_dimension_numbers<[1], [0], [0], [1], [0, 0, 1, 1], [], []>} : vector<4x8xf32>, vector<8x256xf32>, vector<4x256xf32> -> vector<4x256xf32>
    %c0_7 = arith.constant 0 : index
    %c0_8 = arith.constant 0 : index
    %6 = vector.load %arg5[%c0_7, %c0_8] : memref<4x1xf32, #tpu.memory_space<vmem>>, vector<4x1xf32>
    %7 = vector.broadcast %6 : vector<4x1xf32> to vector<4x256xf32>
    %8 = arith.addf %5, %7 : vector<4x256xf32>
    %c0_9 = arith.constant 0 : index
    %c0_10 = arith.constant 0 : index
    %c0_11 = arith.constant 0 : index
    %9 = vector.load %arg3[%c0_9, %c0_10, %c0_11] : memref<1x4x256xf32, #tpu.memory_space<vmem>>, vector<1x4x256xf32>
    %10 = vector.shape_cast %9 : vector<1x4x256xf32> to vector<4x256xf32>
    %c0_12 = arith.constant 0 : index
    %c0_13 = arith.constant 0 : index
    %11 = vector.load %arg12[%c0_12, %c0_13] : memref<8x256xf32, #tpu.memory_space<vmem>>, vector<4x256xf32>
    tpu.vector_store %arg12[%c0_12, %c0_13], %10 {strides = array<i32>} : memref<8x256xf32, #tpu.memory_space<vmem>>, vector<4x256xf32>,
    %c4 = arith.constant 4 : index
    %c0_14 = arith.constant 0 : index
    %12 = vector.load %arg12[%c4, %c0_14] : memref<8x256xf32, #tpu.memory_space<vmem>>, vector<4x256xf32>
    tpu.vector_store %arg12[%c4, %c0_14], %8 {strides = array<i32>} : memref<8x256xf32, #tpu.memory_space<vmem>>, vector<4x256xf32>,
    %c0_15 = arith.constant 0 : index
    %c0_16 = arith.constant 0 : index
    %13 = vector.load %arg6[%c0_15, %c0_16] : memref<16x32xf32, #tpu.memory_space<vmem>>, vector<16x32xf32>
    %c0_17 = arith.constant 0 : index
    %c0_18 = arith.constant 0 : index
    %14 = vector.load %arg12[%c0_17, %c0_18] : memref<8x256xf32, #tpu.memory_space<vmem>>, vector<8x16xf32>
    %cst_19 = arith.constant dense<0.000000e+00> : vector<8x32xf32>
    %15 = tpu.matmul %14, %13, %cst_19 {dimension_numbers = #tpu.dot_dimension_numbers<[1], [0], [0], [1], [0, 0, 1, 1], [], []>} : vector<8x16xf32>, vector<16x32xf32>, vector<8x32xf32> -> vector<8x32xf32>
    %c0_20 = arith.constant 0 : index
    %c0_21 = arith.constant 0 : index
    %16 = vector.load %arg13[%c0_20, %c0_21] : memref<8x512xf32, #tpu.memory_space<vmem>>, vector<8x32xf32>
    tpu.vector_store %arg13[%c0_20, %c0_21], %15 {strides = array<i32>} : memref<8x512xf32, #tpu.memory_space<vmem>>, vector<8x32xf32>,
    %c0_22 = arith.constant 0 : index
    %c16 = arith.constant 16 : index
    %17 = vector.load %arg12[%c0_22, %c16] : memref<8x256xf32, #tpu.memory_space<vmem>>, vector<8x16xf32>
    %cst_23 = arith.constant dense<0.000000e+00> : vector<8x32xf32>
    %18 = tpu.matmul %17, %13, %cst_23 {dimension_numbers = #tpu.dot_dimension_numbers<[1], [0], [0], [1], [0, 0, 1, 1], [], []>} : vector<8x16xf32>, vector<16x32xf32>, vector<8x32xf32> -> vector<8x32xf32>
    %c0_24 = arith.constant 0 : index
    %c32 = arith.constant 32 : index
    %19 = vector.load %arg13[%c0_24, %c32] : memref<8x512xf32, #tpu.memory_space<vmem>>, vector<8x32xf32>
    tpu.vector_store %arg13[%c0_24, %c32], %18 {strides = array<i32>} : memref<8x512xf32, #tpu.memory_space<vmem>>, vector<8x32xf32>,
    %c0_25 = arith.constant 0 : index
    %c32_26 = arith.constant 32 : index
    %20 = vector.load %arg12[%c0_25, %c32_26] : memref<8x256xf32, #tpu.memory_space<vmem>>, vector<8x16xf32>
    %cst_27 = arith.constant dense<0.000000e+00> : vector<8x32xf32>
    %21 = tpu.matmul %20, %13, %cst_27 {dimension_numbers = #tpu.dot_dimension_numbers<[1], [0], [0], [1], [0, 0, 1, 1], [], []>} : vector<8x16xf32>, vector<16x32xf32>, vector<8x32xf32> -> vector<8x32xf32>
    %c0_28 = arith.constant 0 : index
    %c64 = arith.constant 64 : index
    %22 = vector.load %arg13[%c0_28, %c64] : memref<8x512xf32, #tpu.memory_space<vmem>>, vector<8x32xf32>
    tpu.vector_store %arg13[%c0_28, %c64], %21 {strides = array<i32>} : memref<8x512xf32, #tpu.memory_space<vmem>>, vector<8x32xf32>,
    %c0_29 = arith.constant 0 : index
    %c48 = arith.constant 48 : index
    %23 = vector.load %arg12[%c0_29, %c48] : memref<8x256xf32, #tpu.memory_space<vmem>>, vector<8x16xf32>
    %cst_30 = arith.constant dense<0.000000e+00> : vector<8x32xf32>
    %24 = tpu.matmul %23, %13, %cst_30 {dimension_numbers = #tpu.dot_dimension_numbers<[1], [0], [0], [1], [0, 0, 1, 1], [], []>} : vector<8x16xf32>, vector<16x32xf32>, vector<8x32xf32> -> vector<8x32xf32>
    %c0_31 = arith.constant 0 : index
    %c96 = arith.constant 96 : index
    %25 = vector.load %arg13[%c0_31, %c96] : memref<8x512xf32, #tpu.memory_space<vmem>>, vector<8x32xf32>
    tpu.vector_store %arg13[%c0_31, %c96], %24 {strides = array<i32>} : memref<8x512xf32, #tpu.memory_space<vmem>>, vector<8x32xf32>,
    %c0_32 = arith.constant 0 : index
    %c64_33 = arith.constant 64 : index
    %26 = vector.load %arg12[%c0_32, %c64_33] : memref<8x256xf32, #tpu.memory_space<vmem>>, vector<8x16xf32>
    %cst_34 = arith.constant dense<0.000000e+00> : vector<8x32xf32>
    %27 = tpu.matmul %26, %13, %cst_34 {dimension_numbers = #tpu.dot_dimension_numbers<[1], [0], [0], [1], [0, 0, 1, 1], [], []>} : vector<8x16xf32>, vector<16x32xf32>, vector<8x32xf32> -> vector<8x32xf32>
    %c0_35 = arith.constant 0 : index
    %c128 = arith.constant 128 : index
    %28 = vector.load %arg13[%c0_35, %c128] : memref<8x512xf32, #tpu.memory_space<vmem>>, vector<8x32xf32>
    tpu.vector_store %arg13[%c0_35, %c128], %27 {strides = array<i32>} : memref<8x512xf32, #tpu.memory_space<vmem>>, vector<8x32xf32>,
    %c0_36 = arith.constant 0 : index
    %c80 = arith.constant 80 : index
    %29 = vector.load %arg12[%c0_36, %c80] : memref<8x256xf32, #tpu.memory_space<vmem>>, vector<8x16xf32>
    %cst_37 = arith.constant dense<0.000000e+00> : vector<8x32xf32>
    %30 = tpu.matmul %29, %13, %cst_37 {dimension_numbers = #tpu.dot_dimension_numbers<[1], [0], [0], [1], [0, 0, 1, 1], [], []>} : vector<8x16xf32>, vector<16x32xf32>, vector<8x32xf32> -> vector<8x32xf32>
    %c0_38 = arith.constant 0 : index
    %c160 = arith.constant 160 : index
    %31 = vector.load %arg13[%c0_38, %c160] : memref<8x512xf32, #tpu.memory_space<vmem>>, vector<8x32xf32>
    tpu.vector_store %arg13[%c0_38, %c160], %30 {strides = array<i32>} : memref<8x512xf32, #tpu.memory_space<vmem>>, vector<8x32xf32>,
    %c0_39 = arith.constant 0 : index
    %c96_40 = arith.constant 96 : index
    %32 = vector.load %arg12[%c0_39, %c96_40] : memref<8x256xf32, #tpu.memory_space<vmem>>, vector<8x16xf32>
    %cst_41 = arith.constant dense<0.000000e+00> : vector<8x32xf32>
    %33 = tpu.matmul %32, %13, %cst_41 {dimension_numbers = #tpu.dot_dimension_numbers<[1], [0], [0], [1], [0, 0, 1, 1], [], []>} : vector<8x16xf32>, vector<16x32xf32>, vector<8x32xf32> -> vector<8x32xf32>
    %c0_42 = arith.constant 0 : index
    %c192 = arith.constant 192 : index
    %34 = vector.load %arg13[%c0_42, %c192] : memref<8x512xf32, #tpu.memory_space<vmem>>, vector<8x32xf32>
    tpu.vector_store %arg13[%c0_42, %c192], %33 {strides = array<i32>} : memref<8x512xf32, #tpu.memory_space<vmem>>, vector<8x32xf32>,
    %c0_43 = arith.constant 0 : index
    %c112 = arith.constant 112 : index
    %35 = vector.load %arg12[%c0_43, %c112] : memref<8x256xf32, #tpu.memory_space<vmem>>, vector<8x16xf32>
    %cst_44 = arith.constant dense<0.000000e+00> : vector<8x32xf32>
    %36 = tpu.matmul %35, %13, %cst_44 {dimension_numbers = #tpu.dot_dimension_numbers<[1], [0], [0], [1], [0, 0, 1, 1], [], []>} : vector<8x16xf32>, vector<16x32xf32>, vector<8x32xf32> -> vector<8x32xf32>
    %c0_45 = arith.constant 0 : index
    %c224 = arith.constant 224 : index
    %37 = vector.load %arg13[%c0_45, %c224] : memref<8x512xf32, #tpu.memory_space<vmem>>, vector<8x32xf32>
    tpu.vector_store %arg13[%c0_45, %c224], %36 {strides = array<i32>} : memref<8x512xf32, #tpu.memory_space<vmem>>, vector<8x32xf32>,
    %c0_46 = arith.constant 0 : index
    %c128_47 = arith.constant 128 : index
    %38 = vector.load %arg12[%c0_46, %c128_47] : memref<8x256xf32, #tpu.memory_space<vmem>>, vector<8x16xf32>
    %cst_48 = arith.constant dense<0.000000e+00> : vector<8x32xf32>
    %39 = tpu.matmul %38, %13, %cst_48 {dimension_numbers = #tpu.dot_dimension_numbers<[1], [0], [0], [1], [0, 0, 1, 1], [], []>} : vector<8x16xf32>, vector<16x32xf32>, vector<8x32xf32> -> vector<8x32xf32>
    %c0_49 = arith.constant 0 : index
    %c256 = arith.constant 256 : index
    %40 = vector.load %arg13[%c0_49, %c256] : memref<8x512xf32, #tpu.memory_space<vmem>>, vector<8x32xf32>
    tpu.vector_store %arg13[%c0_49, %c256], %39 {strides = array<i32>} : memref<8x512xf32, #tpu.memory_space<vmem>>, vector<8x32xf32>,
    %c0_50 = arith.constant 0 : index
    %c144 = arith.constant 144 : index
    %41 = vector.load %arg12[%c0_50, %c144] : memref<8x256xf32, #tpu.memory_space<vmem>>, vector<8x16xf32>
    %cst_51 = arith.constant dense<0.000000e+00> : vector<8x32xf32>
    %42 = tpu.matmul %41, %13, %cst_51 {dimension_numbers = #tpu.dot_dimension_numbers<[1], [0], [0], [1], [0, 0, 1, 1], [], []>} : vector<8x16xf32>, vector<16x32xf32>, vector<8x32xf32> -> vector<8x32xf32>
    %c0_52 = arith.constant 0 : index
    %c288 = arith.constant 288 : index
    %43 = vector.load %arg13[%c0_52, %c288] : memref<8x512xf32, #tpu.memory_space<vmem>>, vector<8x32xf32>
    tpu.vector_store %arg13[%c0_52, %c288], %42 {strides = array<i32>} : memref<8x512xf32, #tpu.memory_space<vmem>>, vector<8x32xf32>,
    %c0_53 = arith.constant 0 : index
    %c160_54 = arith.constant 160 : index
    %44 = vector.load %arg12[%c0_53, %c160_54] : memref<8x256xf32, #tpu.memory_space<vmem>>, vector<8x16xf32>
    %cst_55 = arith.constant dense<0.000000e+00> : vector<8x32xf32>
    %45 = tpu.matmul %44, %13, %cst_55 {dimension_numbers = #tpu.dot_dimension_numbers<[1], [0], [0], [1], [0, 0, 1, 1], [], []>} : vector<8x16xf32>, vector<16x32xf32>, vector<8x32xf32> -> vector<8x32xf32>
    %c0_56 = arith.constant 0 : index
    %c320 = arith.constant 320 : index
    %46 = vector.load %arg13[%c0_56, %c320] : memref<8x512xf32, #tpu.memory_space<vmem>>, vector<8x32xf32>
    tpu.vector_store %arg13[%c0_56, %c320], %45 {strides = array<i32>} : memref<8x512xf32, #tpu.memory_space<vmem>>, vector<8x32xf32>,
    %c0_57 = arith.constant 0 : index
    %c176 = arith.constant 176 : index
    %47 = vector.load %arg12[%c0_57, %c176] : memref<8x256xf32, #tpu.memory_space<vmem>>, vector<8x16xf32>
    %cst_58 = arith.constant dense<0.000000e+00> : vector<8x32xf32>
    %48 = tpu.matmul %47, %13, %cst_58 {dimension_numbers = #tpu.dot_dimension_numbers<[1], [0], [0], [1], [0, 0, 1, 1], [], []>} : vector<8x16xf32>, vector<16x32xf32>, vector<8x32xf32> -> vector<8x32xf32>
    %c0_59 = arith.constant 0 : index
    %c352 = arith.constant 352 : index
    %49 = vector.load %arg13[%c0_59, %c352] : memref<8x512xf32, #tpu.memory_space<vmem>>, vector<8x32xf32>
    tpu.vector_store %arg13[%c0_59, %c352], %48 {strides = array<i32>} : memref<8x512xf32, #tpu.memory_space<vmem>>, vector<8x32xf32>,
    %c0_60 = arith.constant 0 : index
    %c192_61 = arith.constant 192 : index
    %50 = vector.load %arg12[%c0_60, %c192_61] : memref<8x256xf32, #tpu.memory_space<vmem>>, vector<8x16xf32>
    %cst_62 = arith.constant dense<0.000000e+00> : vector<8x32xf32>
    %51 = tpu.matmul %50, %13, %cst_62 {dimension_numbers = #tpu.dot_dimension_numbers<[1], [0], [0], [1], [0, 0, 1, 1], [], []>} : vector<8x16xf32>, vector<16x32xf32>, vector<8x32xf32> -> vector<8x32xf32>
    %c0_63 = arith.constant 0 : index
    %c384 = arith.constant 384 : index
    %52 = vector.load %arg13[%c0_63, %c384] : memref<8x512xf32, #tpu.memory_space<vmem>>, vector<8x32xf32>
    tpu.vector_store %arg13[%c0_63, %c384], %51 {strides = array<i32>} : memref<8x512xf32, #tpu.memory_space<vmem>>, vector<8x32xf32>,
    %c0_64 = arith.constant 0 : index
    %c208 = arith.constant 208 : index
    %53 = vector.load %arg12[%c0_64, %c208] : memref<8x256xf32, #tpu.memory_space<vmem>>, vector<8x16xf32>
    %cst_65 = arith.constant dense<0.000000e+00> : vector<8x32xf32>
    %54 = tpu.matmul %53, %13, %cst_65 {dimension_numbers = #tpu.dot_dimension_numbers<[1], [0], [0], [1], [0, 0, 1, 1], [], []>} : vector<8x16xf32>, vector<16x32xf32>, vector<8x32xf32> -> vector<8x32xf32>
    %c0_66 = arith.constant 0 : index
    %c416 = arith.constant 416 : index
    %55 = vector.load %arg13[%c0_66, %c416] : memref<8x512xf32, #tpu.memory_space<vmem>>, vector<8x32xf32>
    tpu.vector_store %arg13[%c0_66, %c416], %54 {strides = array<i32>} : memref<8x512xf32, #tpu.memory_space<vmem>>, vector<8x32xf32>,
    %c0_67 = arith.constant 0 : index
    %c224_68 = arith.constant 224 : index
    %56 = vector.load %arg12[%c0_67, %c224_68] : memref<8x256xf32, #tpu.memory_space<vmem>>, vector<8x16xf32>
    %cst_69 = arith.constant dense<0.000000e+00> : vector<8x32xf32>
    %57 = tpu.matmul %56, %13, %cst_69 {dimension_numbers = #tpu.dot_dimension_numbers<[1], [0], [0], [1], [0, 0, 1, 1], [], []>} : vector<8x16xf32>, vector<16x32xf32>, vector<8x32xf32> -> vector<8x32xf32>
    %c0_70 = arith.constant 0 : index
    %c448 = arith.constant 448 : index
    %58 = vector.load %arg13[%c0_70, %c448] : memref<8x512xf32, #tpu.memory_space<vmem>>, vector<8x32xf32>
    tpu.vector_store %arg13[%c0_70, %c448], %57 {strides = array<i32>} : memref<8x512xf32, #tpu.memory_space<vmem>>, vector<8x32xf32>,
    %c0_71 = arith.constant 0 : index
    %c240 = arith.constant 240 : index
    %59 = vector.load %arg12[%c0_71, %c240] : memref<8x256xf32, #tpu.memory_space<vmem>>, vector<8x16xf32>
    %cst_72 = arith.constant dense<0.000000e+00> : vector<8x32xf32>
    %60 = tpu.matmul %59, %13, %cst_72 {dimension_numbers = #tpu.dot_dimension_numbers<[1], [0], [0], [1], [0, 0, 1, 1], [], []>} : vector<8x16xf32>, vector<16x32xf32>, vector<8x32xf32> -> vector<8x32xf32>
    %c0_73 = arith.constant 0 : index
    %c480 = arith.constant 480 : index
    %61 = vector.load %arg13[%c0_73, %c480] : memref<8x512xf32, #tpu.memory_space<vmem>>, vector<8x32xf32>
    tpu.vector_store %arg13[%c0_73, %c480], %60 {strides = array<i32>} : memref<8x512xf32, #tpu.memory_space<vmem>>, vector<8x32xf32>,
    %c0_74 = arith.constant 0 : index
    %c0_75 = arith.constant 0 : index
    %62 = vector.load %arg13[%c0_74, %c0_75] : memref<8x512xf32, #tpu.memory_space<vmem>>, vector<8x32xf32>
    %c0_76 = arith.constant 0 : index
    %c32_77 = arith.constant 32 : index
    %63 = vector.load %arg13[%c0_76, %c32_77] : memref<8x512xf32, #tpu.memory_space<vmem>>, vector<8x32xf32>
    %cst_78 = arith.constant 1.000000e+00 : f32
    %64 = vector.broadcast %cst_78 : f32 to vector<8x32xf32>
    %65 = arith.mulf %64, %62 : vector<8x32xf32>
    %cst_79 = arith.constant 0.000000e+00 : f32
    %66 = vector.broadcast %cst_79 : f32 to vector<8x32xf32>
    %67 = arith.mulf %66, %63 : vector<8x32xf32>
    %68 = arith.addf %65, %67 : vector<8x32xf32>
    %c0_80 = arith.constant 0 : index
    %c0_81 = arith.constant 0 : index
    %69 = vector.load %arg14[%c0_80, %c0_81] : memref<12x1024xf32, #tpu.memory_space<vmem>>, vector<8x32xf32>
    tpu.vector_store %arg14[%c0_80, %c0_81], %68 {strides = array<i32>} : memref<12x1024xf32, #tpu.memory_space<vmem>>, vector<8x32xf32>,
    %c0_82 = arith.constant 0 : index
    %c0_83 = arith.constant 0 : index
    %70 = vector.load %arg13[%c0_82, %c0_83] : memref<8x512xf32, #tpu.memory_space<vmem>>, vector<8x32xf32>
    %c0_84 = arith.constant 0 : index
    %c32_85 = arith.constant 32 : index
    %71 = vector.load %arg13[%c0_84, %c32_85] : memref<8x512xf32, #tpu.memory_space<vmem>>, vector<8x32xf32>
    %cst_86 = arith.constant 5.161290e-01 : f32
    %72 = vector.broadcast %cst_86 : f32 to vector<8x32xf32>
    %73 = arith.mulf %72, %70 : vector<8x32xf32>
    %cst_87 = arith.constant 0.483870953 : f32
    %74 = vector.broadcast %cst_87 : f32 to vector<8x32xf32>
    %75 = arith.mulf %74, %71 : vector<8x32xf32>
    %76 = arith.addf %73, %75 : vector<8x32xf32>
    %c0_88 = arith.constant 0 : index
    %c32_89 = arith.constant 32 : index
    %77 = vector.load %arg14[%c0_88, %c32_89] : memref<12x1024xf32, #tpu.memory_space<vmem>>, vector<8x32xf32>
    tpu.vector_store %arg14[%c0_88, %c32_89], %76 {strides = array<i32>} : memref<12x1024xf32, #tpu.memory_space<vmem>>, vector<8x32xf32>,
    %c0_90 = arith.constant 0 : index
    %c0_91 = arith.constant 0 : index
    %78 = vector.load %arg13[%c0_90, %c0_91] : memref<8x512xf32, #tpu.memory_space<vmem>>, vector<8x32xf32>
    %c0_92 = arith.constant 0 : index
    %c32_93 = arith.constant 32 : index
    %79 = vector.load %arg13[%c0_92, %c32_93] : memref<8x512xf32, #tpu.memory_space<vmem>>, vector<8x32xf32>
    %cst_94 = arith.constant 0.0322580636 : f32
    %80 = vector.broadcast %cst_94 : f32 to vector<8x32xf32>
    %81 = arith.mulf %80, %78 : vector<8x32xf32>
    %cst_95 = arith.constant 0.967741906 : f32
    %82 = vector.broadcast %cst_95 : f32 to vector<8x32xf32>
    %83 = arith.mulf %82, %79 : vector<8x32xf32>
    %84 = arith.addf %81, %83 : vector<8x32xf32>
    %c0_96 = arith.constant 0 : index
    %c64_97 = arith.constant 64 : index
    %85 = vector.load %arg14[%c0_96, %c64_97] : memref<12x1024xf32, #tpu.memory_space<vmem>>, vector<8x32xf32>
    tpu.vector_store %arg14[%c0_96, %c64_97], %84 {strides = array<i32>} : memref<12x1024xf32, #tpu.memory_space<vmem>>, vector<8x32xf32>,
    %c0_98 = arith.constant 0 : index
    %c32_99 = arith.constant 32 : index
    %86 = vector.load %arg13[%c0_98, %c32_99] : memref<8x512xf32, #tpu.memory_space<vmem>>, vector<8x32xf32>
    %c0_100 = arith.constant 0 : index
    %c64_101 = arith.constant 64 : index
    %87 = vector.load %arg13[%c0_100, %c64_101] : memref<8x512xf32, #tpu.memory_space<vmem>>, vector<8x32xf32>
    %cst_102 = arith.constant 0.54838711 : f32
    %88 = vector.broadcast %cst_102 : f32 to vector<8x32xf32>
    %89 = arith.mulf %88, %86 : vector<8x32xf32>
    %cst_103 = arith.constant 0.45161289 : f32
    %90 = vector.broadcast %cst_103 : f32 to vector<8x32xf32>
    %91 = arith.mulf %90, %87 : vector<8x32xf32>
    %92 = arith.addf %89, %91 : vector<8x32xf32>
    %c0_104 = arith.constant 0 : index
    %c96_105 = arith.constant 96 : index
    %93 = vector.load %arg14[%c0_104, %c96_105] : memref<12x1024xf32, #tpu.memory_space<vmem>>, vector<8x32xf32>
    tpu.vector_store %arg14[%c0_104, %c96_105], %92 {strides = array<i32>} : memref<12x1024xf32, #tpu.memory_space<vmem>>, vector<8x32xf32>,
    %c0_106 = arith.constant 0 : index
    %c32_107 = arith.constant 32 : index
    %94 = vector.load %arg13[%c0_106, %c32_107] : memref<8x512xf32, #tpu.memory_space<vmem>>, vector<8x32xf32>
    %c0_108 = arith.constant 0 : index
    %c64_109 = arith.constant 64 : index
    %95 = vector.load %arg13[%c0_108, %c64_109] : memref<8x512xf32, #tpu.memory_space<vmem>>, vector<8x32xf32>
    %cst_110 = arith.constant 0.0645161271 : f32
    %96 = vector.broadcast %cst_110 : f32 to vector<8x32xf32>
    %97 = arith.mulf %96, %94 : vector<8x32xf32>
    %cst_111 = arith.constant 0.935483872 : f32
    %98 = vector.broadcast %cst_111 : f32 to vector<8x32xf32>
    %99 = arith.mulf %98, %95 : vector<8x32xf32>
    %100 = arith.addf %97, %99 : vector<8x32xf32>
    %c0_112 = arith.constant 0 : index
    %c128_113 = arith.constant 128 : index
    %101 = vector.load %arg14[%c0_112, %c128_113] : memref<12x1024xf32, #tpu.memory_space<vmem>>, vector<8x32xf32>
    tpu.vector_store %arg14[%c0_112, %c128_113], %100 {strides = array<i32>} : memref<12x1024xf32, #tpu.memory_space<vmem>>, vector<8x32xf32>,
    %c0_114 = arith.constant 0 : index
    %c64_115 = arith.constant 64 : index
    %102 = vector.load %arg13[%c0_114, %c64_115] : memref<8x512xf32, #tpu.memory_space<vmem>>, vector<8x32xf32>
    %c0_116 = arith.constant 0 : index
    %c96_117 = arith.constant 96 : index
    %103 = vector.load %arg13[%c0_116, %c96_117] : memref<8x512xf32, #tpu.memory_space<vmem>>, vector<8x32xf32>
    %cst_118 = arith.constant 0.580645144 : f32
    %104 = vector.broadcast %cst_118 : f32 to vector<8x32xf32>
    %105 = arith.mulf %104, %102 : vector<8x32xf32>
    %cst_119 = arith.constant 0.419354826 : f32
    %106 = vector.broadcast %cst_119 : f32 to vector<8x32xf32>
    %107 = arith.mulf %106, %103 : vector<8x32xf32>
    %108 = arith.addf %105, %107 : vector<8x32xf32>
    %c0_120 = arith.constant 0 : index
    %c160_121 = arith.constant 160 : index
    %109 = vector.load %arg14[%c0_120, %c160_121] : memref<12x1024xf32, #tpu.memory_space<vmem>>, vector<8x32xf32>
    tpu.vector_store %arg14[%c0_120, %c160_121], %108 {strides = array<i32>} : memref<12x1024xf32, #tpu.memory_space<vmem>>, vector<8x32xf32>,
    %c0_122 = arith.constant 0 : index
    %c64_123 = arith.constant 64 : index
    %110 = vector.load %arg13[%c0_122, %c64_123] : memref<8x512xf32, #tpu.memory_space<vmem>>, vector<8x32xf32>
    %c0_124 = arith.constant 0 : index
    %c96_125 = arith.constant 96 : index
    %111 = vector.load %arg13[%c0_124, %c96_125] : memref<8x512xf32, #tpu.memory_space<vmem>>, vector<8x32xf32>
    %cst_126 = arith.constant 0.0967741906 : f32
    %112 = vector.broadcast %cst_126 : f32 to vector<8x32xf32>
    %113 = arith.mulf %112, %110 : vector<8x32xf32>
    %cst_127 = arith.constant 0.903225779 : f32
    %114 = vector.broadcast %cst_127 : f32 to vector<8x32xf32>
    %115 = arith.mulf %114, %111 : vector<8x32xf32>
    %116 = arith.addf %113, %115 : vector<8x32xf32>
    %c0_128 = arith.constant 0 : index
    %c192_129 = arith.constant 192 : index
    %117 = vector.load %arg14[%c0_128, %c192_129] : memref<12x1024xf32, #tpu.memory_space<vmem>>, vector<8x32xf32>
    tpu.vector_store %arg14[%c0_128, %c192_129], %116 {strides = array<i32>} : memref<12x1024xf32, #tpu.memory_space<vmem>>, vector<8x32xf32>,
    %c0_130 = arith.constant 0 : index
    %c96_131 = arith.constant 96 : index
    %118 = vector.load %arg13[%c0_130, %c96_131] : memref<8x512xf32, #tpu.memory_space<vmem>>, vector<8x32xf32>
    %c0_132 = arith.constant 0 : index
    %c128_133 = arith.constant 128 : index
    %119 = vector.load %arg13[%c0_132, %c128_133] : memref<8x512xf32, #tpu.memory_space<vmem>>, vector<8x32xf32>
    %cst_134 = arith.constant 0.612903237 : f32
    %120 = vector.broadcast %cst_134 : f32 to vector<8x32xf32>
    %121 = arith.mulf %120, %118 : vector<8x32xf32>
    %cst_135 = arith.constant 0.387096763 : f32
    %122 = vector.broadcast %cst_135 : f32 to vector<8x32xf32>
    %123 = arith.mulf %122, %119 : vector<8x32xf32>
    %124 = arith.addf %121, %123 : vector<8x32xf32>
    %c0_136 = arith.constant 0 : index
    %c224_137 = arith.constant 224 : index
    %125 = vector.load %arg14[%c0_136, %c224_137] : memref<12x1024xf32, #tpu.memory_space<vmem>>, vector<8x32xf32>
    tpu.vector_store %arg14[%c0_136, %c224_137], %124 {strides = array<i32>} : memref<12x1024xf32, #tpu.memory_space<vmem>>, vector<8x32xf32>,
    %c0_138 = arith.constant 0 : index
    %c96_139 = arith.constant 96 : index
    %126 = vector.load %arg13[%c0_138, %c96_139] : memref<8x512xf32, #tpu.memory_space<vmem>>, vector<8x32xf32>
    %c0_140 = arith.constant 0 : index
    %c128_141 = arith.constant 128 : index
    %127 = vector.load %arg13[%c0_140, %c128_141] : memref<8x512xf32, #tpu.memory_space<vmem>>, vector<8x32xf32>
    %cst_142 = arith.constant 0.129032254 : f32
    %128 = vector.broadcast %cst_142 : f32 to vector<8x32xf32>
    %129 = arith.mulf %128, %126 : vector<8x32xf32>
    %cst_143 = arith.constant 0.870967745 : f32
    %130 = vector.broadcast %cst_143 : f32 to vector<8x32xf32>
    %131 = arith.mulf %130, %127 : vector<8x32xf32>
    %132 = arith.addf %129, %131 : vector<8x32xf32>
    %c0_144 = arith.constant 0 : index
    %c256_145 = arith.constant 256 : index
    %133 = vector.load %arg14[%c0_144, %c256_145] : memref<12x1024xf32, #tpu.memory_space<vmem>>, vector<8x32xf32>
    tpu.vector_store %arg14[%c0_144, %c256_145], %132 {strides = array<i32>} : memref<12x1024xf32, #tpu.memory_space<vmem>>, vector<8x32xf32>,
    %c0_146 = arith.constant 0 : index
    %c128_147 = arith.constant 128 : index
    %134 = vector.load %arg13[%c0_146, %c128_147] : memref<8x512xf32, #tpu.memory_space<vmem>>, vector<8x32xf32>
    %c0_148 = arith.constant 0 : index
    %c160_149 = arith.constant 160 : index
    %135 = vector.load %arg13[%c0_148, %c160_149] : memref<8x512xf32, #tpu.memory_space<vmem>>, vector<8x32xf32>
    %cst_150 = arith.constant 0.645161271 : f32
    %136 = vector.broadcast %cst_150 : f32 to vector<8x32xf32>
    %137 = arith.mulf %136, %134 : vector<8x32xf32>
    %cst_151 = arith.constant 0.354838699 : f32
    %138 = vector.broadcast %cst_151 : f32 to vector<8x32xf32>
    %139 = arith.mulf %138, %135 : vector<8x32xf32>
    %140 = arith.addf %137, %139 : vector<8x32xf32>
    %c0_152 = arith.constant 0 : index
    %c288_153 = arith.constant 288 : index
    %141 = vector.load %arg14[%c0_152, %c288_153] : memref<12x1024xf32, #tpu.memory_space<vmem>>, vector<8x32xf32>
    tpu.vector_store %arg14[%c0_152, %c288_153], %140 {strides = array<i32>} : memref<12x1024xf32, #tpu.memory_space<vmem>>, vector<8x32xf32>,
    %c0_154 = arith.constant 0 : index
    %c128_155 = arith.constant 128 : index
    %142 = vector.load %arg13[%c0_154, %c128_155] : memref<8x512xf32, #tpu.memory_space<vmem>>, vector<8x32xf32>
    %c0_156 = arith.constant 0 : index
    %c160_157 = arith.constant 160 : index
    %143 = vector.load %arg13[%c0_156, %c160_157] : memref<8x512xf32, #tpu.memory_space<vmem>>, vector<8x32xf32>
    %cst_158 = arith.constant 0.161290318 : f32
    %144 = vector.broadcast %cst_158 : f32 to vector<8x32xf32>
    %145 = arith.mulf %144, %142 : vector<8x32xf32>
    %cst_159 = arith.constant 0.838709652 : f32
    %146 = vector.broadcast %cst_159 : f32 to vector<8x32xf32>
    %147 = arith.mulf %146, %143 : vector<8x32xf32>
    %148 = arith.addf %145, %147 : vector<8x32xf32>
    %c0_160 = arith.constant 0 : index
    %c320_161 = arith.constant 320 : index
    %149 = vector.load %arg14[%c0_160, %c320_161] : memref<12x1024xf32, #tpu.memory_space<vmem>>, vector<8x32xf32>
    tpu.vector_store %arg14[%c0_160, %c320_161], %148 {strides = array<i32>} : memref<12x1024xf32, #tpu.memory_space<vmem>>, vector<8x32xf32>,
    %c0_162 = arith.constant 0 : index
    %c160_163 = arith.constant 160 : index
    %150 = vector.load %arg13[%c0_162, %c160_163] : memref<8x512xf32, #tpu.memory_space<vmem>>, vector<8x32xf32>
    %c0_164 = arith.constant 0 : index
    %c192_165 = arith.constant 192 : index
    %151 = vector.load %arg13[%c0_164, %c192_165] : memref<8x512xf32, #tpu.memory_space<vmem>>, vector<8x32xf32>
    %cst_166 = arith.constant 0.677419364 : f32
    %152 = vector.broadcast %cst_166 : f32 to vector<8x32xf32>
    %153 = arith.mulf %152, %150 : vector<8x32xf32>
    %cst_167 = arith.constant 0.322580636 : f32
    %154 = vector.broadcast %cst_167 : f32 to vector<8x32xf32>
    %155 = arith.mulf %154, %151 : vector<8x32xf32>
    %156 = arith.addf %153, %155 : vector<8x32xf32>
    %c0_168 = arith.constant 0 : index
    %c352_169 = arith.constant 352 : index
    %157 = vector.load %arg14[%c0_168, %c352_169] : memref<12x1024xf32, #tpu.memory_space<vmem>>, vector<8x32xf32>
    tpu.vector_store %arg14[%c0_168, %c352_169], %156 {strides = array<i32>} : memref<12x1024xf32, #tpu.memory_space<vmem>>, vector<8x32xf32>,
    %c0_170 = arith.constant 0 : index
    %c160_171 = arith.constant 160 : index
    %158 = vector.load %arg13[%c0_170, %c160_171] : memref<8x512xf32, #tpu.memory_space<vmem>>, vector<8x32xf32>
    %c0_172 = arith.constant 0 : index
    %c192_173 = arith.constant 192 : index
    %159 = vector.load %arg13[%c0_172, %c192_173] : memref<8x512xf32, #tpu.memory_space<vmem>>, vector<8x32xf32>
    %cst_174 = arith.constant 0.193548381 : f32
    %160 = vector.broadcast %cst_174 : f32 to vector<8x32xf32>
    %161 = arith.mulf %160, %158 : vector<8x32xf32>
    %cst_175 = arith.constant 0.806451618 : f32
    %162 = vector.broadcast %cst_175 : f32 to vector<8x32xf32>
    %163 = arith.mulf %162, %159 : vector<8x32xf32>
    %164 = arith.addf %161, %163 : vector<8x32xf32>
    %c0_176 = arith.constant 0 : index
    %c384_177 = arith.constant 384 : index
    %165 = vector.load %arg14[%c0_176, %c384_177] : memref<12x1024xf32, #tpu.memory_space<vmem>>, vector<8x32xf32>
    tpu.vector_store %arg14[%c0_176, %c384_177], %164 {strides = array<i32>} : memref<12x1024xf32, #tpu.memory_space<vmem>>, vector<8x32xf32>,
    %c0_178 = arith.constant 0 : index
    %c192_179 = arith.constant 192 : index
    %166 = vector.load %arg13[%c0_178, %c192_179] : memref<8x512xf32, #tpu.memory_space<vmem>>, vector<8x32xf32>
    %c0_180 = arith.constant 0 : index
    %c224_181 = arith.constant 224 : index
    %167 = vector.load %arg13[%c0_180, %c224_181] : memref<8x512xf32, #tpu.memory_space<vmem>>, vector<8x32xf32>
    %cst_182 = arith.constant 0.709677398 : f32
    %168 = vector.broadcast %cst_182 : f32 to vector<8x32xf32>
    %169 = arith.mulf %168, %166 : vector<8x32xf32>
    %cst_183 = arith.constant 0.290322572 : f32
    %170 = vector.broadcast %cst_183 : f32 to vector<8x32xf32>
    %171 = arith.mulf %170, %167 : vector<8x32xf32>
    %172 = arith.addf %169, %171 : vector<8x32xf32>
    %c0_184 = arith.constant 0 : index
    %c416_185 = arith.constant 416 : index
    %173 = vector.load %arg14[%c0_184, %c416_185] : memref<12x1024xf32, #tpu.memory_space<vmem>>, vector<8x32xf32>
    tpu.vector_store %arg14[%c0_184, %c416_185], %172 {strides = array<i32>} : memref<12x1024xf32, #tpu.memory_space<vmem>>, vector<8x32xf32>,
    %c0_186 = arith.constant 0 : index
    %c192_187 = arith.constant 192 : index
    %174 = vector.load %arg13[%c0_186, %c192_187] : memref<8x512xf32, #tpu.memory_space<vmem>>, vector<8x32xf32>
    %c0_188 = arith.constant 0 : index
    %c224_189 = arith.constant 224 : index
    %175 = vector.load %arg13[%c0_188, %c224_189] : memref<8x512xf32, #tpu.memory_space<vmem>>, vector<8x32xf32>
    %cst_190 = arith.constant 0.225806445 : f32
    %176 = vector.broadcast %cst_190 : f32 to vector<8x32xf32>
    %177 = arith.mulf %176, %174 : vector<8x32xf32>
    %cst_191 = arith.constant 0.774193525 : f32
    %178 = vector.broadcast %cst_191 : f32 to vector<8x32xf32>
    %179 = arith.mulf %178, %175 : vector<8x32xf32>
    %180 = arith.addf %177, %179 : vector<8x32xf32>
    %c0_192 = arith.constant 0 : index
    %c448_193 = arith.constant 448 : index
    %181 = vector.load %arg14[%c0_192, %c448_193] : memref<12x1024xf32, #tpu.memory_space<vmem>>, vector<8x32xf32>
    tpu.vector_store %arg14[%c0_192, %c448_193], %180 {strides = array<i32>} : memref<12x1024xf32, #tpu.memory_space<vmem>>, vector<8x32xf32>,
    %c0_194 = arith.constant 0 : index
    %c224_195 = arith.constant 224 : index
    %182 = vector.load %arg13[%c0_194, %c224_195] : memref<8x512xf32, #tpu.memory_space<vmem>>, vector<8x32xf32>
    %c0_196 = arith.constant 0 : index
    %c256_197 = arith.constant 256 : index
    %183 = vector.load %arg13[%c0_196, %c256_197] : memref<8x512xf32, #tpu.memory_space<vmem>>, vector<8x32xf32>
    %cst_198 = arith.constant 0.741935492 : f32
    %184 = vector.broadcast %cst_198 : f32 to vector<8x32xf32>
    %185 = arith.mulf %184, %182 : vector<8x32xf32>
    %cst_199 = arith.constant 0.258064508 : f32
    %186 = vector.broadcast %cst_199 : f32 to vector<8x32xf32>
    %187 = arith.mulf %186, %183 : vector<8x32xf32>
    %188 = arith.addf %185, %187 : vector<8x32xf32>
    %c0_200 = arith.constant 0 : index
    %c480_201 = arith.constant 480 : index
    %189 = vector.load %arg14[%c0_200, %c480_201] : memref<12x1024xf32, #tpu.memory_space<vmem>>, vector<8x32xf32>
    tpu.vector_store %arg14[%c0_200, %c480_201], %188 {strides = array<i32>} : memref<12x1024xf32, #tpu.memory_space<vmem>>, vector<8x32xf32>,
    %c0_202 = arith.constant 0 : index
    %c224_203 = arith.constant 224 : index
    %190 = vector.load %arg13[%c0_202, %c224_203] : memref<8x512xf32, #tpu.memory_space<vmem>>, vector<8x32xf32>
    %c0_204 = arith.constant 0 : index
    %c256_205 = arith.constant 256 : index
    %191 = vector.load %arg13[%c0_204, %c256_205] : memref<8x512xf32, #tpu.memory_space<vmem>>, vector<8x32xf32>
    %cst_206 = arith.constant 0.258064508 : f32
    %192 = vector.broadcast %cst_206 : f32 to vector<8x32xf32>
    %193 = arith.mulf %192, %190 : vector<8x32xf32>
    %cst_207 = arith.constant 0.741935492 : f32
    %194 = vector.broadcast %cst_207 : f32 to vector<8x32xf32>
    %195 = arith.mulf %194, %191 : vector<8x32xf32>
    %196 = arith.addf %193, %195 : vector<8x32xf32>
    %c0_208 = arith.constant 0 : index
    %c512 = arith.constant 512 : index
    %197 = vector.load %arg14[%c0_208, %c512] : memref<12x1024xf32, #tpu.memory_space<vmem>>, vector<8x32xf32>
    tpu.vector_store %arg14[%c0_208, %c512], %196 {strides = array<i32>} : memref<12x1024xf32, #tpu.memory_space<vmem>>, vector<8x32xf32>,
    %c0_209 = arith.constant 0 : index
    %c256_210 = arith.constant 256 : index
    %198 = vector.load %arg13[%c0_209, %c256_210] : memref<8x512xf32, #tpu.memory_space<vmem>>, vector<8x32xf32>
    %c0_211 = arith.constant 0 : index
    %c288_212 = arith.constant 288 : index
    %199 = vector.load %arg13[%c0_211, %c288_212] : memref<8x512xf32, #tpu.memory_space<vmem>>, vector<8x32xf32>
    %cst_213 = arith.constant 0.774193525 : f32
    %200 = vector.broadcast %cst_213 : f32 to vector<8x32xf32>
    %201 = arith.mulf %200, %198 : vector<8x32xf32>
    %cst_214 = arith.constant 0.225806445 : f32
    %202 = vector.broadcast %cst_214 : f32 to vector<8x32xf32>
    %203 = arith.mulf %202, %199 : vector<8x32xf32>
    %204 = arith.addf %201, %203 : vector<8x32xf32>
    %c0_215 = arith.constant 0 : index
    %c544 = arith.constant 544 : index
    %205 = vector.load %arg14[%c0_215, %c544] : memref<12x1024xf32, #tpu.memory_space<vmem>>, vector<8x32xf32>
    tpu.vector_store %arg14[%c0_215, %c544], %204 {strides = array<i32>} : memref<12x1024xf32, #tpu.memory_space<vmem>>, vector<8x32xf32>,
    %c0_216 = arith.constant 0 : index
    %c256_217 = arith.constant 256 : index
    %206 = vector.load %arg13[%c0_216, %c256_217] : memref<8x512xf32, #tpu.memory_space<vmem>>, vector<8x32xf32>
    %c0_218 = arith.constant 0 : index
    %c288_219 = arith.constant 288 : index
    %207 = vector.load %arg13[%c0_218, %c288_219] : memref<8x512xf32, #tpu.memory_space<vmem>>, vector<8x32xf32>
    %cst_220 = arith.constant 0.290322572 : f32
    %208 = vector.broadcast %cst_220 : f32 to vector<8x32xf32>
    %209 = arith.mulf %208, %206 : vector<8x32xf32>
    %cst_221 = arith.constant 0.709677398 : f32
    %210 = vector.broadcast %cst_221 : f32 to vector<8x32xf32>
    %211 = arith.mulf %210, %207 : vector<8x32xf32>
    %212 = arith.addf %209, %211 : vector<8x32xf32>
    %c0_222 = arith.constant 0 : index
    %c576 = arith.constant 576 : index
    %213 = vector.load %arg14[%c0_222, %c576] : memref<12x1024xf32, #tpu.memory_space<vmem>>, vector<8x32xf32>
    tpu.vector_store %arg14[%c0_222, %c576], %212 {strides = array<i32>} : memref<12x1024xf32, #tpu.memory_space<vmem>>, vector<8x32xf32>,
    %c0_223 = arith.constant 0 : index
    %c288_224 = arith.constant 288 : index
    %214 = vector.load %arg13[%c0_223, %c288_224] : memref<8x512xf32, #tpu.memory_space<vmem>>, vector<8x32xf32>
    %c0_225 = arith.constant 0 : index
    %c320_226 = arith.constant 320 : index
    %215 = vector.load %arg13[%c0_225, %c320_226] : memref<8x512xf32, #tpu.memory_space<vmem>>, vector<8x32xf32>
    %cst_227 = arith.constant 0.806451618 : f32
    %216 = vector.broadcast %cst_227 : f32 to vector<8x32xf32>
    %217 = arith.mulf %216, %214 : vector<8x32xf32>
    %cst_228 = arith.constant 0.193548381 : f32
    %218 = vector.broadcast %cst_228 : f32 to vector<8x32xf32>
    %219 = arith.mulf %218, %215 : vector<8x32xf32>
    %220 = arith.addf %217, %219 : vector<8x32xf32>
    %c0_229 = arith.constant 0 : index
    %c608 = arith.constant 608 : index
    %221 = vector.load %arg14[%c0_229, %c608] : memref<12x1024xf32, #tpu.memory_space<vmem>>, vector<8x32xf32>
    tpu.vector_store %arg14[%c0_229, %c608], %220 {strides = array<i32>} : memref<12x1024xf32, #tpu.memory_space<vmem>>, vector<8x32xf32>,
    %c0_230 = arith.constant 0 : index
    %c288_231 = arith.constant 288 : index
    %222 = vector.load %arg13[%c0_230, %c288_231] : memref<8x512xf32, #tpu.memory_space<vmem>>, vector<8x32xf32>
    %c0_232 = arith.constant 0 : index
    %c320_233 = arith.constant 320 : index
    %223 = vector.load %arg13[%c0_232, %c320_233] : memref<8x512xf32, #tpu.memory_space<vmem>>, vector<8x32xf32>
    %cst_234 = arith.constant 0.322580636 : f32
    %224 = vector.broadcast %cst_234 : f32 to vector<8x32xf32>
    %225 = arith.mulf %224, %222 : vector<8x32xf32>
    %cst_235 = arith.constant 0.677419364 : f32
    %226 = vector.broadcast %cst_235 : f32 to vector<8x32xf32>
    %227 = arith.mulf %226, %223 : vector<8x32xf32>
    %228 = arith.addf %225, %227 : vector<8x32xf32>
    %c0_236 = arith.constant 0 : index
    %c640 = arith.constant 640 : index
    %229 = vector.load %arg14[%c0_236, %c640] : memref<12x1024xf32, #tpu.memory_space<vmem>>, vector<8x32xf32>
    tpu.vector_store %arg14[%c0_236, %c640], %228 {strides = array<i32>} : memref<12x1024xf32, #tpu.memory_space<vmem>>, vector<8x32xf32>,
    %c0_237 = arith.constant 0 : index
    %c320_238 = arith.constant 320 : index
    %230 = vector.load %arg13[%c0_237, %c320_238] : memref<8x512xf32, #tpu.memory_space<vmem>>, vector<8x32xf32>
    %c0_239 = arith.constant 0 : index
    %c352_240 = arith.constant 352 : index
    %231 = vector.load %arg13[%c0_239, %c352_240] : memref<8x512xf32, #tpu.memory_space<vmem>>, vector<8x32xf32>
    %cst_241 = arith.constant 0.838709652 : f32
    %232 = vector.broadcast %cst_241 : f32 to vector<8x32xf32>
    %233 = arith.mulf %232, %230 : vector<8x32xf32>
    %cst_242 = arith.constant 0.161290318 : f32
    %234 = vector.broadcast %cst_242 : f32 to vector<8x32xf32>
    %235 = arith.mulf %234, %231 : vector<8x32xf32>
    %236 = arith.addf %233, %235 : vector<8x32xf32>
    %c0_243 = arith.constant 0 : index
    %c672 = arith.constant 672 : index
    %237 = vector.load %arg14[%c0_243, %c672] : memref<12x1024xf32, #tpu.memory_space<vmem>>, vector<8x32xf32>
    tpu.vector_store %arg14[%c0_243, %c672], %236 {strides = array<i32>} : memref<12x1024xf32, #tpu.memory_space<vmem>>, vector<8x32xf32>,
    %c0_244 = arith.constant 0 : index
    %c320_245 = arith.constant 320 : index
    %238 = vector.load %arg13[%c0_244, %c320_245] : memref<8x512xf32, #tpu.memory_space<vmem>>, vector<8x32xf32>
    %c0_246 = arith.constant 0 : index
    %c352_247 = arith.constant 352 : index
    %239 = vector.load %arg13[%c0_246, %c352_247] : memref<8x512xf32, #tpu.memory_space<vmem>>, vector<8x32xf32>
    %cst_248 = arith.constant 0.354838699 : f32
    %240 = vector.broadcast %cst_248 : f32 to vector<8x32xf32>
    %241 = arith.mulf %240, %238 : vector<8x32xf32>
    %cst_249 = arith.constant 0.645161271 : f32
    %242 = vector.broadcast %cst_249 : f32 to vector<8x32xf32>
    %243 = arith.mulf %242, %239 : vector<8x32xf32>
    %244 = arith.addf %241, %243 : vector<8x32xf32>
    %c0_250 = arith.constant 0 : index
    %c704 = arith.constant 704 : index
    %245 = vector.load %arg14[%c0_250, %c704] : memref<12x1024xf32, #tpu.memory_space<vmem>>, vector<8x32xf32>
    tpu.vector_store %arg14[%c0_250, %c704], %244 {strides = array<i32>} : memref<12x1024xf32, #tpu.memory_space<vmem>>, vector<8x32xf32>,
    %c0_251 = arith.constant 0 : index
    %c352_252 = arith.constant 352 : index
    %246 = vector.load %arg13[%c0_251, %c352_252] : memref<8x512xf32, #tpu.memory_space<vmem>>, vector<8x32xf32>
    %c0_253 = arith.constant 0 : index
    %c384_254 = arith.constant 384 : index
    %247 = vector.load %arg13[%c0_253, %c384_254] : memref<8x512xf32, #tpu.memory_space<vmem>>, vector<8x32xf32>
    %cst_255 = arith.constant 0.870967745 : f32
    %248 = vector.broadcast %cst_255 : f32 to vector<8x32xf32>
    %249 = arith.mulf %248, %246 : vector<8x32xf32>
    %cst_256 = arith.constant 0.129032254 : f32
    %250 = vector.broadcast %cst_256 : f32 to vector<8x32xf32>
    %251 = arith.mulf %250, %247 : vector<8x32xf32>
    %252 = arith.addf %249, %251 : vector<8x32xf32>
    %c0_257 = arith.constant 0 : index
    %c736 = arith.constant 736 : index
    %253 = vector.load %arg14[%c0_257, %c736] : memref<12x1024xf32, #tpu.memory_space<vmem>>, vector<8x32xf32>
    tpu.vector_store %arg14[%c0_257, %c736], %252 {strides = array<i32>} : memref<12x1024xf32, #tpu.memory_space<vmem>>, vector<8x32xf32>,
    %c0_258 = arith.constant 0 : index
    %c352_259 = arith.constant 352 : index
    %254 = vector.load %arg13[%c0_258, %c352_259] : memref<8x512xf32, #tpu.memory_space<vmem>>, vector<8x32xf32>
    %c0_260 = arith.constant 0 : index
    %c384_261 = arith.constant 384 : index
    %255 = vector.load %arg13[%c0_260, %c384_261] : memref<8x512xf32, #tpu.memory_space<vmem>>, vector<8x32xf32>
    %cst_262 = arith.constant 0.387096763 : f32
    %256 = vector.broadcast %cst_262 : f32 to vector<8x32xf32>
    %257 = arith.mulf %256, %254 : vector<8x32xf32>
    %cst_263 = arith.constant 0.612903237 : f32
    %258 = vector.broadcast %cst_263 : f32 to vector<8x32xf32>
    %259 = arith.mulf %258, %255 : vector<8x32xf32>
    %260 = arith.addf %257, %259 : vector<8x32xf32>
    %c0_264 = arith.constant 0 : index
    %c768 = arith.constant 768 : index
    %261 = vector.load %arg14[%c0_264, %c768] : memref<12x1024xf32, #tpu.memory_space<vmem>>, vector<8x32xf32>
    tpu.vector_store %arg14[%c0_264, %c768], %260 {strides = array<i32>} : memref<12x1024xf32, #tpu.memory_space<vmem>>, vector<8x32xf32>,
    %c0_265 = arith.constant 0 : index
    %c384_266 = arith.constant 384 : index
    %262 = vector.load %arg13[%c0_265, %c384_266] : memref<8x512xf32, #tpu.memory_space<vmem>>, vector<8x32xf32>
    %c0_267 = arith.constant 0 : index
    %c416_268 = arith.constant 416 : index
    %263 = vector.load %arg13[%c0_267, %c416_268] : memref<8x512xf32, #tpu.memory_space<vmem>>, vector<8x32xf32>
    %cst_269 = arith.constant 0.903225779 : f32
    %264 = vector.broadcast %cst_269 : f32 to vector<8x32xf32>
    %265 = arith.mulf %264, %262 : vector<8x32xf32>
    %cst_270 = arith.constant 0.0967741906 : f32
    %266 = vector.broadcast %cst_270 : f32 to vector<8x32xf32>
    %267 = arith.mulf %266, %263 : vector<8x32xf32>
    %268 = arith.addf %265, %267 : vector<8x32xf32>
    %c0_271 = arith.constant 0 : index
    %c800 = arith.constant 800 : index
    %269 = vector.load %arg14[%c0_271, %c800] : memref<12x1024xf32, #tpu.memory_space<vmem>>, vector<8x32xf32>
    tpu.vector_store %arg14[%c0_271, %c800], %268 {strides = array<i32>} : memref<12x1024xf32, #tpu.memory_space<vmem>>, vector<8x32xf32>,
    %c0_272 = arith.constant 0 : index
    %c384_273 = arith.constant 384 : index
    %270 = vector.load %arg13[%c0_272, %c384_273] : memref<8x512xf32, #tpu.memory_space<vmem>>, vector<8x32xf32>
    %c0_274 = arith.constant 0 : index
    %c416_275 = arith.constant 416 : index
    %271 = vector.load %arg13[%c0_274, %c416_275] : memref<8x512xf32, #tpu.memory_space<vmem>>, vector<8x32xf32>
    %cst_276 = arith.constant 0.419354826 : f32
    %272 = vector.broadcast %cst_276 : f32 to vector<8x32xf32>
    %273 = arith.mulf %272, %270 : vector<8x32xf32>
    %cst_277 = arith.constant 0.580645144 : f32
    %274 = vector.broadcast %cst_277 : f32 to vector<8x32xf32>
    %275 = arith.mulf %274, %271 : vector<8x32xf32>
    %276 = arith.addf %273, %275 : vector<8x32xf32>
    %c0_278 = arith.constant 0 : index
    %c832 = arith.constant 832 : index
    %277 = vector.load %arg14[%c0_278, %c832] : memref<12x1024xf32, #tpu.memory_space<vmem>>, vector<8x32xf32>
    tpu.vector_store %arg14[%c0_278, %c832], %276 {strides = array<i32>} : memref<12x1024xf32, #tpu.memory_space<vmem>>, vector<8x32xf32>,
    %c0_279 = arith.constant 0 : index
    %c416_280 = arith.constant 416 : index
    %278 = vector.load %arg13[%c0_279, %c416_280] : memref<8x512xf32, #tpu.memory_space<vmem>>, vector<8x32xf32>
    %c0_281 = arith.constant 0 : index
    %c448_282 = arith.constant 448 : index
    %279 = vector.load %arg13[%c0_281, %c448_282] : memref<8x512xf32, #tpu.memory_space<vmem>>, vector<8x32xf32>
    %cst_283 = arith.constant 0.935483872 : f32
    %280 = vector.broadcast %cst_283 : f32 to vector<8x32xf32>
    %281 = arith.mulf %280, %278 : vector<8x32xf32>
    %cst_284 = arith.constant 0.0645161271 : f32
    %282 = vector.broadcast %cst_284 : f32 to vector<8x32xf32>
    %283 = arith.mulf %282, %279 : vector<8x32xf32>
    %284 = arith.addf %281, %283 : vector<8x32xf32>
    %c0_285 = arith.constant 0 : index
    %c864 = arith.constant 864 : index
    %285 = vector.load %arg14[%c0_285, %c864] : memref<12x1024xf32, #tpu.memory_space<vmem>>, vector<8x32xf32>
    tpu.vector_store %arg14[%c0_285, %c864], %284 {strides = array<i32>} : memref<12x1024xf32, #tpu.memory_space<vmem>>, vector<8x32xf32>,
    %c0_286 = arith.constant 0 : index
    %c416_287 = arith.constant 416 : index
    %286 = vector.load %arg13[%c0_286, %c416_287] : memref<8x512xf32, #tpu.memory_space<vmem>>, vector<8x32xf32>
    %c0_288 = arith.constant 0 : index
    %c448_289 = arith.constant 448 : index
    %287 = vector.load %arg13[%c0_288, %c448_289] : memref<8x512xf32, #tpu.memory_space<vmem>>, vector<8x32xf32>
    %cst_290 = arith.constant 0.45161289 : f32
    %288 = vector.broadcast %cst_290 : f32 to vector<8x32xf32>
    %289 = arith.mulf %288, %286 : vector<8x32xf32>
    %cst_291 = arith.constant 0.54838711 : f32
    %290 = vector.broadcast %cst_291 : f32 to vector<8x32xf32>
    %291 = arith.mulf %290, %287 : vector<8x32xf32>
    %292 = arith.addf %289, %291 : vector<8x32xf32>
    %c0_292 = arith.constant 0 : index
    %c896 = arith.constant 896 : index
    %293 = vector.load %arg14[%c0_292, %c896] : memref<12x1024xf32, #tpu.memory_space<vmem>>, vector<8x32xf32>
    tpu.vector_store %arg14[%c0_292, %c896], %292 {strides = array<i32>} : memref<12x1024xf32, #tpu.memory_space<vmem>>, vector<8x32xf32>,
    %c0_293 = arith.constant 0 : index
    %c448_294 = arith.constant 448 : index
    %294 = vector.load %arg13[%c0_293, %c448_294] : memref<8x512xf32, #tpu.memory_space<vmem>>, vector<8x32xf32>
    %c0_295 = arith.constant 0 : index
    %c480_296 = arith.constant 480 : index
    %295 = vector.load %arg13[%c0_295, %c480_296] : memref<8x512xf32, #tpu.memory_space<vmem>>, vector<8x32xf32>
    %cst_297 = arith.constant 0.967741906 : f32
    %296 = vector.broadcast %cst_297 : f32 to vector<8x32xf32>
    %297 = arith.mulf %296, %294 : vector<8x32xf32>
    %cst_298 = arith.constant 0.0322580636 : f32
    %298 = vector.broadcast %cst_298 : f32 to vector<8x32xf32>
    %299 = arith.mulf %298, %295 : vector<8x32xf32>
    %300 = arith.addf %297, %299 : vector<8x32xf32>
    %c0_299 = arith.constant 0 : index
    %c928 = arith.constant 928 : index
    %301 = vector.load %arg14[%c0_299, %c928] : memref<12x1024xf32, #tpu.memory_space<vmem>>, vector<8x32xf32>
    tpu.vector_store %arg14[%c0_299, %c928], %300 {strides = array<i32>} : memref<12x1024xf32, #tpu.memory_space<vmem>>, vector<8x32xf32>,
    %c0_300 = arith.constant 0 : index
    %c448_301 = arith.constant 448 : index
    %302 = vector.load %arg13[%c0_300, %c448_301] : memref<8x512xf32, #tpu.memory_space<vmem>>, vector<8x32xf32>
    %c0_302 = arith.constant 0 : index
    %c480_303 = arith.constant 480 : index
    %303 = vector.load %arg13[%c0_302, %c480_303] : memref<8x512xf32, #tpu.memory_space<vmem>>, vector<8x32xf32>
    %cst_304 = arith.constant 0.483870953 : f32
    %304 = vector.broadcast %cst_304 : f32 to vector<8x32xf32>
    %305 = arith.mulf %304, %302 : vector<8x32xf32>
    %cst_305 = arith.constant 5.161290e-01 : f32
    %306 = vector.broadcast %cst_305 : f32 to vector<8x32xf32>
    %307 = arith.mulf %306, %303 : vector<8x32xf32>
    %308 = arith.addf %305, %307 : vector<8x32xf32>
    %c0_306 = arith.constant 0 : index
    %c960 = arith.constant 960 : index
    %309 = vector.load %arg14[%c0_306, %c960] : memref<12x1024xf32, #tpu.memory_space<vmem>>, vector<8x32xf32>
    tpu.vector_store %arg14[%c0_306, %c960], %308 {strides = array<i32>} : memref<12x1024xf32, #tpu.memory_space<vmem>>, vector<8x32xf32>,
    %c0_307 = arith.constant 0 : index
    %c448_308 = arith.constant 448 : index
    %310 = vector.load %arg13[%c0_307, %c448_308] : memref<8x512xf32, #tpu.memory_space<vmem>>, vector<8x32xf32>
    %c0_309 = arith.constant 0 : index
    %c480_310 = arith.constant 480 : index
    %311 = vector.load %arg13[%c0_309, %c480_310] : memref<8x512xf32, #tpu.memory_space<vmem>>, vector<8x32xf32>
    %cst_311 = arith.constant 0.000000e+00 : f32
    %312 = vector.broadcast %cst_311 : f32 to vector<8x32xf32>
    %313 = arith.mulf %312, %310 : vector<8x32xf32>
    %cst_312 = arith.constant 1.000000e+00 : f32
    %314 = vector.broadcast %cst_312 : f32 to vector<8x32xf32>
    %315 = arith.mulf %314, %311 : vector<8x32xf32>
    %316 = arith.addf %313, %315 : vector<8x32xf32>
    %c0_313 = arith.constant 0 : index
    %c992 = arith.constant 992 : index
    %317 = vector.load %arg14[%c0_313, %c992] : memref<12x1024xf32, #tpu.memory_space<vmem>>, vector<8x32xf32>
    tpu.vector_store %arg14[%c0_313, %c992], %316 {strides = array<i32>} : memref<12x1024xf32, #tpu.memory_space<vmem>>, vector<8x32xf32>,
    %c8 = arith.constant 8 : index
    %c0_314 = arith.constant 0 : index
    %318 = vector.load %arg14[%c8, %c0_314] : memref<12x1024xf32, #tpu.memory_space<vmem>>, vector<4x1024xf32>
    tpu.vector_store %arg14[%c8, %c0_314], %3 {strides = array<i32>} : memref<12x1024xf32, #tpu.memory_space<vmem>>, vector<4x1024xf32>,
    %319 = tpu.iota {dimensions = array<i32: 1>} : vector<1x1024xi32>
    %320 = arith.sitofp %319 : vector<1x1024xi32> to vector<1x1024xf32>
    %cst_315 = arith.constant 5.000000e-01 : f32
    %321 = vector.broadcast %cst_315 : f32 to vector<1x1024xf32>
    %322 = arith.addf %320, %321 : vector<1x1024xf32>
    %cst_316 = arith.constant 3.125000e-02 : f32
    %323 = vector.broadcast %cst_316 : f32 to vector<1x1024xf32>
    %324 = arith.mulf %322, %323 : vector<1x1024xf32>
    %325 = math.floor %324 : vector<1x1024xf32>
    %cst_317 = arith.constant 3.200000e+01 : f32
    %326 = vector.broadcast %cst_317 : f32 to vector<1x1024xf32>
    %327 = arith.mulf %325, %326 : vector<1x1024xf32>
    %328 = arith.subf %320, %327 : vector<1x1024xf32>
    %c32_i32 = arith.constant 32 : i32
    %329 = vector.broadcast %c32_i32 : i32 to vector<1x1024xi32>
    %330 = arith.cmpi sge, %319, %329 : vector<1x1024xi32>
    %c992_i32 = arith.constant 992 : i32
    %331 = vector.broadcast %c992_i32 : i32 to vector<1x1024xi32>
    %332 = arith.cmpi slt, %319, %331 : vector<1x1024xi32>
    %cst_318 = arith.constant 5.000000e-01 : f32
    %333 = vector.broadcast %cst_318 : f32 to vector<1x1024xf32>
    %334 = arith.cmpf ogt, %328, %333 : vector<1x1024xf32>
    %cst_319 = arith.constant 3.050000e+01 : f32
    %335 = vector.broadcast %cst_319 : f32 to vector<1x1024xf32>
    %336 = arith.cmpf olt, %328, %335 : vector<1x1024xf32>
    %c0_320 = arith.constant 0 : index
    %c0_321 = arith.constant 0 : index
    %337 = vector.load %arg14[%c0_320, %c0_321] : memref<12x1024xf32, #tpu.memory_space<vmem>>, vector<12x1024xf32>
    %c33_i32 = arith.constant 33 : i32
    %338 = tpu.dynamic_rotate %337 by %c33_i32 dim 1 : vector<12x1024xf32>, i32 -> vector<12x1024xf32>
    %339 = arith.andi %330, %334 : vector<1x1024xi1>
    %cst_322 = arith.constant 0.000000e+00 : f32
    %340 = vector.shape_cast %339 : vector<1x1024xi1> to vector<1x1024xi1>
    %341 = vector.broadcast %340 : vector<1x1024xi1> to vector<12x1024xi1>
    %342 = vector.broadcast %cst_322 : f32 to vector<12x1024xf32>
    %343 = arith.select %341, %338, %342 : vector<12x1024xi1>, vector<12x1024xf32>
    %c0_323 = arith.constant 0 : index
    %c0_324 = arith.constant 0 : index
    %344 = vector.load %arg15[%c0_323, %c0_324] : memref<108x1024xf32, #tpu.memory_space<vmem>>, vector<12x1024xf32>
    tpu.vector_store %arg15[%c0_323, %c0_324], %343 {strides = array<i32>} : memref<108x1024xf32, #tpu.memory_space<vmem>>, vector<12x1024xf32>,
    %c32_i32_325 = arith.constant 32 : i32
    %345 = tpu.dynamic_rotate %337 by %c32_i32_325 dim 1 : vector<12x1024xf32>, i32 -> vector<12x1024xf32>
    %cst_326 = arith.constant 0.000000e+00 : f32
    %346 = vector.shape_cast %330 : vector<1x1024xi1> to vector<1x1024xi1>
    %347 = vector.broadcast %346 : vector<1x1024xi1> to vector<12x1024xi1>
    %348 = vector.broadcast %cst_326 : f32 to vector<12x1024xf32>
    %349 = arith.select %347, %345, %348 : vector<12x1024xi1>, vector<12x1024xf32>
    %c12 = arith.constant 12 : index
    %c0_327 = arith.constant 0 : index
    %350 = vector.load %arg15[%c12, %c0_327] : memref<108x1024xf32, #tpu.memory_space<vmem>>, vector<12x1024xf32>
    tpu.vector_store %arg15[%c12, %c0_327], %349 {strides = array<i32>} : memref<108x1024xf32, #tpu.memory_space<vmem>>, vector<12x1024xf32>,
    %c31_i32 = arith.constant 31 : i32
    %351 = tpu.dynamic_rotate %337 by %c31_i32 dim 1 : vector<12x1024xf32>, i32 -> vector<12x1024xf32>
    %352 = arith.andi %330, %336 : vector<1x1024xi1>
    %cst_328 = arith.constant 0.000000e+00 : f32
    %353 = vector.shape_cast %352 : vector<1x1024xi1> to vector<1x1024xi1>
    %354 = vector.broadcast %353 : vector<1x1024xi1> to vector<12x1024xi1>
    %355 = vector.broadcast %cst_328 : f32 to vector<12x1024xf32>
    %356 = arith.select %354, %351, %355 : vector<12x1024xi1>, vector<12x1024xf32>
    %c24 = arith.constant 24 : index
    %c0_329 = arith.constant 0 : index
    %357 = vector.load %arg15[%c24, %c0_329] : memref<108x1024xf32, #tpu.memory_space<vmem>>, vector<12x1024xf32>
    tpu.vector_store %arg15[%c24, %c0_329], %356 {strides = array<i32>} : memref<108x1024xf32, #tpu.memory_space<vmem>>, vector<12x1024xf32>,
    %c1_i32 = arith.constant 1 : i32
    %358 = tpu.dynamic_rotate %337 by %c1_i32 dim 1 : vector<12x1024xf32>, i32 -> vector<12x1024xf32>
    %cst_330 = arith.constant 0.000000e+00 : f32
    %359 = vector.shape_cast %334 : vector<1x1024xi1> to vector<1x1024xi1>
    %360 = vector.broadcast %359 : vector<1x1024xi1> to vector<12x1024xi1>
    %361 = vector.broadcast %cst_330 : f32 to vector<12x1024xf32>
    %362 = arith.select %360, %358, %361 : vector<12x1024xi1>, vector<12x1024xf32>
    %c36 = arith.constant 36 : index
    %c0_331 = arith.constant 0 : index
    %363 = vector.load %arg15[%c36, %c0_331] : memref<108x1024xf32, #tpu.memory_space<vmem>>, vector<12x1024xf32>
    tpu.vector_store %arg15[%c36, %c0_331], %362 {strides = array<i32>} : memref<108x1024xf32, #tpu.memory_space<vmem>>, vector<12x1024xf32>,
    %c48_332 = arith.constant 48 : index
    %c0_333 = arith.constant 0 : index
    %364 = vector.load %arg15[%c48_332, %c0_333] : memref<108x1024xf32, #tpu.memory_space<vmem>>, vector<12x1024xf32>
    tpu.vector_store %arg15[%c48_332, %c0_333], %337 {strides = array<i32>} : memref<108x1024xf32, #tpu.memory_space<vmem>>, vector<12x1024xf32>,
    %c1023_i32 = arith.constant 1023 : i32
    %365 = tpu.dynamic_rotate %337 by %c1023_i32 dim 1 : vector<12x1024xf32>, i32 -> vector<12x1024xf32>
    %cst_334 = arith.constant 0.000000e+00 : f32
    %366 = vector.shape_cast %336 : vector<1x1024xi1> to vector<1x1024xi1>
    %367 = vector.broadcast %366 : vector<1x1024xi1> to vector<12x1024xi1>
    %368 = vector.broadcast %cst_334 : f32 to vector<12x1024xf32>
    %369 = arith.select %367, %365, %368 : vector<12x1024xi1>, vector<12x1024xf32>
    %c60 = arith.constant 60 : index
    %c0_335 = arith.constant 0 : index
    %370 = vector.load %arg15[%c60, %c0_335] : memref<108x1024xf32, #tpu.memory_space<vmem>>, vector<12x1024xf32>
    tpu.vector_store %arg15[%c60, %c0_335], %369 {strides = array<i32>} : memref<108x1024xf32, #tpu.memory_space<vmem>>, vector<12x1024xf32>,
    %c993_i32 = arith.constant 993 : i32
    %371 = tpu.dynamic_rotate %337 by %c993_i32 dim 1 : vector<12x1024xf32>, i32 -> vector<12x1024xf32>
    %372 = arith.andi %332, %334 : vector<1x1024xi1>
    %cst_336 = arith.constant 0.000000e+00 : f32
    %373 = vector.shape_cast %372 : vector<1x1024xi1> to vector<1x1024xi1>
    %374 = vector.broadcast %373 : vector<1x1024xi1> to vector<12x1024xi1>
    %375 = vector.broadcast %cst_336 : f32 to vector<12x1024xf32>
    %376 = arith.select %374, %371, %375 : vector<12x1024xi1>, vector<12x1024xf32>
    %c72 = arith.constant 72 : index
    %c0_337 = arith.constant 0 : index
    %377 = vector.load %arg15[%c72, %c0_337] : memref<108x1024xf32, #tpu.memory_space<vmem>>, vector<12x1024xf32>
    tpu.vector_store %arg15[%c72, %c0_337], %376 {strides = array<i32>} : memref<108x1024xf32, #tpu.memory_space<vmem>>, vector<12x1024xf32>,
    %c992_i32_338 = arith.constant 992 : i32
    %378 = tpu.dynamic_rotate %337 by %c992_i32_338 dim 1 : vector<12x1024xf32>, i32 -> vector<12x1024xf32>
    %cst_339 = arith.constant 0.000000e+00 : f32
    %379 = vector.shape_cast %332 : vector<1x1024xi1> to vector<1x1024xi1>
    %380 = vector.broadcast %379 : vector<1x1024xi1> to vector<12x1024xi1>
    %381 = vector.broadcast %cst_339 : f32 to vector<12x1024xf32>
    %382 = arith.select %380, %378, %381 : vector<12x1024xi1>, vector<12x1024xf32>
    %c84 = arith.constant 84 : index
    %c0_340 = arith.constant 0 : index
    %383 = vector.load %arg15[%c84, %c0_340] : memref<108x1024xf32, #tpu.memory_space<vmem>>, vector<12x1024xf32>
    tpu.vector_store %arg15[%c84, %c0_340], %382 {strides = array<i32>} : memref<108x1024xf32, #tpu.memory_space<vmem>>, vector<12x1024xf32>,
    %c991_i32 = arith.constant 991 : i32
    %384 = tpu.dynamic_rotate %337 by %c991_i32 dim 1 : vector<12x1024xf32>, i32 -> vector<12x1024xf32>
    %385 = arith.andi %332, %336 : vector<1x1024xi1>
    %cst_341 = arith.constant 0.000000e+00 : f32
    %386 = vector.shape_cast %385 : vector<1x1024xi1> to vector<1x1024xi1>
    %387 = vector.broadcast %386 : vector<1x1024xi1> to vector<12x1024xi1>
    %388 = vector.broadcast %cst_341 : f32 to vector<12x1024xf32>
    %389 = arith.select %387, %384, %388 : vector<12x1024xi1>, vector<12x1024xf32>
    %c96_342 = arith.constant 96 : index
    %c0_343 = arith.constant 0 : index
    %390 = vector.load %arg15[%c96_342, %c0_343] : memref<108x1024xf32, #tpu.memory_space<vmem>>, vector<12x1024xf32>
    tpu.vector_store %arg15[%c96_342, %c0_343], %389 {strides = array<i32>} : memref<108x1024xf32, #tpu.memory_space<vmem>>, vector<12x1024xf32>,
    %c0_344 = arith.constant 0 : index
    %c0_345 = arith.constant 0 : index
    %391 = vector.load %arg7[%c0_344, %c0_345] : memref<8x108xf32, #tpu.memory_space<vmem>>, vector<8x108xf32>
    %c0_346 = arith.constant 0 : index
    %c0_347 = arith.constant 0 : index
    %392 = vector.load %arg15[%c0_346, %c0_347] : memref<108x1024xf32, #tpu.memory_space<vmem>>, vector<108x1024xf32>
    %cst_348 = arith.constant dense<0.000000e+00> : vector<8x1024xf32>
    %393 = tpu.matmul %391, %392, %cst_348 {dimension_numbers = #tpu.dot_dimension_numbers<[1], [0], [0], [1], [0, 0, 1, 1], [], []>} : vector<8x108xf32>, vector<108x1024xf32>, vector<8x1024xf32> -> vector<8x1024xf32>
    %c0_349 = arith.constant 0 : index
    %c0_350 = arith.constant 0 : index
    %394 = vector.load %arg8[%c0_349, %c0_350] : memref<8x1xf32, #tpu.memory_space<vmem>>, vector<8x1xf32>
    %395 = vector.broadcast %394 : vector<8x1xf32> to vector<8x1024xf32>
    %396 = arith.addf %393, %395 : vector<8x1024xf32>
    %cst_351 = arith.constant 0.000000e+00 : f32
    %397 = vector.broadcast %cst_351 : f32 to vector<8x1024xf32>
    %398 = arith.cmpf ogt, %396, %397 : vector<8x1024xf32>
    %cst_352 = arith.constant 0.00999999977 : f32
    %399 = vector.broadcast %cst_352 : f32 to vector<8x1024xf32>
    %400 = arith.mulf %399, %396 : vector<8x1024xf32>
    %401 = arith.select %398, %396, %400 : vector<8x1024xi1>, vector<8x1024xf32>
    %c33_i32_353 = arith.constant 33 : i32
    %402 = tpu.dynamic_rotate %401 by %c33_i32_353 dim 1 : vector<8x1024xf32>, i32 -> vector<8x1024xf32>
    %403 = arith.andi %330, %334 : vector<1x1024xi1>
    %cst_354 = arith.constant 0.000000e+00 : f32
    %404 = vector.shape_cast %403 : vector<1x1024xi1> to vector<1x1024xi1>
    %405 = vector.broadcast %404 : vector<1x1024xi1> to vector<8x1024xi1>
    %406 = vector.broadcast %cst_354 : f32 to vector<8x1024xf32>
    %407 = arith.select %405, %402, %406 : vector<8x1024xi1>, vector<8x1024xf32>
    %c0_355 = arith.constant 0 : index
    %c0_356 = arith.constant 0 : index
    %408 = vector.load %arg15[%c0_355, %c0_356] : memref<108x1024xf32, #tpu.memory_space<vmem>>, vector<8x1024xf32>
    tpu.vector_store %arg15[%c0_355, %c0_356], %407 {strides = array<i32>} : memref<108x1024xf32, #tpu.memory_space<vmem>>, vector<8x1024xf32>,
    %c32_i32_357 = arith.constant 32 : i32
    %409 = tpu.dynamic_rotate %401 by %c32_i32_357 dim 1 : vector<8x1024xf32>, i32 -> vector<8x1024xf32>
    %cst_358 = arith.constant 0.000000e+00 : f32
    %410 = vector.shape_cast %330 : vector<1x1024xi1> to vector<1x1024xi1>
    %411 = vector.broadcast %410 : vector<1x1024xi1> to vector<8x1024xi1>
    %412 = vector.broadcast %cst_358 : f32 to vector<8x1024xf32>
    %413 = arith.select %411, %409, %412 : vector<8x1024xi1>, vector<8x1024xf32>
    %c8_359 = arith.constant 8 : index
    %c0_360 = arith.constant 0 : index
    %414 = vector.load %arg15[%c8_359, %c0_360] : memref<108x1024xf32, #tpu.memory_space<vmem>>, vector<8x1024xf32>
    tpu.vector_store %arg15[%c8_359, %c0_360], %413 {strides = array<i32>} : memref<108x1024xf32, #tpu.memory_space<vmem>>, vector<8x1024xf32>,
    %c31_i32_361 = arith.constant 31 : i32
    %415 = tpu.dynamic_rotate %401 by %c31_i32_361 dim 1 : vector<8x1024xf32>, i32 -> vector<8x1024xf32>
    %416 = arith.andi %330, %336 : vector<1x1024xi1>
    %cst_362 = arith.constant 0.000000e+00 : f32
    %417 = vector.shape_cast %416 : vector<1x1024xi1> to vector<1x1024xi1>
    %418 = vector.broadcast %417 : vector<1x1024xi1> to vector<8x1024xi1>
    %419 = vector.broadcast %cst_362 : f32 to vector<8x1024xf32>
    %420 = arith.select %418, %415, %419 : vector<8x1024xi1>, vector<8x1024xf32>
    %c16_363 = arith.constant 16 : index
    %c0_364 = arith.constant 0 : index
    %421 = vector.load %arg15[%c16_363, %c0_364] : memref<108x1024xf32, #tpu.memory_space<vmem>>, vector<8x1024xf32>
    tpu.vector_store %arg15[%c16_363, %c0_364], %420 {strides = array<i32>} : memref<108x1024xf32, #tpu.memory_space<vmem>>, vector<8x1024xf32>,
    %c1_i32_365 = arith.constant 1 : i32
    %422 = tpu.dynamic_rotate %401 by %c1_i32_365 dim 1 : vector<8x1024xf32>, i32 -> vector<8x1024xf32>
    %cst_366 = arith.constant 0.000000e+00 : f32
    %423 = vector.shape_cast %334 : vector<1x1024xi1> to vector<1x1024xi1>
    %424 = vector.broadcast %423 : vector<1x1024xi1> to vector<8x1024xi1>
    %425 = vector.broadcast %cst_366 : f32 to vector<8x1024xf32>
    %426 = arith.select %424, %422, %425 : vector<8x1024xi1>, vector<8x1024xf32>
    %c24_367 = arith.constant 24 : index
    %c0_368 = arith.constant 0 : index
    %427 = vector.load %arg15[%c24_367, %c0_368] : memref<108x1024xf32, #tpu.memory_space<vmem>>, vector<8x1024xf32>
    tpu.vector_store %arg15[%c24_367, %c0_368], %426 {strides = array<i32>} : memref<108x1024xf32, #tpu.memory_space<vmem>>, vector<8x1024xf32>,
    %c32_369 = arith.constant 32 : index
    %c0_370 = arith.constant 0 : index
    %428 = vector.load %arg15[%c32_369, %c0_370] : memref<108x1024xf32, #tpu.memory_space<vmem>>, vector<8x1024xf32>
    tpu.vector_store %arg15[%c32_369, %c0_370], %401 {strides = array<i32>} : memref<108x1024xf32, #tpu.memory_space<vmem>>, vector<8x1024xf32>,
    %c1023_i32_371 = arith.constant 1023 : i32
    %429 = tpu.dynamic_rotate %401 by %c1023_i32_371 dim 1 : vector<8x1024xf32>, i32 -> vector<8x1024xf32>
    %cst_372 = arith.constant 0.000000e+00 : f32
    %430 = vector.shape_cast %336 : vector<1x1024xi1> to vector<1x1024xi1>
    %431 = vector.broadcast %430 : vector<1x1024xi1> to vector<8x1024xi1>
    %432 = vector.broadcast %cst_372 : f32 to vector<8x1024xf32>
    %433 = arith.select %431, %429, %432 : vector<8x1024xi1>, vector<8x1024xf32>
    %c40 = arith.constant 40 : index
    %c0_373 = arith.constant 0 : index
    %434 = vector.load %arg15[%c40, %c0_373] : memref<108x1024xf32, #tpu.memory_space<vmem>>, vector<8x1024xf32>
    tpu.vector_store %arg15[%c40, %c0_373], %433 {strides = array<i32>} : memref<108x1024xf32, #tpu.memory_space<vmem>>, vector<8x1024xf32>,
    %c993_i32_374 = arith.constant 993 : i32
    %435 = tpu.dynamic_rotate %401 by %c993_i32_374 dim 1 : vector<8x1024xf32>, i32 -> vector<8x1024xf32>
    %436 = arith.andi %332, %334 : vector<1x1024xi1>
    %cst_375 = arith.constant 0.000000e+00 : f32
    %437 = vector.shape_cast %436 : vector<1x1024xi1> to vector<1x1024xi1>
    %438 = vector.broadcast %437 : vector<1x1024xi1> to vector<8x1024xi1>
    %439 = vector.broadcast %cst_375 : f32 to vector<8x1024xf32>
    %440 = arith.select %438, %435, %439 : vector<8x1024xi1>, vector<8x1024xf32>
    %c48_376 = arith.constant 48 : index
    %c0_377 = arith.constant 0 : index
    %441 = vector.load %arg15[%c48_376, %c0_377] : memref<108x1024xf32, #tpu.memory_space<vmem>>, vector<8x1024xf32>
    tpu.vector_store %arg15[%c48_376, %c0_377], %440 {strides = array<i32>} : memref<108x1024xf32, #tpu.memory_space<vmem>>, vector<8x1024xf32>,
    %c992_i32_378 = arith.constant 992 : i32
    %442 = tpu.dynamic_rotate %401 by %c992_i32_378 dim 1 : vector<8x1024xf32>, i32 -> vector<8x1024xf32>
    %cst_379 = arith.constant 0.000000e+00 : f32
    %443 = vector.shape_cast %332 : vector<1x1024xi1> to vector<1x1024xi1>
    %444 = vector.broadcast %443 : vector<1x1024xi1> to vector<8x1024xi1>
    %445 = vector.broadcast %cst_379 : f32 to vector<8x1024xf32>
    %446 = arith.select %444, %442, %445 : vector<8x1024xi1>, vector<8x1024xf32>
    %c56 = arith.constant 56 : index
    %c0_380 = arith.constant 0 : index
    %447 = vector.load %arg15[%c56, %c0_380] : memref<108x1024xf32, #tpu.memory_space<vmem>>, vector<8x1024xf32>
    tpu.vector_store %arg15[%c56, %c0_380], %446 {strides = array<i32>} : memref<108x1024xf32, #tpu.memory_space<vmem>>, vector<8x1024xf32>,
    %c991_i32_381 = arith.constant 991 : i32
    %448 = tpu.dynamic_rotate %401 by %c991_i32_381 dim 1 : vector<8x1024xf32>, i32 -> vector<8x1024xf32>
    %449 = arith.andi %332, %336 : vector<1x1024xi1>
    %cst_382 = arith.constant 0.000000e+00 : f32
    %450 = vector.shape_cast %449 : vector<1x1024xi1> to vector<1x1024xi1>
    %451 = vector.broadcast %450 : vector<1x1024xi1> to vector<8x1024xi1>
    %452 = vector.broadcast %cst_382 : f32 to vector<8x1024xf32>
    %453 = arith.select %451, %448, %452 : vector<8x1024xi1>, vector<8x1024xf32>
    %c64_383 = arith.constant 64 : index
    %c0_384 = arith.constant 0 : index
    %454 = vector.load %arg15[%c64_383, %c0_384] : memref<108x1024xf32, #tpu.memory_space<vmem>>, vector<8x1024xf32>
    tpu.vector_store %arg15[%c64_383, %c0_384], %453 {strides = array<i32>} : memref<108x1024xf32, #tpu.memory_space<vmem>>, vector<8x1024xf32>,
    %c0_385 = arith.constant 0 : index
    %c0_386 = arith.constant 0 : index
    %455 = vector.load %arg9[%c0_385, %c0_386] : memref<8x72xf32, #tpu.memory_space<vmem>>, vector<8x72xf32>
    %c0_387 = arith.constant 0 : index
    %c0_388 = arith.constant 0 : index
    %456 = vector.load %arg15[%c0_387, %c0_388] : memref<108x1024xf32, #tpu.memory_space<vmem>>, vector<72x1024xf32>
    %cst_389 = arith.constant dense<0.000000e+00> : vector<8x1024xf32>
    %457 = tpu.matmul %455, %456, %cst_389 {dimension_numbers = #tpu.dot_dimension_numbers<[1], [0], [0], [1], [0, 0, 1, 1], [], []>} : vector<8x72xf32>, vector<72x1024xf32>, vector<8x1024xf32> -> vector<8x1024xf32>
    %c0_390 = arith.constant 0 : index
    %c0_391 = arith.constant 0 : index
    %458 = vector.load %arg10[%c0_390, %c0_391] : memref<8x1xf32, #tpu.memory_space<vmem>>, vector<8x1xf32>
    %459 = vector.broadcast %458 : vector<8x1xf32> to vector<8x1024xf32>
    %460 = arith.addf %457, %459 : vector<8x1024xf32>
    %cst_392 = arith.constant 0.000000e+00 : f32
    %461 = vector.broadcast %cst_392 : f32 to vector<8x1024xf32>
    %462 = arith.cmpf ogt, %460, %461 : vector<8x1024xf32>
    %cst_393 = arith.constant 0.00999999977 : f32
    %463 = vector.broadcast %cst_393 : f32 to vector<8x1024xf32>
    %464 = arith.mulf %463, %460 : vector<8x1024xf32>
    %465 = arith.select %462, %460, %464 : vector<8x1024xi1>, vector<8x1024xf32>
    %c0_394 = arith.constant 0 : index
    %c0_395 = arith.constant 0 : index
    %c0_396 = arith.constant 0 : index
    %466 = vector.load %arg11[%c0_394, %c0_395, %c0_396] : memref<1x8x1024xf32, #tpu.memory_space<vmem>>, vector<1x8x1024xf32>
    %467 = vector.shape_cast %466 : vector<1x8x1024xf32> to vector<8x1024xf32>
    %468 = vector.shape_cast %465 : vector<8x1024xf32> to vector<1x8x1024xf32>
    tpu.vector_store %arg11[%c0_394, %c0_395, %c0_396], %468 {strides = array<i32>} : memref<1x8x1024xf32, #tpu.memory_space<vmem>>, vector<1x8x1024xf32>,
    return
  }
  func.func @transform_0(%arg0: i32) -> (i32, i32, i32) {
    %c0_i32 = arith.constant 0 : i32
    %c0_i32_0 = arith.constant 0 : i32
    %c0_i32_1 = arith.constant 0 : i32
    return %arg0, %c0_i32, %c0_i32_0 : i32, i32, i32
  }
  func.func @transform_1(%arg0: i32) -> (i32, i32, i32) {
    %c0_i32 = arith.constant 0 : i32
    %c0_i32_0 = arith.constant 0 : i32
    %c0_i32_1 = arith.constant 0 : i32
    return %arg0, %c0_i32, %c0_i32_0 : i32, i32, i32
  }
  func.func @transform_2(%arg0: i32) -> (i32, i32, i32) {
    %c0_i32 = arith.constant 0 : i32
    %c0_i32_0 = arith.constant 0 : i32
    %c0_i32_1 = arith.constant 0 : i32
    return %arg0, %c0_i32, %c0_i32_0 : i32, i32, i32
  }
  func.func @transform_3(%arg0: i32) -> (i32, i32) {
    %c0_i32 = arith.constant 0 : i32
    %c0_i32_0 = arith.constant 0 : i32
    %c0_i32_1 = arith.constant 0 : i32
    return %c0_i32, %c0_i32_0 : i32, i32
  }
  func.func @transform_4(%arg0: i32) -> (i32, i32) {
    %c0_i32 = arith.constant 0 : i32
    %c0_i32_0 = arith.constant 0 : i32
    %c0_i32_1 = arith.constant 0 : i32
    return %c0_i32, %c0_i32_0 : i32, i32
  }
  func.func @transform_5(%arg0: i32) -> (i32, i32) {
    %c0_i32 = arith.constant 0 : i32
    %c0_i32_0 = arith.constant 0 : i32
    %c0_i32_1 = arith.constant 0 : i32
    return %c0_i32, %c0_i32_0 : i32, i32
  }
  func.func @transform_6(%arg0: i32) -> (i32, i32) {
    %c0_i32 = arith.constant 0 : i32
    %c0_i32_0 = arith.constant 0 : i32
    %c0_i32_1 = arith.constant 0 : i32
    return %c0_i32, %c0_i32_0 : i32, i32
  }
  func.func @transform_7(%arg0: i32) -> (i32, i32) {
    %c0_i32 = arith.constant 0 : i32
    %c0_i32_0 = arith.constant 0 : i32
    %c0_i32_1 = arith.constant 0 : i32
    return %c0_i32, %c0_i32_0 : i32, i32
  }
  func.func @transform_8(%arg0: i32) -> (i32, i32) {
    %c0_i32 = arith.constant 0 : i32
    %c0_i32_0 = arith.constant 0 : i32
    %c0_i32_1 = arith.constant 0 : i32
    return %c0_i32, %c0_i32_0 : i32, i32
  }
  func.func @transform_9(%arg0: i32) -> (i32, i32) {
    %c0_i32 = arith.constant 0 : i32
    %c0_i32_0 = arith.constant 0 : i32
    %c0_i32_1 = arith.constant 0 : i32
    return %c0_i32, %c0_i32_0 : i32, i32
  }
  func.func @transform_10(%arg0: i32) -> (i32, i32, i32) {
    %c0_i32 = arith.constant 0 : i32
    %c0_i32_0 = arith.constant 0 : i32
    %c0_i32_1 = arith.constant 0 : i32
    return %arg0, %c0_i32, %c0_i32_0 : i32, i32, i32
  }
}

</mosaic_0001>

<llo_original>
// kernel: tpu_custom_call.1
$region0: #{tpu_custom_call.1}
  #allocation0 [shape = 'u32[]', space=smem, size = 0x4, offset = 0x4, fixed_abs, tag = 'smem constant byte address 0x4 - core index']
  #allocation1 [shape = 'u32[144,128]{1,0:T(1,128)}', space=vmem, size = 0x12000, scoped, tag = 'internal scratch']
  #allocation2 [shape = 'f32[8,256]{1,0:T(8,128)}', space=vmem, size = 0x2000, scoped, tag = 'scratch operand']
  #allocation3 [shape = 'f32[8,512]{1,0:T(8,128)}', space=vmem, size = 0x4000, scoped, tag = 'scratch operand']
  #allocation4 [shape = 'f32[12,1024]{1,0:T(8,128)}', space=vmem, size = 0x10000, scoped, tag = 'scratch operand']
  #allocation5 [shape = 'f32[108,1024]{1,0:T(8,128)}', space=vmem, size = 0x70000, scoped, tag = 'scratch operand']
  %s0 = inlined_call_operand.hbm [shape: f32[2,8,256], index: 0, kind: input, shape index: {}]
  %s1 = inlined_call_operand.hbm [shape: f32[2,4,1024], index: 1, kind: input, shape index: {}]
  %s2 = inlined_call_operand.vmem [shape: f32[2,4,256], index: 2, kind: input, shape index: {}]
  %s3 = inlined_call_operand.hbm [shape: f32[4,8], index: 3, kind: input, shape index: {}]
  %s4 = inlined_call_operand.vmem [shape: f32[4,1], index: 4, kind: input, shape index: {}]
  %s5 = inlined_call_operand.vmem [shape: f32[16,32], index: 5, kind: input, shape index: {}]
  %s6 = inlined_call_operand.vmem [shape: f32[8,108], index: 6, kind: input, shape index: {}]
  %s7 = inlined_call_operand.vmem [shape: f32[8,1], index: 7, kind: input, shape index: {}]
  %s8 = inlined_call_operand.vmem [shape: f32[8,72], index: 8, kind: input, shape index: {}]
  %s9 = inlined_call_operand.vmem [shape: f32[8,1], index: 9, kind: input, shape index: {}]
  %s10 = inlined_call_operand.hbm [shape: f32[2,8,1024], index: 10, kind: output, shape index: {}]
  %s11 = sld [smem:[#allocation0]]
  $region85: #{tpu_custom_call.1} parent=0
    _
  %s13 = ssub.s32 1, %s11
  %s14 = scalar_select 0, %s13, %s11
  $region1: #{tpu_custom_call.1} parent=0
    #allocation6 [shape = 'u8[16384]{0}', space=vmem, size = 0x4000, scoped, tag = 'input window, operand 0']
    #allocation7 [shape = 's32[2]{0}', space=sflag, size = 0x8, scoped, tag = 'scoped memory for tpu_custom_call.1']
    #allocation8 [shape = 's32[2]{0}', space=sflag, size = 0x8, scoped, tag = 'scoped memory for tpu_custom_call.1']
    #allocation9 [shape = 'u8[32768]{0}', space=vmem, size = 0x8000, scoped, tag = 'input window, operand 1']
    #allocation10 [shape = 's32[2]{0}', space=sflag, size = 0x8, scoped, tag = 'scoped memory for tpu_custom_call.1']
    #allocation11 [shape = 'u8[2048]{0}', space=vmem, size = 0x800, scoped, tag = 'input window, operand 3, single buffered']
    #allocation12 [shape = 'u8[65536]{0}', space=vmem, size = 0x10000, scoped, tag = 'output window, operand 0']
    %15 = vsyncpa [#allocation7], 0
    %s16 = scalar_lea.sflag [#allocation7], 1
    %17 = vsyncpa %s16, 0
    %18 = vsyncpa [#allocation10], 0
    %s19 = scalar_lea.sflag [#allocation10], 1
    %20 = vsyncpa %s19, 0
    %21 = vsyncpa [#allocation8], 0
    %s22 = scalar_lea.sflag [#allocation8], 1
    %23 = vsyncpa %s22, 0
    loop: start=0, step=1, limit=4
    $region2: #{tpu_custom_call.1} parent=1 // loop_pre_header
      _
    $region3: #{tpu_custom_call.1} parent=1 // loop_header
      %s25 = sphi 0, %s29
      %p26 = scmp.ge.s32.totalorder %s25, 4
      %s35 = sphi 0, %s37
      %s38 = sphi 0, %s35
      %s39 = sphi 0, %s38
      %s55 = sphi 0, %s39
      %s61 = sphi 0, %s63
      %s64 = sphi 0, %s61
      %s65 = sphi 0, %s64
      %s81 = sphi 0, %s65
      %s87 = sphi 0, %s89
      %s90 = sphi 0, %s87
      %s91 = sphi 0, %s90
      %s107 = sphi 0, %s91
      %s111 = sphi 0, %s111
      %s113 = sphi 0, %s111
      %s114 = sphi 0, %s113
      %s128 = sphi 0, %s114
      %s132 = sphi 0, %s132
      %s134 = sphi 0, %s132
      %s135 = sphi 0, %s134
      %s149 = sphi 0, %s135
      %s153 = sphi 0, %s153
      %s155 = sphi 0, %s153
      %s156 = sphi 0, %s155
      %s170 = sphi 0, %s156
      %s174 = sphi 0, %s174
      %s176 = sphi 0, %s174
      %s177 = sphi 0, %s176
      %s191 = sphi 0, %s177
      %s195 = sphi 0, %s195
      %s197 = sphi 0, %s195
      %s198 = sphi 0, %s197
      %s212 = sphi 0, %s198
      %s216 = sphi 0, %s216
      %s218 = sphi 0, %s216
      %s219 = sphi 0, %s218
      %s233 = sphi 0, %s219
      %s237 = sphi 0, %s237
      %s239 = sphi 0, %s237
      %s240 = sphi 0, %s239
      %s254 = sphi 0, %s240
      %s260 = sphi 0, %s262
      %s263 = sphi 0, %s260
      %s264 = sphi 0, %s263
      %s280 = sphi 0, %s264
    $region4: #{tpu_custom_call.1} parent=1 // loop_header_branch
      %28 = sbr.rel (%p26) target = $region8
    $region5: #{tpu_custom_call.1} parent=1 // loop_body
      %s30 = ssub.s32 %s25, 1
      %s31 = ssub.s32 %s25, 2
      %s32 = sadd.s32 %s25, 1
      %s33 = ssub.s32 %s25, %s32
      %p34 = scmp.eq.s32.totalorder %s33, 0
      %s36 = sadd.s32 %s35, 1
      %s37 = scalar_select %p34, %s35, %s36
      %p40 = pneg %p34
      %p41 = scmp.eq.s32.totalorder %s25, 1
      %p42 = por %p40, %p41
      %p43 = scmp.ne.s32.totalorder %s35, %s38
      %p44 = scmp.eq.s32.totalorder %s25, 0
      %p45 = por %p43, %p44
      %p46 = scmp.ne.s32.totalorder %s35, %s38
      %p47 = scmp.eq.s32.totalorder %s30, 1
      %p48 = por %p46, %p47
      %p49 = scmp.ne.s32.totalorder %s38, %s39
      %p50 = scmp.eq.s32.totalorder %s30, 0
      %p51 = por %p49, %p50
      %p52 = scmp.ne.s32.totalorder %s38, %s39
      %p53 = scmp.eq.s32.totalorder %s31, 1
      %p54 = por %p52, %p53
      %p56 = scmp.ne.s32.totalorder %s39, %s55
      %p57 = scmp.eq.s32.totalorder %s31, 0
      %p58 = por %p56, %p57
      %s59 = ssub.s32 %s25, %s32
      %p60 = scmp.eq.s32.totalorder %s59, 0
      %s62 = sadd.s32 %s61, 1
      %s63 = scalar_select %p60, %s61, %s62
      %p66 = pneg %p60
      %p67 = scmp.eq.s32.totalorder %s25, 1
      %p68 = por %p66, %p67
      %p69 = scmp.ne.s32.totalorder %s61, %s64
      %p70 = scmp.eq.s32.totalorder %s25, 0
      %p71 = por %p69, %p70
      %p72 = scmp.ne.s32.totalorder %s61, %s64
      %p73 = scmp.eq.s32.totalorder %s30, 1
      %p74 = por %p72, %p73
      %p75 = scmp.ne.s32.totalorder %s64, %s65
      %p76 = scmp.eq.s32.totalorder %s30, 0
      %p77 = por %p75, %p76
      %p78 = scmp.ne.s32.totalorder %s64, %s65
      %p79 = scmp.eq.s32.totalorder %s31, 1
      %p80 = por %p78, %p79
      %p82 = scmp.ne.s32.totalorder %s65, %s81
      %p83 = scmp.eq.s32.totalorder %s31, 0
      %p84 = por %p82, %p83
      %s85 = ssub.s32 %s25, %s32
      %p86 = scmp.eq.s32.totalorder %s85, 0
      %s88 = sadd.s32 %s87, 1
      %s89 = scalar_select %p86, %s87, %s88
      %p92 = pneg %p86
      %p93 = scmp.eq.s32.totalorder %s25, 1
      %p94 = por %p92, %p93
      %p95 = scmp.ne.s32.totalorder %s87, %s90
      %p96 = scmp.eq.s32.totalorder %s25, 0
      %p97 = por %p95, %p96
      %p98 = scmp.ne.s32.totalorder %s87, %s90
      %p99 = scmp.eq.s32.totalorder %s30, 1
      %p100 = por %p98, %p99
      %p101 = scmp.ne.s32.totalorder %s90, %s91
      %p102 = scmp.eq.s32.totalorder %s30, 0
      %p103 = por %p101, %p102
      %p104 = scmp.ne.s32.totalorder %s90, %s91
      %p105 = scmp.eq.s32.totalorder %s31, 1
      %p106 = por %p104, %p105
      %p108 = scmp.ne.s32.totalorder %s91, %s107
      %p109 = scmp.eq.s32.totalorder %s31, 0
      %p110 = por %p108, %p109
      %s112 = sadd.s32 %s111, 1
      %p115 = scmp.eq.s32.totalorder %s25, 1
      %p116 = scmp.ne.s32.totalorder %s111, %s113
      %p117 = scmp.eq.s32.totalorder %s25, 0
      %p118 = por %p116, %p117
      %p119 = scmp.ne.s32.totalorder %s111, %s113
      %p120 = scmp.eq.s32.totalorder %s30, 1
      %p121 = por %p119, %p120
      %p122 = scmp.ne.s32.totalorder %s113, %s114
      %p123 = scmp.eq.s32.totalorder %s30, 0
      %p124 = por %p122, %p123
      %p125 = scmp.ne.s32.totalorder %s113, %s114
      %p126 = scmp.eq.s32.totalorder %s31, 1
      %p127 = por %p125, %p126
      %p129 = scmp.ne.s32.totalorder %s114, %s128
      %p130 = scmp.eq.s32.totalorder %s31, 0
      %p131 = por %p129, %p130
      %s133 = sadd.s32 %s132, 1
      %p136 = scmp.eq.s32.totalorder %s25, 1
      %p137 = scmp.ne.s32.totalorder %s132, %s134
      %p138 = scmp.eq.s32.totalorder %s25, 0
      %p139 = por %p137, %p138
      %p140 = scmp.ne.s32.totalorder %s132, %s134
      %p141 = scmp.eq.s32.totalorder %s30, 1
      %p142 = por %p140, %p141
      %p143 = scmp.ne.s32.totalorder %s134, %s135
      %p144 = scmp.eq.s32.totalorder %s30, 0
      %p145 = por %p143, %p144
      %p146 = scmp.ne.s32.totalorder %s134, %s135
      %p147 = scmp.eq.s32.totalorder %s31, 1
      %p148 = por %p146, %p147
      %p150 = scmp.ne.s32.totalorder %s135, %s149
      %p151 = scmp.eq.s32.totalorder %s31, 0
      %p152 = por %p150, %p151
      %s154 = sadd.s32 %s153, 1
      %p157 = scmp.eq.s32.totalorder %s25, 1
      %p158 = scmp.ne.s32.totalorder %s153, %s155
      %p159 = scmp.eq.s32.totalorder %s25, 0
      %p160 = por %p158, %p159
      %p161 = scmp.ne.s32.totalorder %s153, %s155
      %p162 = scmp.eq.s32.totalorder %s30, 1
      %p163 = por %p161, %p162
      %p164 = scmp.ne.s32.totalorder %s155, %s156
      %p165 = scmp.eq.s32.totalorder %s30, 0
      %p166 = por %p164, %p165
      %p167 = scmp.ne.s32.totalorder %s155, %s156
      %p168 = scmp.eq.s32.totalorder %s31, 1
      %p169 = por %p167, %p168
      %p171 = scmp.ne.s32.totalorder %s156, %s170
      %p172 = scmp.eq.s32.totalorder %s31, 0
      %p173 = por %p171, %p172
      %s175 = sadd.s32 %s174, 1
      %p178 = scmp.eq.s32.totalorder %s25, 1
      %p179 = scmp.ne.s32.totalorder %s174, %s176
      %p180 = scmp.eq.s32.totalorder %s25, 0
      %p181 = por %p179, %p180
      %p182 = scmp.ne.s32.totalorder %s174, %s176
      %p183 = scmp.eq.s32.totalorder %s30, 1
      %p184 = por %p182, %p183
      %p185 = scmp.ne.s32.totalorder %s176, %s177
      %p186 = scmp.eq.s32.totalorder %s30, 0
      %p187 = por %p185, %p186
      %p188 = scmp.ne.s32.totalorder %s176, %s177
      %p189 = scmp.eq.s32.totalorder %s31, 1
      %p190 = por %p188, %p189
      %p192 = scmp.ne.s32.totalorder %s177, %s191
      %p193 = scmp.eq.s32.totalorder %s31, 0
      %p194 = por %p192, %p193
      %s196 = sadd.s32 %s195, 1
      %p199 = scmp.eq.s32.totalorder %s25, 1
      %p200 = scmp.ne.s32.totalorder %s195, %s197
      %p201 = scmp.eq.s32.totalorder %s25, 0
      %p202 = por %p200, %p201
      %p203 = scmp.ne.s32.totalorder %s195, %s197
      %p204 = scmp.eq.s32.totalorder %s30, 1
      %p205 = por %p203, %p204
      %p206 = scmp.ne.s32.totalorder %s197, %s198
      %p207 = scmp.eq.s32.totalorder %s30, 0
      %p208 = por %p206, %p207
      %p209 = scmp.ne.s32.totalorder %s197, %s198
      %p210 = scmp.eq.s32.totalorder %s31, 1
      %p211 = por %p209, %p210
      %p213 = scmp.ne.s32.totalorder %s198, %s212
      %p214 = scmp.eq.s32.totalorder %s31, 0
      %p215 = por %p213, %p214
      %s217 = sadd.s32 %s216, 1
      %p220 = scmp.eq.s32.totalorder %s25, 1
      %p221 = scmp.ne.s32.totalorder %s216, %s218
      %p222 = scmp.eq.s32.totalorder %s25, 0
      %p223 = por %p221, %p222
      %p224 = scmp.ne.s32.totalorder %s216, %s218
      %p225 = scmp.eq.s32.totalorder %s30, 1
      %p226 = por %p224, %p225
      %p227 = scmp.ne.s32.totalorder %s218, %s219
      %p228 = scmp.eq.s32.totalorder %s30, 0
      %p229 = por %p227, %p228
      %p230 = scmp.ne.s32.totalorder %s218, %s219
      %p231 = scmp.eq.s32.totalorder %s31, 1
      %p232 = por %p230, %p231
      %p234 = scmp.ne.s32.totalorder %s219, %s233
      %p235 = scmp.eq.s32.totalorder %s31, 0
      %p236 = por %p234, %p235
      %s238 = sadd.s32 %s237, 1
      %p241 = scmp.eq.s32.totalorder %s25, 1
      %p242 = scmp.ne.s32.totalorder %s237, %s239
      %p243 = scmp.eq.s32.totalorder %s25, 0
      %p244 = por %p242, %p243
      %p245 = scmp.ne.s32.totalorder %s237, %s239
      %p246 = scmp.eq.s32.totalorder %s30, 1
      %p247 = por %p245, %p246
      %p248 = scmp.ne.s32.totalorder %s239, %s240
      %p249 = scmp.eq.s32.totalorder %s30, 0
      %p250 = por %p248, %p249
      %p251 = scmp.ne.s32.totalorder %s239, %s240
      %p252 = scmp.eq.s32.totalorder %s31, 1
      %p253 = por %p251, %p252
      %p255 = scmp.ne.s32.totalorder %s240, %s254
      %p256 = scmp.eq.s32.totalorder %s31, 0
      %p257 = por %p255, %p256
      %s258 = ssub.s32 %s25, %s32
      %p259 = scmp.eq.s32.totalorder %s258, 0
      %s261 = sadd.s32 %s260, 1
      %s262 = scalar_select %p259, %s260, %s261
      %p265 = pneg %p259
      %p266 = scmp.eq.s32.totalorder %s25, 1
      %p267 = por %p265, %p266
      %p268 = scmp.ne.s32.totalorder %s260, %s263
      %p269 = scmp.eq.s32.totalorder %s25, 0
      %p270 = por %p268, %p269
      %p271 = scmp.ne.s32.totalorder %s260, %s263
      %p272 = scmp.eq.s32.totalorder %s30, 1
      %p273 = por %p271, %p272
      %p274 = scmp.ne.s32.totalorder %s263, %s264
      %p275 = scmp.eq.s32.totalorder %s30, 0
      %p276 = por %p274, %p275
      %p277 = scmp.ne.s32.totalorder %s263, %s264
      %p278 = scmp.eq.s32.totalorder %s31, 1
      %p279 = por %p277, %p278
      %p281 = scmp.ne.s32.totalorder %s264, %s280
      %p282 = scmp.eq.s32.totalorder %s31, 0
      %p283 = por %p281, %p282
      %p284 = scmp.le.s32.totalorder 1, %s25
      %p285 = scmp.lt.s32.totalorder %s25, 3
      %p286 = pnand %p284, %p285
      %p287 = pneg %p286
      // Predicated region
      $region9: #{tpu_custom_call.1} parent=5 // pred_check
        _
      $region10: #{tpu_custom_call.1} parent=5 // pred_check_branch
        %289 = sbr.rel (%p286) target = $region12
      $region11: #{tpu_custom_call.1} parent=5 // pred_region
        %s290 = ssub.s32 %s25, 1
        // Predicated region
        $region13: #{tpu_custom_call.1} parent=11 // pred_check
          %p291 = pneg %p124
        $region14: #{tpu_custom_call.1} parent=11 // pred_check_branch
          %293 = sbr.rel (%p291) target = $region16
        $region15: #{tpu_custom_call.1} parent=11 // pred_region
          %s295 = ssub.s32 64, 64
          %296 = vsyncadd [#allocation10], %s295
          %s298 = sshll.u32 [#allocation11], 4
          %s299 = int_to_ptr.vmem [resolvable:$true] %s298
          %301 = dma.hbm_to_vmem [thread:$0]  %s3, 64, %s299, [#allocation10]
        $region16: #{tpu_custom_call.1} parent=11 // pred_fallthru
          _
        // Predicated region
        $region17: #{tpu_custom_call.1} parent=11 // pred_check
          %p302 = pneg %p145
        $region18: #{tpu_custom_call.1} parent=11 // pred_check_branch
          %304 = sbr.rel (%p302) target = $region20
        $region19: #{tpu_custom_call.1} parent=11 // pred_region
          _
        $region20: #{tpu_custom_call.1} parent=11 // pred_fallthru
          _
        // Predicated region
        $region21: #{tpu_custom_call.1} parent=11 // pred_check
          %p305 = pneg %p166
        $region22: #{tpu_custom_call.1} parent=11 // pred_check_branch
          %307 = sbr.rel (%p305) target = $region24
        $region23: #{tpu_custom_call.1} parent=11 // pred_region
          _
        $region24: #{tpu_custom_call.1} parent=11 // pred_fallthru
          _
        // Predicated region
        $region25: #{tpu_custom_call.1} parent=11 // pred_check
          %p308 = pneg %p187
        $region26: #{tpu_custom_call.1} parent=11 // pred_check_branch
          %310 = sbr.rel (%p308) target = $region28
        $region27: #{tpu_custom_call.1} parent=11 // pred_region
          _
        $region28: #{tpu_custom_call.1} parent=11 // pred_fallthru
          _
        // Predicated region
        $region29: #{tpu_custom_call.1} parent=11 // pred_check
          %p311 = pneg %p208
        $region30: #{tpu_custom_call.1} parent=11 // pred_check_branch
          %313 = sbr.rel (%p311) target = $region32
        $region31: #{tpu_custom_call.1} parent=11 // pred_region
          _
        $region32: #{tpu_custom_call.1} parent=11 // pred_fallthru
          _
        // Predicated region
        $region33: #{tpu_custom_call.1} parent=11 // pred_check
          %p314 = pneg %p229
        $region34: #{tpu_custom_call.1} parent=11 // pred_check_branch
          %316 = sbr.rel (%p314) target = $region36
        $region35: #{tpu_custom_call.1} parent=11 // pred_region
          _
        $region36: #{tpu_custom_call.1} parent=11 // pred_fallthru
          _
        // Predicated region
        $region37: #{tpu_custom_call.1} parent=11 // pred_check
          %p317 = pneg %p250
        $region38: #{tpu_custom_call.1} parent=11 // pred_check_branch
          %319 = sbr.rel (%p317) target = $region40
        $region39: #{tpu_custom_call.1} parent=11 // pred_region
          _
        $region40: #{tpu_custom_call.1} parent=11 // pred_fallthru
          _
      $region12: #{tpu_custom_call.1} parent=5 // pred_fallthru
        _
      %p320 = scmp.lt.s32.totalorder %s25, 2
      // Predicated region
      $region41: #{tpu_custom_call.1} parent=5 // pred_check
        %p321 = pneg %p320
      $region42: #{tpu_custom_call.1} parent=5 // pred_check_branch
        %323 = sbr.rel (%p321) target = $region44
      $region43: #{tpu_custom_call.1} parent=5 // pred_region
        // Predicated region
        $region45: #{tpu_custom_call.1} parent=43 // pred_check
          %p324 = pneg %p45
        $region46: #{tpu_custom_call.1} parent=43 // pred_check_branch
          %326 = sbr.rel (%p324) target = $region48
        $region47: #{tpu_custom_call.1} parent=43 // pred_region
          %s327 = sand.u32 %s35, 1
          %s328 = scalar_lea.sflag [#allocation7], %s327
          %s329 = sand.u32 %s35, 1
          %s330 = smul.addr %s329, 16
          %s331 = scalar_lea.vmem [#allocation6], %s330
          %s333 = ssub.s32 256, 256
          %334 = vsyncadd %s328, %s333
          %s335 = smul.addr %s25, 2
          %s336 = smul.addr %s335, 128
          %s337 = scalar_lea.hbm %s0, %s336
          %s339 = sshll.u32 %s331, 4
          %s340 = int_to_ptr.vmem [resolvable:$true] %s339
          %342 = dma.hbm_to_vmem [thread:$0]  %s337, 256, %s340, %s328
        $region48: #{tpu_custom_call.1} parent=43 // pred_fallthru
          _
        // Predicated region
        $region49: #{tpu_custom_call.1} parent=43 // pred_check
          %p343 = pneg %p71
        $region50: #{tpu_custom_call.1} parent=43 // pred_check_branch
          %345 = sbr.rel (%p343) target = $region52
        $region51: #{tpu_custom_call.1} parent=43 // pred_region
          %s346 = sand.u32 %s25, 1
          %s347 = scalar_lea.sflag [#allocation10], %s346
          %s348 = sand.u32 %s61, 1
          %s349 = smul.addr %s348, 32
          %s350 = scalar_lea.vmem [#allocation9], %s349
          %s352 = ssub.s32 512, 512
          %353 = vsyncadd %s347, %s352
          %s354 = smul.addr %s25, 8
          %s355 = smul.addr %s354, 64
          %s356 = scalar_lea.hbm %s1, %s355
          %s358 = sshll.u32 %s350, 4
          %s359 = int_to_ptr.vmem [resolvable:$true] %s358
          %361 = dma.hbm_to_vmem [thread:$0]  %s356, 512, %s359, %s347
        $region52: #{tpu_custom_call.1} parent=43 // pred_fallthru
          _
        // Predicated region
        $region53: #{tpu_custom_call.1} parent=43 // pred_check
          %p362 = pneg %p97
        $region54: #{tpu_custom_call.1} parent=43 // pred_check_branch
          %364 = sbr.rel (%p362) target = $region56
        $region55: #{tpu_custom_call.1} parent=43 // pred_region
          %p365 = scmp.lt.s32.totalorder %s25, 1
          %s366 = scalar_select %p365, %s25, 1
          %s367 = smul.addr %s366, 2
          %s368 = smul.addr %s367, 4
          %s369 = scalar_lea.vmem %s2, %s368
        $region56: #{tpu_custom_call.1} parent=43 // pred_fallthru
          _
      $region44: #{tpu_custom_call.1} parent=5 // pred_fallthru
        _
      %p370 = scmp.le.s32.totalorder 1, %s25
      %p371 = scmp.lt.s32.totalorder %s25, 3
      %p372 = pnand %p370, %p371
      %p373 = pneg %p372
      // Predicated region
      $region57: #{tpu_custom_call.1} parent=5 // pred_check
        _
      $region58: #{tpu_custom_call.1} parent=5 // pred_check_branch
        %375 = sbr.rel (%p372) target = $region60
      $region59: #{tpu_custom_call.1} parent=5 // pred_region
        %s376 = ssub.s32 %s25, 1
        %s377 = sand.u32 %s38, 1
        %s378 = scalar_lea.sflag [#allocation7], %s377
        %s379 = sand.u32 %s38, 1
        %s380 = smul.addr %s379, 16
        %s381 = scalar_lea.vmem [#allocation6], %s380
        // Predicated region
        $region61: #{tpu_custom_call.1} parent=59 // pred_check
          %p382 = pneg %p51
        $region62: #{tpu_custom_call.1} parent=59 // pred_check_branch
          %384 = sbr.rel (%p382) target = $region64
        $region63: #{tpu_custom_call.1} parent=59 // pred_region
          %385 = dma.done %s378, 256
        $region64: #{tpu_custom_call.1} parent=59 // pred_fallthru
          _
        %s386 = sand.u32 %s30, 1
        %s387 = scalar_lea.sflag [#allocation10], %s386
        %s388 = sand.u32 %s64, 1
        %s389 = smul.addr %s388, 32
        %s390 = scalar_lea.vmem [#allocation9], %s389
        // Predicated region
        $region65: #{tpu_custom_call.1} parent=59 // pred_check
          %p391 = pneg %p77
        $region66: #{tpu_custom_call.1} parent=59 // pred_check_branch
          %393 = sbr.rel (%p391) target = $region68
        $region67: #{tpu_custom_call.1} parent=59 // pred_region
          %394 = dma.done %s387, 512
        $region68: #{tpu_custom_call.1} parent=59 // pred_fallthru
          _
        // Predicated region
        $region69: #{tpu_custom_call.1} parent=59 // pred_check
          %p395 = pneg %p124
        $region70: #{tpu_custom_call.1} parent=59 // pred_check_branch
          %397 = sbr.rel (%p395) target = $region72
        $region71: #{tpu_custom_call.1} parent=59 // pred_region
          %398 = dma.done [#allocation10], 64
        $region72: #{tpu_custom_call.1} parent=59 // pred_fallthru
          _
        %s399 = sand.u32 %s38, 1
        %s400 = scalar_lea.sflag [#allocation7], %s399
        %s401 = sand.u32 %s38, 1
        %s402 = smul.addr %s401, 16
        %s403 = scalar_lea.vmem [#allocation6], %s402
        %p404 = pneg %p51
        %p405 = pneg %p48
        %s406 = sand.u32 %s30, 1
        %s407 = scalar_lea.sflag [#allocation10], %s406
        %s408 = sand.u32 %s64, 1
        %s409 = smul.addr %s408, 32
        %s410 = scalar_lea.vmem [#allocation9], %s409
        %p411 = pneg %p77
        %p412 = pneg %p74
        %p413 = scmp.lt.s32.totalorder %s30, 1
        %s414 = scalar_select %p413, %s30, 1
        %s415 = smul.addr %s414, 2
        %s416 = smul.addr %s415, 4
        %s417 = scalar_lea.vmem %s2, %s416
        %p418 = pneg %p103
        %p419 = pneg %p100
        %p420 = pneg %p124
        %p421 = pneg %p121
        %p422 = pneg %p145
        %p423 = pneg %p142
        %p424 = pneg %p166
        %p425 = pneg %p163
        %p426 = pneg %p187
        %p427 = pneg %p184
        %p428 = pneg %p208
        %p429 = pneg %p205
        %p430 = pneg %p229
        %p431 = pneg %p226
        %p432 = pneg %p250
        %p433 = pneg %p247
        %p434 = pneg %p276
        %p435 = pneg %p273
        %s436 = sand.u32 %s263, 1
        %s437 = scalar_lea.sflag [#allocation8], %s436
        %s438 = sand.u32 %s263, 1
        %s439 = smul.addr %s438, 64
        %s440 = scalar_lea.vmem [#allocation12], %s439
        %p441 = scmp.lt.s32.totalorder %s30, 1
        %s442 = scalar_select %p441, %s30, 1
        %s443 = smul.addr %s442, 2
        %s444 = smul.addr %s443, 4
        %s445 = scalar_lea.vmem %s2, %s444
        %v446 = vld [vmem:[%s381] sm:$0xff]
        %v447 = vld [vmem:[%s381 + $0x8] sm:$0xff]
        %v448 = vld [vmem:[%s390] sm:$0xff]
        %v449 = vld [vmem:[%s390 + $0x8] sm:$0xff]
        %v450 = vld [vmem:[%s390 + $0x10] sm:$0xff]
        %v451 = vld [vmem:[%s390 + $0x18] sm:$0xff]
        %v452 = vld [vmem:[#allocation11] sm:$0xf]
        %v453 = vld [vmem:[%s4] sm:$0xf]
        %455 = vset.pattern.permute.xlu0 0
        %456 = vperm.xlu0 %455, %v453
        %v457 = vpop.permute.xlu0 %456
        %vm459 = vcmask 64512
        %v461 = vsel %vm459, %v452, 0
        %463 = vmatprep.subr.mxu0 %v447
        %464 = vmatpush1.msra.mxu0 %v446
        %465 = vmatprep.subr.mxu0 0.0
        %466 = vmatpush1.msra.mxu0 0.0
        %467 = vmatprep.subr.mxu0 0.0
        %468 = vmatpush1.msra.mxu0 0.0
        %469 = vmatprep.subr.mxu0 0.0
        %470 = vmatpush1.msra.mxu0 0.0
        %471 = vmatprep.subr.mxu0 0.0
        %472 = vmatpush1.msra.mxu0 0.0
        %473 = vmatprep.subr.mxu0 0.0
        %474 = vmatpush1.msra.mxu0 0.0
        %475 = vmatprep.subr.mxu0 0.0
        %476 = vmatpush1.msra.mxu0 0.0
        %477 = vmatprep.subr.mxu0 0.0
        %478 = vmatpush1.msra.mxu0 0.0
        %479 = vmatprep.subr.mxu0 0.0
        %480 = vmatpush1.msra.mxu0 0.0
        %481 = vmatprep.subr.mxu0 0.0
        %482 = vmatpush1.msra.mxu0 0.0
        %483 = vmatprep.subr.mxu0 0.0
        %484 = vmatpush1.msra.mxu0 0.0
        %485 = vmatprep.subr.mxu0 0.0
        %486 = vmatpush1.msra.mxu0 0.0
        %487 = vmatprep.subr.mxu0 0.0
        %488 = vmatpush1.msra.mxu0 0.0
        %489 = vmatprep.subr.mxu0 0.0
        %490 = vmatpush1.msra.mxu0 0.0
        %491 = vmatprep.subr.mxu0 0.0
        %492 = vmatpush1.msra.mxu0 0.0
        %493 = vmatprep.subr.mxu0 0.0
        %494 = vmatpush1.msra.mxu0 0.0
        %495 = vmatprep.subr.mxu0 0.0
        %496 = vmatpush1.msra.mxu0 0.0
        %497 = vmatprep.subr.mxu0 0.0
        %498 = vmatpush1.msra.mxu0 0.0
        %499 = vmatprep.subr.mxu0 0.0
        %500 = vmatpush1.msra.mxu0 0.0
        %501 = vmatprep.subr.mxu0 0.0
        %502 = vmatpush1.msra.mxu0 0.0
        %503 = vmatprep.subr.mxu0 0.0
        %504 = vmatpush1.msra.mxu0 0.0
        %505 = vmatprep.subr.mxu0 0.0
        %506 = vmatpush1.msra.mxu0 0.0
        %507 = vmatprep.subr.mxu0 0.0
        %508 = vmatpush1.msra.mxu0 0.0
        %509 = vmatprep.subr.mxu0 0.0
        %510 = vmatpush1.msra.mxu0 0.0
        %511 = vmatprep.subr.mxu0 0.0
        %512 = vmatpush1.msra.mxu0 0.0
        %513 = vmatprep.subr.mxu0 0.0
        %514 = vmatpush1.msra.mxu0 0.0
        %515 = vmatprep.subr.mxu0 0.0
        %516 = vmatpush1.msra.mxu0 0.0
        %517 = vmatprep.subr.mxu0 0.0
        %518 = vmatpush1.msra.mxu0 0.0
        %519 = vmatprep.subr.mxu0 0.0
        %520 = vmatpush1.msra.mxu0 0.0
        %521 = vmatprep.subr.mxu0 0.0
        %522 = vmatpush1.msra.mxu0 0.0
        %523 = vmatprep.subr.mxu0 0.0
        %524 = vmatpush1.msra.mxu0 0.0
        %525 = vmatprep.subr.mxu0 0.0
        %526 = vmatpush1.msra.mxu0 0.0
        %527 = vmatprep.mubr.f32.mxu0 0.0
        %528 = vmatmul.mubr.f32.gmra.mrb[0].mxu0 %v461
        %v529 = vpop.f32.mrb[0].mxu0
        %v530 = vadd.f32 %v457, %v529
        %v531 = vpop.f32.mrb[0].mxu0
        %v532 = vadd.f32 %v457, %v531
        %533 = vdwg.mxu0
        %v534 = vld [vmem:[%s445] sm:$0xff]
        %v536 = vcombine.high %v534, %v534
        %538 = vst [vmem:[#allocation2] sm:$0xf] %v534
        %539 = vst [vmem:[#allocation2 + $0x8] sm:$0xf] %v536
        %v542 = vrot.slane %v530, 4
        %v543 = vrot.slane %v532, 4
        %546 = vst [vmem:[#allocation2] sm:$0xf0] %v542
        %547 = vst [vmem:[#allocation2 + $0x8] sm:$0xf0] %v543
        %v548 = vld [vmem:[%s5] sm:$0xff]
        %v549 = vld [vmem:[%s5 + $0x8] sm:$0xff]
        %v550 = vld [vmem:[#allocation2] sm:$0xff]
        %vm551 = vcmask 130048
        %v553 = vsel %vm551, %v550, 0
        %555 = vmatprep.subr.mxu0 0.0
        %556 = vmatpush1.msra.mxu0 %v548
        %557 = vmatprep.subr.mxu0 0.0
        %558 = vmatpush1.msra.mxu0 %v549
        %559 = vmatprep.subr.mxu0 0.0
        %560 = vmatpush1.msra.mxu0 0.0
        %561 = vmatprep.subr.mxu0 0.0
        %562 = vmatpush1.msra.mxu0 0.0
        %563 = vmatprep.subr.mxu0 0.0
        %564 = vmatpush1.msra.mxu0 0.0
        %565 = vmatprep.subr.mxu0 0.0
        %566 = vmatpush1.msra.mxu0 0.0
        %567 = vmatprep.subr.mxu0 0.0
        %568 = vmatpush1.msra.mxu0 0.0
        %569 = vmatprep.subr.mxu0 0.0
        %570 = vmatpush1.msra.mxu0 0.0
        %571 = vmatprep.subr.mxu0 0.0
        %572 = vmatpush1.msra.mxu0 0.0
        %573 = vmatprep.subr.mxu0 0.0
        %574 = vmatpush1.msra.mxu0 0.0
        %575 = vmatprep.subr.mxu0 0.0
        %576 = vmatpush1.msra.mxu0 0.0
        %577 = vmatprep.subr.mxu0 0.0
        %578 = vmatpush1.msra.mxu0 0.0
        %579 = vmatprep.subr.mxu0 0.0
        %580 = vmatpush1.msra.mxu0 0.0
        %581 = vmatprep.subr.mxu0 0.0
        %582 = vmatpush1.msra.mxu0 0.0
        %583 = vmatprep.subr.mxu0 0.0
        %584 = vmatpush1.msra.mxu0 0.0
        %585 = vmatprep.subr.mxu0 0.0
        %586 = vmatpush1.msra.mxu0 0.0
        %587 = vmatprep.subr.mxu0 0.0
        %588 = vmatpush1.msra.mxu0 0.0
        %589 = vmatprep.subr.mxu0 0.0
        %590 = vmatpush1.msra.mxu0 0.0
        %591 = vmatprep.subr.mxu0 0.0
        %592 = vmatpush1.msra.mxu0 0.0
        %593 = vmatprep.subr.mxu0 0.0
        %594 = vmatpush1.msra.mxu0 0.0
        %595 = vmatprep.subr.mxu0 0.0
        %596 = vmatpush1.msra.mxu0 0.0
        %597 = vmatprep.subr.mxu0 0.0
        %598 = vmatpush1.msra.mxu0 0.0
        %599 = vmatprep.subr.mxu0 0.0
        %600 = vmatpush1.msra.mxu0 0.0
        %601 = vmatprep.subr.mxu0 0.0
        %602 = vmatpush1.msra.mxu0 0.0
        %603 = vmatprep.subr.mxu0 0.0
        %604 = vmatpush1.msra.mxu0 0.0
        %605 = vmatprep.subr.mxu0 0.0
        %606 = vmatpush1.msra.mxu0 0.0
        %607 = vmatprep.subr.mxu0 0.0
        %608 = vmatpush1.msra.mxu0 0.0
        %609 = vmatprep.subr.mxu0 0.0
        %610 = vmatpush1.msra.mxu0 0.0
        %611 = vmatprep.subr.mxu0 0.0
        %612 = vmatpush1.msra.mxu0 0.0
        %613 = vmatprep.subr.mxu0 0.0
        %614 = vmatpush1.msra.mxu0 0.0
        %615 = vmatprep.subr.mxu0 0.0
        %616 = vmatpush1.msra.mxu0 0.0
        %617 = vmatprep.subr.mxu0 0.0
        %618 = vmatpush1.msra.mxu0 0.0
        %619 = vmatprep.mubr.f32.mxu0 0.0
        %620 = vmatmul.mubr.f32.gmra.mrb[0].mxu0 %v553
        %v621 = vpop.f32.mrb[0].mxu0
        %v622 = vadd.f32 0.0, %v621
        %v623 = vpop.f32.mrb[0].mxu0
        %624 = vdwg.mxu0
        %vm625 = vcmask 261120
        %626 = vst.msk [vmem:[#allocation3] sm:$0xff] %vm625, %v622
        %v627 = vld [vmem:[#allocation2] sm:$0xff]
        %629 = vrot.lane.b32.xlu0 %v627, 112
        %v630 = vpop.permute.xlu0 %629
        %v631 = vsel %vm551, %v630, 0
        %633 = vmatprep.subr.mxu0 0.0
        %634 = vmatpush1.msra.mxu0 %v548
        %635 = vmatprep.subr.mxu0 0.0
        %636 = vmatpush1.msra.mxu0 %v549
        %637 = vmatprep.subr.mxu0 0.0
        %638 = vmatpush1.msra.mxu0 0.0
        %639 = vmatprep.subr.mxu0 0.0
        %640 = vmatpush1.msra.mxu0 0.0
        %641 = vmatprep.subr.mxu0 0.0
        %642 = vmatpush1.msra.mxu0 0.0
        %643 = vmatprep.subr.mxu0 0.0
        %644 = vmatpush1.msra.mxu0 0.0
        %645 = vmatprep.subr.mxu0 0.0
        %646 = vmatpush1.msra.mxu0 0.0
        %647 = vmatprep.subr.mxu0 0.0
        %648 = vmatpush1.msra.mxu0 0.0
        %649 = vmatprep.subr.mxu0 0.0
        %650 = vmatpush1.msra.mxu0 0.0
        %651 = vmatprep.subr.mxu0 0.0
        %652 = vmatpush1.msra.mxu0 0.0
        %653 = vmatprep.subr.mxu0 0.0
        %654 = vmatpush1.msra.mxu0 0.0
        %655 = vmatprep.subr.mxu0 0.0
        %656 = vmatpush1.msra.mxu0 0.0
        %657 = vmatprep.subr.mxu0 0.0
        %658 = vmatpush1.msra.mxu0 0.0
        %659 = vmatprep.subr.mxu0 0.0
        %660 = vmatpush1.msra.mxu0 0.0
        %661 = vmatprep.subr.mxu0 0.0
        %662 = vmatpush1.msra.mxu0 0.0
        %663 = vmatprep.subr.mxu0 0.0
        %664 = vmatpush1.msra.mxu0 0.0
        %665 = vmatprep.subr.mxu0 0.0
        %666 = vmatpush1.msra.mxu0 0.0
        %667 = vmatprep.subr.mxu0 0.0
        %668 = vmatpush1.msra.mxu0 0.0
        %669 = vmatprep.subr.mxu0 0.0
        %670 = vmatpush1.msra.mxu0 0.0
        %671 = vmatprep.subr.mxu0 0.0
        %672 = vmatpush1.msra.mxu0 0.0
        %673 = vmatprep.subr.mxu0 0.0
        %674 = vmatpush1.msra.mxu0 0.0
        %675 = vmatprep.subr.mxu0 0.0
        %676 = vmatpush1.msra.mxu0 0.0
        %677 = vmatprep.subr.mxu0 0.0
        %678 = vmatpush1.msra.mxu0 0.0
        %679 = vmatprep.subr.mxu0 0.0
        %680 = vmatpush1.msra.mxu0 0.0
        %681 = vmatprep.subr.mxu0 0.0
        %682 = vmatpush1.msra.mxu0 0.0
        %683 = vmatprep.subr.mxu0 0.0
        %684 = vmatpush1.msra.mxu0 0.0
        %685 = vmatprep.subr.mxu0 0.0
        %686 = vmatpush1.msra.mxu0 0.0
        %687 = vmatprep.subr.mxu0 0.0
        %688 = vmatpush1.msra.mxu0 0.0
        %689 = vmatprep.subr.mxu0 0.0
        %690 = vmatpush1.msra.mxu0 0.0
        %691 = vmatprep.subr.mxu0 0.0
        %692 = vmatpush1.msra.mxu0 0.0
        %693 = vmatprep.subr.mxu0 0.0
        %694 = vmatpush1.msra.mxu0 0.0
        %695 = vmatprep.subr.mxu0 0.0
        %696 = vmatpush1.msra.mxu0 0.0
        %697 = vmatprep.mubr.f32.mxu0 0.0
        %698 = vmatmul.mubr.f32.gmra.mrb[0].mxu0 %v631
        %v699 = vpop.f32.mrb[0].mxu0
        %v700 = vadd.f32 0.0, %v699
        %v701 = vpop.f32.mrb[0].mxu0
        %702 = vdwg.mxu0
        %704 = vrot.lane.b32.xlu0 %v700, 32
        %v705 = vpop.permute.xlu0 %704
        %vm707 = vcmask 523520
        %708 = vst.msk [vmem:[#allocation3] sm:$0xff] %vm707, %v705
        %v709 = vld [vmem:[#allocation2] sm:$0xff]
        %711 = vrot.lane.b32.xlu0 %v709, 96
        %v712 = vpop.permute.xlu0 %711
        %v713 = vsel %vm551, %v712, 0
        %715 = vmatprep.subr.mxu0 0.0
        %716 = vmatpush1.msra.mxu0 %v548
        %717 = vmatprep.subr.mxu0 0.0
        %718 = vmatpush1.msra.mxu0 %v549
        %719 = vmatprep.subr.mxu0 0.0
        %720 = vmatpush1.msra.mxu0 0.0
        %721 = vmatprep.subr.mxu0 0.0
        %722 = vmatpush1.msra.mxu0 0.0
        %723 = vmatprep.subr.mxu0 0.0
        %724 = vmatpush1.msra.mxu0 0.0
        %725 = vmatprep.subr.mxu0 0.0
        %726 = vmatpush1.msra.mxu0 0.0
        %727 = vmatprep.subr.mxu0 0.0
        %728 = vmatpush1.msra.mxu0 0.0
        %729 = vmatprep.subr.mxu0 0.0
        %730 = vmatpush1.msra.mxu0 0.0
        %731 = vmatprep.subr.mxu0 0.0
        %732 = vmatpush1.msra.mxu0 0.0
        %733 = vmatprep.subr.mxu0 0.0
        %734 = vmatpush1.msra.mxu0 0.0
        %735 = vmatprep.subr.mxu0 0.0
        %736 = vmatpush1.msra.mxu0 0.0
        %737 = vmatprep.subr.mxu0 0.0
        %738 = vmatpush1.msra.mxu0 0.0
        %739 = vmatprep.subr.mxu0 0.0
        %740 = vmatpush1.msra.mxu0 0.0
        %741 = vmatprep.subr.mxu0 0.0
        %742 = vmatpush1.msra.mxu0 0.0
        %743 = vmatprep.subr.mxu0 0.0
        %744 = vmatpush1.msra.mxu0 0.0
        %745 = vmatprep.subr.mxu0 0.0
        %746 = vmatpush1.msra.mxu0 0.0
        %747 = vmatprep.subr.mxu0 0.0
        %748 = vmatpush1.msra.mxu0 0.0
        %749 = vmatprep.subr.mxu0 0.0
        %750 = vmatpush1.msra.mxu0 0.0
        %751 = vmatprep.subr.mxu0 0.0
        %752 = vmatpush1.msra.mxu0 0.0
        %753 = vmatprep.subr.mxu0 0.0
        %754 = vmatpush1.msra.mxu0 0.0
        %755 = vmatprep.subr.mxu0 0.0
        %756 = vmatpush1.msra.mxu0 0.0
        %757 = vmatprep.subr.mxu0 0.0
        %758 = vmatpush1.msra.mxu0 0.0
        %759 = vmatprep.subr.mxu0 0.0
        %760 = vmatpush1.msra.mxu0 0.0
        %761 = vmatprep.subr.mxu0 0.0
        %762 = vmatpush1.msra.mxu0 0.0
        %763 = vmatprep.subr.mxu0 0.0
        %764 = vmatpush1.msra.mxu0 0.0
        %765 = vmatprep.subr.mxu0 0.0
        %766 = vmatpush1.msra.mxu0 0.0
        %767 = vmatprep.subr.mxu0 0.0
        %768 = vmatpush1.msra.mxu0 0.0
        %769 = vmatprep.subr.mxu0 0.0
        %770 = vmatpush1.msra.mxu0 0.0
        %771 = vmatprep.subr.mxu0 0.0
        %772 = vmatpush1.msra.mxu0 0.0
        %773 = vmatprep.subr.mxu0 0.0
        %774 = vmatpush1.msra.mxu0 0.0
        %775 = vmatprep.subr.mxu0 0.0
        %776 = vmatpush1.msra.mxu0 0.0
        %777 = vmatprep.subr.mxu0 0.0
        %778 = vmatpush1.msra.mxu0 0.0
        %779 = vmatprep.mubr.f32.mxu0 0.0
        %780 = vmatmul.mubr.f32.gmra.mrb[0].mxu0 %v713
        %v781 = vpop.f32.mrb[0].mxu0
        %v782 = vadd.f32 0.0, %v781
        %v783 = vpop.f32.mrb[0].mxu0
        %784 = vdwg.mxu0
        %786 = vrot.lane.b32.xlu0 %v782, 64
        %v787 = vpop.permute.xlu0 %786
        %vm789 = vcmask 785920
        %790 = vst.msk [vmem:[#allocation3] sm:$0xff] %vm789, %v787
        %v791 = vld [vmem:[#allocation2] sm:$0xff]
        %793 = vrot.lane.b32.xlu0 %v791, 80
        %v794 = vpop.permute.xlu0 %793
        %v795 = vsel %vm551, %v794, 0
        %797 = vmatprep.subr.mxu0 0.0
        %798 = vmatpush1.msra.mxu0 %v548
        %799 = vmatprep.subr.mxu0 0.0
        %800 = vmatpush1.msra.mxu0 %v549
        %801 = vmatprep.subr.mxu0 0.0
        %802 = vmatpush1.msra.mxu0 0.0
        %803 = vmatprep.subr.mxu0 0.0
        %804 = vmatpush1.msra.mxu0 0.0
        %805 = vmatprep.subr.mxu0 0.0
        %806 = vmatpush1.msra.mxu0 0.0
        %807 = vmatprep.subr.mxu0 0.0
        %808 = vmatpush1.msra.mxu0 0.0
        %809 = vmatprep.subr.mxu0 0.0
        %810 = vmatpush1.msra.mxu0 0.0
        %811 = vmatprep.subr.mxu0 0.0
        %812 = vmatpush1.msra.mxu0 0.0
        %813 = vmatprep.subr.mxu0 0.0
        %814 = vmatpush1.msra.mxu0 0.0
        %815 = vmatprep.subr.mxu0 0.0
        %816 = vmatpush1.msra.mxu0 0.0
        %817 = vmatprep.subr.mxu0 0.0
        %818 = vmatpush1.msra.mxu0 0.0
        %819 = vmatprep.subr.mxu0 0.0
        %820 = vmatpush1.msra.mxu0 0.0
        %821 = vmatprep.subr.mxu0 0.0
        %822 = vmatpush1.msra.mxu0 0.0
        %823 = vmatprep.subr.mxu0 0.0
        %824 = vmatpush1.msra.mxu0 0.0
        %825 = vmatprep.subr.mxu0 0.0
        %826 = vmatpush1.msra.mxu0 0.0
        %827 = vmatprep.subr.mxu0 0.0
        %828 = vmatpush1.msra.mxu0 0.0
        %829 = vmatprep.subr.mxu0 0.0
        %830 = vmatpush1.msra.mxu0 0.0
        %831 = vmatprep.subr.mxu0 0.0
        %832 = vmatpush1.msra.mxu0 0.0
        %833 = vmatprep.subr.mxu0 0.0
        %834 = vmatpush1.msra.mxu0 0.0
        %835 = vmatprep.subr.mxu0 0.0
        %836 = vmatpush1.msra.mxu0 0.0
        %837 = vmatprep.subr.mxu0 0.0
        %838 = vmatpush1.msra.mxu0 0.0
        %839 = vmatprep.subr.mxu0 0.0
        %840 = vmatpush1.msra.mxu0 0.0
        %841 = vmatprep.subr.mxu0 0.0
        %842 = vmatpush1.msra.mxu0 0.0
        %843 = vmatprep.subr.mxu0 0.0
        %844 = vmatpush1.msra.mxu0 0.0
        %845 = vmatprep.subr.mxu0 0.0
        %846 = vmatpush1.msra.mxu0 0.0
        %847 = vmatprep.subr.mxu0 0.0
        %848 = vmatpush1.msra.mxu0 0.0
        %849 = vmatprep.subr.mxu0 0.0
        %850 = vmatpush1.msra.mxu0 0.0
        %851 = vmatprep.subr.mxu0 0.0
        %852 = vmatpush1.msra.mxu0 0.0
        %853 = vmatprep.subr.mxu0 0.0
        %854 = vmatpush1.msra.mxu0 0.0
        %855 = vmatprep.subr.mxu0 0.0
        %856 = vmatpush1.msra.mxu0 0.0
        %857 = vmatprep.subr.mxu0 0.0
        %858 = vmatpush1.msra.mxu0 0.0
        %859 = vmatprep.subr.mxu0 0.0
        %860 = vmatpush1.msra.mxu0 0.0
        %861 = vmatprep.mubr.f32.mxu0 0.0
        %862 = vmatmul.mubr.f32.gmra.mrb[0].mxu0 %v795
        %v863 = vpop.f32.mrb[0].mxu0
        %v864 = vadd.f32 0.0, %v863
        %v865 = vpop.f32.mrb[0].mxu0
        %866 = vdwg.mxu0
        %868 = vrot.lane.b32.xlu0 %v864, 96
        %v869 = vpop.permute.xlu0 %868
        %vm871 = vcmask 1048320
        %872 = vst.msk [vmem:[#allocation3] sm:$0xff] %vm871, %v869
        %v873 = vld [vmem:[#allocation2] sm:$0xff]
        %875 = vrot.lane.b32.xlu0 %v873, 64
        %v876 = vpop.permute.xlu0 %875
        %v877 = vsel %vm551, %v876, 0
        %879 = vmatprep.subr.mxu0 0.0
        %880 = vmatpush1.msra.mxu0 %v548
        %881 = vmatprep.subr.mxu0 0.0
        %882 = vmatpush1.msra.mxu0 %v549
        %883 = vmatprep.subr.mxu0 0.0
        %884 = vmatpush1.msra.mxu0 0.0
        %885 = vmatprep.subr.mxu0 0.0
        %886 = vmatpush1.msra.mxu0 0.0
        %887 = vmatprep.subr.mxu0 0.0
        %888 = vmatpush1.msra.mxu0 0.0
        %889 = vmatprep.subr.mxu0 0.0
        %890 = vmatpush1.msra.mxu0 0.0
        %891 = vmatprep.subr.mxu0 0.0
        %892 = vmatpush1.msra.mxu0 0.0
        %893 = vmatprep.subr.mxu0 0.0
        %894 = vmatpush1.msra.mxu0 0.0
        %895 = vmatprep.subr.mxu0 0.0
        %896 = vmatpush1.msra.mxu0 0.0
        %897 = vmatprep.subr.mxu0 0.0
        %898 = vmatpush1.msra.mxu0 0.0
        %899 = vmatprep.subr.mxu0 0.0
        %900 = vmatpush1.msra.mxu0 0.0
        %901 = vmatprep.subr.mxu0 0.0
        %902 = vmatpush1.msra.mxu0 0.0
        %903 = vmatprep.subr.mxu0 0.0
        %904 = vmatpush1.msra.mxu0 0.0
        %905 = vmatprep.subr.mxu0 0.0
        %906 = vmatpush1.msra.mxu0 0.0
        %907 = vmatprep.subr.mxu0 0.0
        %908 = vmatpush1.msra.mxu0 0.0
        %909 = vmatprep.subr.mxu0 0.0
        %910 = vmatpush1.msra.mxu0 0.0
        %911 = vmatprep.subr.mxu0 0.0
        %912 = vmatpush1.msra.mxu0 0.0
        %913 = vmatprep.subr.mxu0 0.0
        %914 = vmatpush1.msra.mxu0 0.0
        %915 = vmatprep.subr.mxu0 0.0
        %916 = vmatpush1.msra.mxu0 0.0
        %917 = vmatprep.subr.mxu0 0.0
        %918 = vmatpush1.msra.mxu0 0.0
        %919 = vmatprep.subr.mxu0 0.0
        %920 = vmatpush1.msra.mxu0 0.0
        %921 = vmatprep.subr.mxu0 0.0
        %922 = vmatpush1.msra.mxu0 0.0
        %923 = vmatprep.subr.mxu0 0.0
        %924 = vmatpush1.msra.mxu0 0.0
        %925 = vmatprep.subr.mxu0 0.0
        %926 = vmatpush1.msra.mxu0 0.0
        %927 = vmatprep.subr.mxu0 0.0
        %928 = vmatpush1.msra.mxu0 0.0
        %929 = vmatprep.subr.mxu0 0.0
        %930 = vmatpush1.msra.mxu0 0.0
        %931 = vmatprep.subr.mxu0 0.0
        %932 = vmatpush1.msra.mxu0 0.0
        %933 = vmatprep.subr.mxu0 0.0
        %934 = vmatpush1.msra.mxu0 0.0
        %935 = vmatprep.subr.mxu0 0.0
        %936 = vmatpush1.msra.mxu0 0.0
        %937 = vmatprep.subr.mxu0 0.0
        %938 = vmatpush1.msra.mxu0 0.0
        %939 = vmatprep.subr.mxu0 0.0
        %940 = vmatpush1.msra.mxu0 0.0
        %941 = vmatprep.subr.mxu0 0.0
        %942 = vmatpush1.msra.mxu0 0.0
        %943 = vmatprep.mubr.f32.mxu0 0.0
        %944 = vmatmul.mubr.f32.gmra.mrb[0].mxu0 %v877
        %v945 = vpop.f32.mrb[0].mxu0
        %v946 = vadd.f32 0.0, %v945
        %v947 = vpop.f32.mrb[0].mxu0
        %948 = vdwg.mxu0
        %949 = vst.msk [vmem:[#allocation3 + $0x8] sm:$0xff] %vm625, %v946
        %v950 = vld [vmem:[#allocation2] sm:$0xff]
        %952 = vrot.lane.b32.xlu0 %v950, 48
        %v953 = vpop.permute.xlu0 %952
        %v954 = vsel %vm551, %v953, 0
        %956 = vmatprep.subr.mxu0 0.0
        %957 = vmatpush1.msra.mxu0 %v548
        %958 = vmatprep.subr.mxu0 0.0
        %959 = vmatpush1.msra.mxu0 %v549
        %960 = vmatprep.subr.mxu0 0.0
        %961 = vmatpush1.msra.mxu0 0.0
        %962 = vmatprep.subr.mxu0 0.0
        %963 = vmatpush1.msra.mxu0 0.0
        %964 = vmatprep.subr.mxu0 0.0
        %965 = vmatpush1.msra.mxu0 0.0
        %966 = vmatprep.subr.mxu0 0.0
        %967 = vmatpush1.msra.mxu0 0.0
        %968 = vmatprep.subr.mxu0 0.0
        %969 = vmatpush1.msra.mxu0 0.0
        %970 = vmatprep.subr.mxu0 0.0
        %971 = vmatpush1.msra.mxu0 0.0
        %972 = vmatprep.subr.mxu0 0.0
        %973 = vmatpush1.msra.mxu0 0.0
        %974 = vmatprep.subr.mxu0 0.0
        %975 = vmatpush1.msra.mxu0 0.0
        %976 = vmatprep.subr.mxu0 0.0
        %977 = vmatpush1.msra.mxu0 0.0
        %978 = vmatprep.subr.mxu0 0.0
        %979 = vmatpush1.msra.mxu0 0.0
        %980 = vmatprep.subr.mxu0 0.0
        %981 = vmatpush1.msra.mxu0 0.0
        %982 = vmatprep.subr.mxu0 0.0
        %983 = vmatpush1.msra.mxu0 0.0
        %984 = vmatprep.subr.mxu0 0.0
        %985 = vmatpush1.msra.mxu0 0.0
        %986 = vmatprep.subr.mxu0 0.0
        %987 = vmatpush1.msra.mxu0 0.0
        %988 = vmatprep.subr.mxu0 0.0
        %989 = vmatpush1.msra.mxu0 0.0
        %990 = vmatprep.subr.mxu0 0.0
        %991 = vmatpush1.msra.mxu0 0.0
        %992 = vmatprep.subr.mxu0 0.0
        %993 = vmatpush1.msra.mxu0 0.0
        %994 = vmatprep.subr.mxu0 0.0
        %995 = vmatpush1.msra.mxu0 0.0
        %996 = vmatprep.subr.mxu0 0.0
        %997 = vmatpush1.msra.mxu0 0.0
        %998 = vmatprep.subr.mxu0 0.0
        %999 = vmatpush1.msra.mxu0 0.0
        %1000 = vmatprep.subr.mxu0 0.0
        %1001 = vmatpush1.msra.mxu0 0.0
        %1002 = vmatprep.subr.mxu0 0.0
        %1003 = vmatpush1.msra.mxu0 0.0
        %1004 = vmatprep.subr.mxu0 0.0
        %1005 = vmatpush1.msra.mxu0 0.0
        %1006 = vmatprep.subr.mxu0 0.0
        %1007 = vmatpush1.msra.mxu0 0.0
        %1008 = vmatprep.subr.mxu0 0.0
        %1009 = vmatpush1.msra.mxu0 0.0
        %1010 = vmatprep.subr.mxu0 0.0
        %1011 = vmatpush1.msra.mxu0 0.0
        %1012 = vmatprep.subr.mxu0 0.0
        %1013 = vmatpush1.msra.mxu0 0.0
        %1014 = vmatprep.subr.mxu0 0.0
        %1015 = vmatpush1.msra.mxu0 0.0
        %1016 = vmatprep.subr.mxu0 0.0
        %1017 = vmatpush1.msra.mxu0 0.0
        %1018 = vmatprep.subr.mxu0 0.0
        %1019 = vmatpush1.msra.mxu0 0.0
        %1020 = vmatprep.mubr.f32.mxu0 0.0
        %1021 = vmatmul.mubr.f32.gmra.mrb[0].mxu0 %v954
        %v1022 = vpop.f32.mrb[0].mxu0
        %v1023 = vadd.f32 0.0, %v1022
        %v1024 = vpop.f32.mrb[0].mxu0
        %1025 = vdwg.mxu0
        %1027 = vrot.lane.b32.xlu0 %v1023, 32
        %v1028 = vpop.permute.xlu0 %1027
        %1030 = vst.msk [vmem:[#allocation3 + $0x8] sm:$0xff] %vm707, %v1028
        %v1031 = vld [vmem:[#allocation2] sm:$0xff]
        %1033 = vrot.lane.b32.xlu0 %v1031, 32
        %v1034 = vpop.permute.xlu0 %1033
        %v1035 = vsel %vm551, %v1034, 0
        %1037 = vmatprep.subr.mxu0 0.0
        %1038 = vmatpush1.msra.mxu0 %v548
        %1039 = vmatprep.subr.mxu0 0.0
        %1040 = vmatpush1.msra.mxu0 %v549
        %1041 = vmatprep.subr.mxu0 0.0
        %1042 = vmatpush1.msra.mxu0 0.0
        %1043 = vmatprep.subr.mxu0 0.0
        %1044 = vmatpush1.msra.mxu0 0.0
        %1045 = vmatprep.subr.mxu0 0.0
        %1046 = vmatpush1.msra.mxu0 0.0
        %1047 = vmatprep.subr.mxu0 0.0
        %1048 = vmatpush1.msra.mxu0 0.0
        %1049 = vmatprep.subr.mxu0 0.0
        %1050 = vmatpush1.msra.mxu0 0.0
        %1051 = vmatprep.subr.mxu0 0.0
        %1052 = vmatpush1.msra.mxu0 0.0
        %1053 = vmatprep.subr.mxu0 0.0
        %1054 = vmatpush1.msra.mxu0 0.0
        %1055 = vmatprep.subr.mxu0 0.0
        %1056 = vmatpush1.msra.mxu0 0.0
        %1057 = vmatprep.subr.mxu0 0.0
        %1058 = vmatpush1.msra.mxu0 0.0
        %1059 = vmatprep.subr.mxu0 0.0
        %1060 = vmatpush1.msra.mxu0 0.0
        %1061 = vmatprep.subr.mxu0 0.0
        %1062 = vmatpush1.msra.mxu0 0.0
        %1063 = vmatprep.subr.mxu0 0.0
        %1064 = vmatpush1.msra.mxu0 0.0
        %1065 = vmatprep.subr.mxu0 0.0
        %1066 = vmatpush1.msra.mxu0 0.0
        %1067 = vmatprep.subr.mxu0 0.0
        %1068 = vmatpush1.msra.mxu0 0.0
        %1069 = vmatprep.subr.mxu0 0.0
        %1070 = vmatpush1.msra.mxu0 0.0
        %1071 = vmatprep.subr.mxu0 0.0
        %1072 = vmatpush1.msra.mxu0 0.0
        %1073 = vmatprep.subr.mxu0 0.0
        %1074 = vmatpush1.msra.mxu0 0.0
        %1075 = vmatprep.subr.mxu0 0.0
        %1076 = vmatpush1.msra.mxu0 0.0
        %1077 = vmatprep.subr.mxu0 0.0
        %1078 = vmatpush1.msra.mxu0 0.0
        %1079 = vmatprep.subr.mxu0 0.0
        %1080 = vmatpush1.msra.mxu0 0.0
        %1081 = vmatprep.subr.mxu0 0.0
        %1082 = vmatpush1.msra.mxu0 0.0
        %1083 = vmatprep.subr.mxu0 0.0
        %1084 = vmatpush1.msra.mxu0 0.0
        %1085 = vmatprep.subr.mxu0 0.0
        %1086 = vmatpush1.msra.mxu0 0.0
        %1087 = vmatprep.subr.mxu0 0.0
        %1088 = vmatpush1.msra.mxu0 0.0
        %1089 = vmatprep.subr.mxu0 0.0
        %1090 = vmatpush1.msra.mxu0 0.0
        %1091 = vmatprep.subr.mxu0 0.0
        %1092 = vmatpush1.msra.mxu0 0.0
        %1093 = vmatprep.subr.mxu0 0.0
        %1094 = vmatpush1.msra.mxu0 0.0
        %1095 = vmatprep.subr.mxu0 0.0
        %1096 = vmatpush1.msra.mxu0 0.0
        %1097 = vmatprep.subr.mxu0 0.0
        %1098 = vmatpush1.msra.mxu0 0.0
        %1099 = vmatprep.subr.mxu0 0.0
        %1100 = vmatpush1.msra.mxu0 0.0
        %1101 = vmatprep.mubr.f32.mxu0 0.0
        %1102 = vmatmul.mubr.f32.gmra.mrb[0].mxu0 %v1035
        %v1103 = vpop.f32.mrb[0].mxu0
        %v1104 = vadd.f32 0.0, %v1103
        %v1105 = vpop.f32.mrb[0].mxu0
        %1106 = vdwg.mxu0
        %1108 = vrot.lane.b32.xlu0 %v1104, 64
        %v1109 = vpop.permute.xlu0 %1108
        %1111 = vst.msk [vmem:[#allocation3 + $0x8] sm:$0xff] %vm789, %v1109
        %v1112 = vld [vmem:[#allocation2] sm:$0xff]
        %1114 = vrot.lane.b32.xlu0 %v1112, 16
        %v1115 = vpop.permute.xlu0 %1114
        %v1116 = vsel %vm551, %v1115, 0
        %1118 = vmatprep.subr.mxu0 0.0
        %1119 = vmatpush1.msra.mxu0 %v548
        %1120 = vmatprep.subr.mxu0 0.0
        %1121 = vmatpush1.msra.mxu0 %v549
        %1122 = vmatprep.subr.mxu0 0.0
        %1123 = vmatpush1.msra.mxu0 0.0
        %1124 = vmatprep.subr.mxu0 0.0
        %1125 = vmatpush1.msra.mxu0 0.0
        %1126 = vmatprep.subr.mxu0 0.0
        %1127 = vmatpush1.msra.mxu0 0.0
        %1128 = vmatprep.subr.mxu0 0.0
        %1129 = vmatpush1.msra.mxu0 0.0
        %1130 = vmatprep.subr.mxu0 0.0
        %1131 = vmatpush1.msra.mxu0 0.0
        %1132 = vmatprep.subr.mxu0 0.0
        %1133 = vmatpush1.msra.mxu0 0.0
        %1134 = vmatprep.subr.mxu0 0.0
        %1135 = vmatpush1.msra.mxu0 0.0
        %1136 = vmatprep.subr.mxu0 0.0
        %1137 = vmatpush1.msra.mxu0 0.0
        %1138 = vmatprep.subr.mxu0 0.0
        %1139 = vmatpush1.msra.mxu0 0.0
        %1140 = vmatprep.subr.mxu0 0.0
        %1141 = vmatpush1.msra.mxu0 0.0
        %1142 = vmatprep.subr.mxu0 0.0
        %1143 = vmatpush1.msra.mxu0 0.0
        %1144 = vmatprep.subr.mxu0 0.0
        %1145 = vmatpush1.msra.mxu0 0.0
        %1146 = vmatprep.subr.mxu0 0.0
        %1147 = vmatpush1.msra.mxu0 0.0
        %1148 = vmatprep.subr.mxu0 0.0
        %1149 = vmatpush1.msra.mxu0 0.0
        %1150 = vmatprep.subr.mxu0 0.0
        %1151 = vmatpush1.msra.mxu0 0.0
        %1152 = vmatprep.subr.mxu0 0.0
        %1153 = vmatpush1.msra.mxu0 0.0
        %1154 = vmatprep.subr.mxu0 0.0
        %1155 = vmatpush1.msra.mxu0 0.0
        %1156 = vmatprep.subr.mxu0 0.0
        %1157 = vmatpush1.msra.mxu0 0.0
        %1158 = vmatprep.subr.mxu0 0.0
        %1159 = vmatpush1.msra.mxu0 0.0
        %1160 = vmatprep.subr.mxu0 0.0
        %1161 = vmatpush1.msra.mxu0 0.0
        %1162 = vmatprep.subr.mxu0 0.0
        %1163 = vmatpush1.msra.mxu0 0.0
        %1164 = vmatprep.subr.mxu0 0.0
        %1165 = vmatpush1.msra.mxu0 0.0
        %1166 = vmatprep.subr.mxu0 0.0
        %1167 = vmatpush1.msra.mxu0 0.0
        %1168 = vmatprep.subr.mxu0 0.0
        %1169 = vmatpush1.msra.mxu0 0.0
        %1170 = vmatprep.subr.mxu0 0.0
        %1171 = vmatpush1.msra.mxu0 0.0
        %1172 = vmatprep.subr.mxu0 0.0
        %1173 = vmatpush1.msra.mxu0 0.0
        %1174 = vmatprep.subr.mxu0 0.0
        %1175 = vmatpush1.msra.mxu0 0.0
        %1176 = vmatprep.subr.mxu0 0.0
        %1177 = vmatpush1.msra.mxu0 0.0
        %1178 = vmatprep.subr.mxu0 0.0
        %1179 = vmatpush1.msra.mxu0 0.0
        %1180 = vmatprep.subr.mxu0 0.0
        %1181 = vmatpush1.msra.mxu0 0.0
        %1182 = vmatprep.mubr.f32.mxu0 0.0
        %1183 = vmatmul.mubr.f32.gmra.mrb[0].mxu0 %v1116
        %v1184 = vpop.f32.mrb[0].mxu0
        %v1185 = vadd.f32 0.0, %v1184
        %v1186 = vpop.f32.mrb[0].mxu0
        %1187 = vdwg.mxu0
        %1189 = vrot.lane.b32.xlu0 %v1185, 96
        %v1190 = vpop.permute.xlu0 %1189
        %1192 = vst.msk [vmem:[#allocation3 + $0x8] sm:$0xff] %vm871, %v1190
        %v1193 = vld [vmem:[#allocation2 + $0x8] sm:$0xff]
        %v1195 = vsel %vm551, %v1193, 0
        %1197 = vmatprep.subr.mxu0 0.0
        %1198 = vmatpush1.msra.mxu0 %v548
        %1199 = vmatprep.subr.mxu0 0.0
        %1200 = vmatpush1.msra.mxu0 %v549
        %1201 = vmatprep.subr.mxu0 0.0
        %1202 = vmatpush1.msra.mxu0 0.0
        %1203 = vmatprep.subr.mxu0 0.0
        %1204 = vmatpush1.msra.mxu0 0.0
        %1205 = vmatprep.subr.mxu0 0.0
        %1206 = vmatpush1.msra.mxu0 0.0
        %1207 = vmatprep.subr.mxu0 0.0
        %1208 = vmatpush1.msra.mxu0 0.0
        %1209 = vmatprep.subr.mxu0 0.0
        %1210 = vmatpush1.msra.mxu0 0.0
        %1211 = vmatprep.subr.mxu0 0.0
        %1212 = vmatpush1.msra.mxu0 0.0
        %1213 = vmatprep.subr.mxu0 0.0
        %1214 = vmatpush1.msra.mxu0 0.0
        %1215 = vmatprep.subr.mxu0 0.0
        %1216 = vmatpush1.msra.mxu0 0.0
        %1217 = vmatprep.subr.mxu0 0.0
        %1218 = vmatpush1.msra.mxu0 0.0
        %1219 = vmatprep.subr.mxu0 0.0
        %1220 = vmatpush1.msra.mxu0 0.0
        %1221 = vmatprep.subr.mxu0 0.0
        %1222 = vmatpush1.msra.mxu0 0.0
        %1223 = vmatprep.subr.mxu0 0.0
        %1224 = vmatpush1.msra.mxu0 0.0
        %1225 = vmatprep.subr.mxu0 0.0
        %1226 = vmatpush1.msra.mxu0 0.0
        %1227 = vmatprep.subr.mxu0 0.0
        %1228 = vmatpush1.msra.mxu0 0.0
        %1229 = vmatprep.subr.mxu0 0.0
        %1230 = vmatpush1.msra.mxu0 0.0
        %1231 = vmatprep.subr.mxu0 0.0
        %1232 = vmatpush1.msra.mxu0 0.0
        %1233 = vmatprep.subr.mxu0 0.0
        %1234 = vmatpush1.msra.mxu0 0.0
        %1235 = vmatprep.subr.mxu0 0.0
        %1236 = vmatpush1.msra.mxu0 0.0
        %1237 = vmatprep.subr.mxu0 0.0
        %1238 = vmatpush1.msra.mxu0 0.0
        %1239 = vmatprep.subr.mxu0 0.0
        %1240 = vmatpush1.msra.mxu0 0.0
        %1241 = vmatprep.subr.mxu0 0.0
        %1242 = vmatpush1.msra.mxu0 0.0
        %1243 = vmatprep.subr.mxu0 0.0
        %1244 = vmatpush1.msra.mxu0 0.0
        %1245 = vmatprep.subr.mxu0 0.0
        %1246 = vmatpush1.msra.mxu0 0.0
        %1247 = vmatprep.subr.mxu0 0.0
        %1248 = vmatpush1.msra.mxu0 0.0
        %1249 = vmatprep.subr.mxu0 0.0
        %1250 = vmatpush1.msra.mxu0 0.0
        %1251 = vmatprep.subr.mxu0 0.0
        %1252 = vmatpush1.msra.mxu0 0.0
        %1253 = vmatprep.subr.mxu0 0.0
        %1254 = vmatpush1.msra.mxu0 0.0
        %1255 = vmatprep.subr.mxu0 0.0
        %1256 = vmatpush1.msra.mxu0 0.0
        %1257 = vmatprep.subr.mxu0 0.0
        %1258 = vmatpush1.msra.mxu0 0.0
        %1259 = vmatprep.subr.mxu0 0.0
        %1260 = vmatpush1.msra.mxu0 0.0
        %1261 = vmatprep.mubr.f32.mxu0 0.0
        %1262 = vmatmul.mubr.f32.gmra.mrb[0].mxu0 %v1195
        %v1263 = vpop.f32.mrb[0].mxu0
        %v1264 = vadd.f32 0.0, %v1263
        %v1265 = vpop.f32.mrb[0].mxu0
        %1266 = vdwg.mxu0
        %1267 = vst.msk [vmem:[#allocation3 + $0x10] sm:$0xff] %vm625, %v1264
        %v1268 = vld [vmem:[#allocation2 + $0x8] sm:$0xff]
        %1270 = vrot.lane.b32.xlu0 %v1268, 112
        %v1271 = vpop.permute.xlu0 %1270
        %v1272 = vsel %vm551, %v1271, 0
        %1274 = vmatprep.subr.mxu0 0.0
        %1275 = vmatpush1.msra.mxu0 %v548
        %1276 = vmatprep.subr.mxu0 0.0
        %1277 = vmatpush1.msra.mxu0 %v549
        %1278 = vmatprep.subr.mxu0 0.0
        %1279 = vmatpush1.msra.mxu0 0.0
        %1280 = vmatprep.subr.mxu0 0.0
        %1281 = vmatpush1.msra.mxu0 0.0
        %1282 = vmatprep.subr.mxu0 0.0
        %1283 = vmatpush1.msra.mxu0 0.0
        %1284 = vmatprep.subr.mxu0 0.0
        %1285 = vmatpush1.msra.mxu0 0.0
        %1286 = vmatprep.subr.mxu0 0.0
        %1287 = vmatpush1.msra.mxu0 0.0
        %1288 = vmatprep.subr.mxu0 0.0
        %1289 = vmatpush1.msra.mxu0 0.0
        %1290 = vmatprep.subr.mxu0 0.0
        %1291 = vmatpush1.msra.mxu0 0.0
        %1292 = vmatprep.subr.mxu0 0.0
        %1293 = vmatpush1.msra.mxu0 0.0
        %1294 = vmatprep.subr.mxu0 0.0
        %1295 = vmatpush1.msra.mxu0 0.0
        %1296 = vmatprep.subr.mxu0 0.0
        %1297 = vmatpush1.msra.mxu0 0.0
        %1298 = vmatprep.subr.mxu0 0.0
        %1299 = vmatpush1.msra.mxu0 0.0
        %1300 = vmatprep.subr.mxu0 0.0
        %1301 = vmatpush1.msra.mxu0 0.0
        %1302 = vmatprep.subr.mxu0 0.0
        %1303 = vmatpush1.msra.mxu0 0.0
        %1304 = vmatprep.subr.mxu0 0.0
        %1305 = vmatpush1.msra.mxu0 0.0
        %1306 = vmatprep.subr.mxu0 0.0
        %1307 = vmatpush1.msra.mxu0 0.0
        %1308 = vmatprep.subr.mxu0 0.0
        %1309 = vmatpush1.msra.mxu0 0.0
        %1310 = vmatprep.subr.mxu0 0.0
        %1311 = vmatpush1.msra.mxu0 0.0
        %1312 = vmatprep.subr.mxu0 0.0
        %1313 = vmatpush1.msra.mxu0 0.0
        %1314 = vmatprep.subr.mxu0 0.0
        %1315 = vmatpush1.msra.mxu0 0.0
        %1316 = vmatprep.subr.mxu0 0.0
        %1317 = vmatpush1.msra.mxu0 0.0
        %1318 = vmatprep.subr.mxu0 0.0
        %1319 = vmatpush1.msra.mxu0 0.0
        %1320 = vmatprep.subr.mxu0 0.0
        %1321 = vmatpush1.msra.mxu0 0.0
        %1322 = vmatprep.subr.mxu0 0.0
        %1323 = vmatpush1.msra.mxu0 0.0
        %1324 = vmatprep.subr.mxu0 0.0
        %1325 = vmatpush1.msra.mxu0 0.0
        %1326 = vmatprep.subr.mxu0 0.0
        %1327 = vmatpush1.msra.mxu0 0.0
        %1328 = vmatprep.subr.mxu0 0.0
        %1329 = vmatpush1.msra.mxu0 0.0
        %1330 = vmatprep.subr.mxu0 0.0
        %1331 = vmatpush1.msra.mxu0 0.0
        %1332 = vmatprep.subr.mxu0 0.0
        %1333 = vmatpush1.msra.mxu0 0.0
        %1334 = vmatprep.subr.mxu0 0.0
        %1335 = vmatpush1.msra.mxu0 0.0
        %1336 = vmatprep.subr.mxu0 0.0
        %1337 = vmatpush1.msra.mxu0 0.0
        %1338 = vmatprep.mubr.f32.mxu0 0.0
        %1339 = vmatmul.mubr.f32.gmra.mrb[0].mxu0 %v1272
        %v1340 = vpop.f32.mrb[0].mxu0
        %v1341 = vadd.f32 0.0, %v1340
        %v1342 = vpop.f32.mrb[0].mxu0
        %1343 = vdwg.mxu0
        %1345 = vrot.lane.b32.xlu0 %v1341, 32
        %v1346 = vpop.permute.xlu0 %1345
        %1348 = vst.msk [vmem:[#allocation3 + $0x10] sm:$0xff] %vm707, %v1346
        %v1349 = vld [vmem:[#allocation2 + $0x8] sm:$0xff]
        %1351 = vrot.lane.b32.xlu0 %v1349, 96
        %v1352 = vpop.permute.xlu0 %1351
        %v1353 = vsel %vm551, %v1352, 0
        %1355 = vmatprep.subr.mxu0 0.0
        %1356 = vmatpush1.msra.mxu0 %v548
        %1357 = vmatprep.subr.mxu0 0.0
        %1358 = vmatpush1.msra.mxu0 %v549
        %1359 = vmatprep.subr.mxu0 0.0
        %1360 = vmatpush1.msra.mxu0 0.0
        %1361 = vmatprep.subr.mxu0 0.0
        %1362 = vmatpush1.msra.mxu0 0.0
        %1363 = vmatprep.subr.mxu0 0.0
        %1364 = vmatpush1.msra.mxu0 0.0
        %1365 = vmatprep.subr.mxu0 0.0
        %1366 = vmatpush1.msra.mxu0 0.0
        %1367 = vmatprep.subr.mxu0 0.0
        %1368 = vmatpush1.msra.mxu0 0.0
        %1369 = vmatprep.subr.mxu0 0.0
        %1370 = vmatpush1.msra.mxu0 0.0
        %1371 = vmatprep.subr.mxu0 0.0
        %1372 = vmatpush1.msra.mxu0 0.0
        %1373 = vmatprep.subr.mxu0 0.0
        %1374 = vmatpush1.msra.mxu0 0.0
        %1375 = vmatprep.subr.mxu0 0.0
        %1376 = vmatpush1.msra.mxu0 0.0
        %1377 = vmatprep.subr.mxu0 0.0
        %1378 = vmatpush1.msra.mxu0 0.0
        %1379 = vmatprep.subr.mxu0 0.0
        %1380 = vmatpush1.msra.mxu0 0.0
        %1381 = vmatprep.subr.mxu0 0.0
        %1382 = vmatpush1.msra.mxu0 0.0
        %1383 = vmatprep.subr.mxu0 0.0
        %1384 = vmatpush1.msra.mxu0 0.0
        %1385 = vmatprep.subr.mxu0 0.0
        %1386 = vmatpush1.msra.mxu0 0.0
        %1387 = vmatprep.subr.mxu0 0.0
        %1388 = vmatpush1.msra.mxu0 0.0
        %1389 = vmatprep.subr.mxu0 0.0
        %1390 = vmatpush1.msra.mxu0 0.0
        %1391 = vmatprep.subr.mxu0 0.0
        %1392 = vmatpush1.msra.mxu0 0.0
        %1393 = vmatprep.subr.mxu0 0.0
        %1394 = vmatpush1.msra.mxu0 0.0
        %1395 = vmatprep.subr.mxu0 0.0
        %1396 = vmatpush1.msra.mxu0 0.0
        %1397 = vmatprep.subr.mxu0 0.0
        %1398 = vmatpush1.msra.mxu0 0.0
        %1399 = vmatprep.subr.mxu0 0.0
        %1400 = vmatpush1.msra.mxu0 0.0
        %1401 = vmatprep.subr.mxu0 0.0
        %1402 = vmatpush1.msra.mxu0 0.0
        %1403 = vmatprep.subr.mxu0 0.0
        %1404 = vmatpush1.msra.mxu0 0.0
        %1405 = vmatprep.subr.mxu0 0.0
        %1406 = vmatpush1.msra.mxu0 0.0
        %1407 = vmatprep.subr.mxu0 0.0
        %1408 = vmatpush1.msra.mxu0 0.0
        %1409 = vmatprep.subr.mxu0 0.0
        %1410 = vmatpush1.msra.mxu0 0.0
        %1411 = vmatprep.subr.mxu0 0.0
        %1412 = vmatpush1.msra.mxu0 0.0
        %1413 = vmatprep.subr.mxu0 0.0
        %1414 = vmatpush1.msra.mxu0 0.0
        %1415 = vmatprep.subr.mxu0 0.0
        %1416 = vmatpush1.msra.mxu0 0.0
        %1417 = vmatprep.subr.mxu0 0.0
        %1418 = vmatpush1.msra.mxu0 0.0
        %1419 = vmatprep.mubr.f32.mxu0 0.0
        %1420 = vmatmul.mubr.f32.gmra.mrb[0].mxu0 %v1353
        %v1421 = vpop.f32.mrb[0].mxu0
        %v1422 = vadd.f32 0.0, %v1421
        %v1423 = vpop.f32.mrb[0].mxu0
        %1424 = vdwg.mxu0
        %1426 = vrot.lane.b32.xlu0 %v1422, 64
        %v1427 = vpop.permute.xlu0 %1426
        %1429 = vst.msk [vmem:[#allocation3 + $0x10] sm:$0xff] %vm789, %v1427
        %v1430 = vld [vmem:[#allocation2 + $0x8] sm:$0xff]
        %1432 = vrot.lane.b32.xlu0 %v1430, 80
        %v1433 = vpop.permute.xlu0 %1432
        %v1434 = vsel %vm551, %v1433, 0
        %1436 = vmatprep.subr.mxu0 0.0
        %1437 = vmatpush1.msra.mxu0 %v548
        %1438 = vmatprep.subr.mxu0 0.0
        %1439 = vmatpush1.msra.mxu0 %v549
        %1440 = vmatprep.subr.mxu0 0.0
        %1441 = vmatpush1.msra.mxu0 0.0
        %1442 = vmatprep.subr.mxu0 0.0
        %1443 = vmatpush1.msra.mxu0 0.0
        %1444 = vmatprep.subr.mxu0 0.0
        %1445 = vmatpush1.msra.mxu0 0.0
        %1446 = vmatprep.subr.mxu0 0.0
        %1447 = vmatpush1.msra.mxu0 0.0
        %1448 = vmatprep.subr.mxu0 0.0
        %1449 = vmatpush1.msra.mxu0 0.0
        %1450 = vmatprep.subr.mxu0 0.0
        %1451 = vmatpush1.msra.mxu0 0.0
        %1452 = vmatprep.subr.mxu0 0.0
        %1453 = vmatpush1.msra.mxu0 0.0
        %1454 = vmatprep.subr.mxu0 0.0
        %1455 = vmatpush1.msra.mxu0 0.0
        %1456 = vmatprep.subr.mxu0 0.0
        %1457 = vmatpush1.msra.mxu0 0.0
        %1458 = vmatprep.subr.mxu0 0.0
        %1459 = vmatpush1.msra.mxu0 0.0
        %1460 = vmatprep.subr.mxu0 0.0
        %1461 = vmatpush1.msra.mxu0 0.0
        %1462 = vmatprep.subr.mxu0 0.0
        %1463 = vmatpush1.msra.mxu0 0.0
        %1464 = vmatprep.subr.mxu0 0.0
        %1465 = vmatpush1.msra.mxu0 0.0
        %1466 = vmatprep.subr.mxu0 0.0
        %1467 = vmatpush1.msra.mxu0 0.0
        %1468 = vmatprep.subr.mxu0 0.0
        %1469 = vmatpush1.msra.mxu0 0.0
        %1470 = vmatprep.subr.mxu0 0.0
        %1471 = vmatpush1.msra.mxu0 0.0
        %1472 = vmatprep.subr.mxu0 0.0
        %1473 = vmatpush1.msra.mxu0 0.0
        %1474 = vmatprep.subr.mxu0 0.0
        %1475 = vmatpush1.msra.mxu0 0.0
        %1476 = vmatprep.subr.mxu0 0.0
        %1477 = vmatpush1.msra.mxu0 0.0
        %1478 = vmatprep.subr.mxu0 0.0
        %1479 = vmatpush1.msra.mxu0 0.0
        %1480 = vmatprep.subr.mxu0 0.0
        %1481 = vmatpush1.msra.mxu0 0.0
        %1482 = vmatprep.subr.mxu0 0.0
        %1483 = vmatpush1.msra.mxu0 0.0
        %1484 = vmatprep.subr.mxu0 0.0
        %1485 = vmatpush1.msra.mxu0 0.0
        %1486 = vmatprep.subr.mxu0 0.0
        %1487 = vmatpush1.msra.mxu0 0.0
        %1488 = vmatprep.subr.mxu0 0.0
        %1489 = vmatpush1.msra.mxu0 0.0
        %1490 = vmatprep.subr.mxu0 0.0
        %1491 = vmatpush1.msra.mxu0 0.0
        %1492 = vmatprep.subr.mxu0 0.0
        %1493 = vmatpush1.msra.mxu0 0.0
        %1494 = vmatprep.subr.mxu0 0.0
        %1495 = vmatpush1.msra.mxu0 0.0
        %1496 = vmatprep.subr.mxu0 0.0
        %1497 = vmatpush1.msra.mxu0 0.0
        %1498 = vmatprep.subr.mxu0 0.0
        %1499 = vmatpush1.msra.mxu0 0.0
        %1500 = vmatprep.mubr.f32.mxu0 0.0
        %1501 = vmatmul.mubr.f32.gmra.mrb[0].mxu0 %v1434
        %v1502 = vpop.f32.mrb[0].mxu0
        %v1503 = vadd.f32 0.0, %v1502
        %v1504 = vpop.f32.mrb[0].mxu0
        %1505 = vdwg.mxu0
        %1507 = vrot.lane.b32.xlu0 %v1503, 96
        %v1508 = vpop.permute.xlu0 %1507
        %1510 = vst.msk [vmem:[#allocation3 + $0x10] sm:$0xff] %vm871, %v1508
        %v1511 = vld [vmem:[#allocation2 + $0x8] sm:$0xff]
        %1513 = vrot.lane.b32.xlu0 %v1511, 64
        %v1514 = vpop.permute.xlu0 %1513
        %v1515 = vsel %vm551, %v1514, 0
        %1517 = vmatprep.subr.mxu0 0.0
        %1518 = vmatpush1.msra.mxu0 %v548
        %1519 = vmatprep.subr.mxu0 0.0
        %1520 = vmatpush1.msra.mxu0 %v549
        %1521 = vmatprep.subr.mxu0 0.0
        %1522 = vmatpush1.msra.mxu0 0.0
        %1523 = vmatprep.subr.mxu0 0.0
        %1524 = vmatpush1.msra.mxu0 0.0
        %1525 = vmatprep.subr.mxu0 0.0
        %1526 = vmatpush1.msra.mxu0 0.0
        %1527 = vmatprep.subr.mxu0 0.0
        %1528 = vmatpush1.msra.mxu0 0.0
        %1529 = vmatprep.subr.mxu0 0.0
        %1530 = vmatpush1.msra.mxu0 0.0
        %1531 = vmatprep.subr.mxu0 0.0
        %1532 = vmatpush1.msra.mxu0 0.0
        %1533 = vmatprep.subr.mxu0 0.0
        %1534 = vmatpush1.msra.mxu0 0.0
        %1535 = vmatprep.subr.mxu0 0.0
        %1536 = vmatpush1.msra.mxu0 0.0
        %1537 = vmatprep.subr.mxu0 0.0
        %1538 = vmatpush1.msra.mxu0 0.0
        %1539 = vmatprep.subr.mxu0 0.0
        %1540 = vmatpush1.msra.mxu0 0.0
        %1541 = vmatprep.subr.mxu0 0.0
        %1542 = vmatpush1.msra.mxu0 0.0
        %1543 = vmatprep.subr.mxu0 0.0
        %1544 = vmatpush1.msra.mxu0 0.0
        %1545 = vmatprep.subr.mxu0 0.0
        %1546 = vmatpush1.msra.mxu0 0.0
        %1547 = vmatprep.subr.mxu0 0.0
        %1548 = vmatpush1.msra.mxu0 0.0
        %1549 = vmatprep.subr.mxu0 0.0
        %1550 = vmatpush1.msra.mxu0 0.0
        %1551 = vmatprep.subr.mxu0 0.0
        %1552 = vmatpush1.msra.mxu0 0.0
        %1553 = vmatprep.subr.mxu0 0.0
        %1554 = vmatpush1.msra.mxu0 0.0
        %1555 = vmatprep.subr.mxu0 0.0
        %1556 = vmatpush1.msra.mxu0 0.0
        %1557 = vmatprep.subr.mxu0 0.0
        %1558 = vmatpush1.msra.mxu0 0.0
        %1559 = vmatprep.subr.mxu0 0.0
        %1560 = vmatpush1.msra.mxu0 0.0
        %1561 = vmatprep.subr.mxu0 0.0
        %1562 = vmatpush1.msra.mxu0 0.0
        %1563 = vmatprep.subr.mxu0 0.0
        %1564 = vmatpush1.msra.mxu0 0.0
        %1565 = vmatprep.subr.mxu0 0.0
        %1566 = vmatpush1.msra.mxu0 0.0
        %1567 = vmatprep.subr.mxu0 0.0
        %1568 = vmatpush1.msra.mxu0 0.0
        %1569 = vmatprep.subr.mxu0 0.0
        %1570 = vmatpush1.msra.mxu0 0.0
        %1571 = vmatprep.subr.mxu0 0.0
        %1572 = vmatpush1.msra.mxu0 0.0
        %1573 = vmatprep.subr.mxu0 0.0
        %1574 = vmatpush1.msra.mxu0 0.0
        %1575 = vmatprep.subr.mxu0 0.0
        %1576 = vmatpush1.msra.mxu0 0.0
        %1577 = vmatprep.subr.mxu0 0.0
        %1578 = vmatpush1.msra.mxu0 0.0
        %1579 = vmatprep.subr.mxu0 0.0
        %1580 = vmatpush1.msra.mxu0 0.0
        %1581 = vmatprep.mubr.f32.mxu0 0.0
        %1582 = vmatmul.mubr.f32.gmra.mrb[0].mxu0 %v1515
        %v1583 = vpop.f32.mrb[0].mxu0
        %v1584 = vadd.f32 0.0, %v1583
        %v1585 = vpop.f32.mrb[0].mxu0
        %1586 = vdwg.mxu0
        %1587 = vst.msk [vmem:[#allocation3 + $0x18] sm:$0xff] %vm625, %v1584
        %v1588 = vld [vmem:[#allocation2 + $0x8] sm:$0xff]
        %1590 = vrot.lane.b32.xlu0 %v1588, 48
        %v1591 = vpop.permute.xlu0 %1590
        %v1592 = vsel %vm551, %v1591, 0
        %1594 = vmatprep.subr.mxu0 0.0
        %1595 = vmatpush1.msra.mxu0 %v548
        %1596 = vmatprep.subr.mxu0 0.0
        %1597 = vmatpush1.msra.mxu0 %v549
        %1598 = vmatprep.subr.mxu0 0.0
        %1599 = vmatpush1.msra.mxu0 0.0
        %1600 = vmatprep.subr.mxu0 0.0
        %1601 = vmatpush1.msra.mxu0 0.0
        %1602 = vmatprep.subr.mxu0 0.0
        %1603 = vmatpush1.msra.mxu0 0.0
        %1604 = vmatprep.subr.mxu0 0.0
        %1605 = vmatpush1.msra.mxu0 0.0
        %1606 = vmatprep.subr.mxu0 0.0
        %1607 = vmatpush1.msra.mxu0 0.0
        %1608 = vmatprep.subr.mxu0 0.0
        %1609 = vmatpush1.msra.mxu0 0.0
        %1610 = vmatprep.subr.mxu0 0.0
        %1611 = vmatpush1.msra.mxu0 0.0
        %1612 = vmatprep.subr.mxu0 0.0
        %1613 = vmatpush1.msra.mxu0 0.0
        %1614 = vmatprep.subr.mxu0 0.0
        %1615 = vmatpush1.msra.mxu0 0.0
        %1616 = vmatprep.subr.mxu0 0.0
        %1617 = vmatpush1.msra.mxu0 0.0
        %1618 = vmatprep.subr.mxu0 0.0
        %1619 = vmatpush1.msra.mxu0 0.0
        %1620 = vmatprep.subr.mxu0 0.0
        %1621 = vmatpush1.msra.mxu0 0.0
        %1622 = vmatprep.subr.mxu0 0.0
        %1623 = vmatpush1.msra.mxu0 0.0
        %1624 = vmatprep.subr.mxu0 0.0
        %1625 = vmatpush1.msra.mxu0 0.0
        %1626 = vmatprep.subr.mxu0 0.0
        %1627 = vmatpush1.msra.mxu0 0.0
        %1628 = vmatprep.subr.mxu0 0.0
        %1629 = vmatpush1.msra.mxu0 0.0
        %1630 = vmatprep.subr.mxu0 0.0
        %1631 = vmatpush1.msra.mxu0 0.0
        %1632 = vmatprep.subr.mxu0 0.0
        %1633 = vmatpush1.msra.mxu0 0.0
        %1634 = vmatprep.subr.mxu0 0.0
        %1635 = vmatpush1.msra.mxu0 0.0
        %1636 = vmatprep.subr.mxu0 0.0
        %1637 = vmatpush1.msra.mxu0 0.0
        %1638 = vmatprep.subr.mxu0 0.0
        %1639 = vmatpush1.msra.mxu0 0.0
        %1640 = vmatprep.subr.mxu0 0.0
        %1641 = vmatpush1.msra.mxu0 0.0
        %1642 = vmatprep.subr.mxu0 0.0
        %1643 = vmatpush1.msra.mxu0 0.0
        %1644 = vmatprep.subr.mxu0 0.0
        %1645 = vmatpush1.msra.mxu0 0.0
        %1646 = vmatprep.subr.mxu0 0.0
        %1647 = vmatpush1.msra.mxu0 0.0
        %1648 = vmatprep.subr.mxu0 0.0
        %1649 = vmatpush1.msra.mxu0 0.0
        %1650 = vmatprep.subr.mxu0 0.0
        %1651 = vmatpush1.msra.mxu0 0.0
        %1652 = vmatprep.subr.mxu0 0.0
        %1653 = vmatpush1.msra.mxu0 0.0
        %1654 = vmatprep.subr.mxu0 0.0
        %1655 = vmatpush1.msra.mxu0 0.0
        %1656 = vmatprep.subr.mxu0 0.0
        %1657 = vmatpush1.msra.mxu0 0.0
        %1658 = vmatprep.mubr.f32.mxu0 0.0
        %1659 = vmatmul.mubr.f32.gmra.mrb[0].mxu0 %v1592
        %v1660 = vpop.f32.mrb[0].mxu0
        %v1661 = vadd.f32 0.0, %v1660
        %v1662 = vpop.f32.mrb[0].mxu0
        %1663 = vdwg.mxu0
        %1665 = vrot.lane.b32.xlu0 %v1661, 32
        %v1666 = vpop.permute.xlu0 %1665
        %1668 = vst.msk [vmem:[#allocation3 + $0x18] sm:$0xff] %vm707, %v1666
        %v1669 = vld [vmem:[#allocation2 + $0x8] sm:$0xff]
        %1671 = vrot.lane.b32.xlu0 %v1669, 32
        %v1672 = vpop.permute.xlu0 %1671
        %v1673 = vsel %vm551, %v1672, 0
        %1675 = vmatprep.subr.mxu0 0.0
        %1676 = vmatpush1.msra.mxu0 %v548
        %1677 = vmatprep.subr.mxu0 0.0
        %1678 = vmatpush1.msra.mxu0 %v549
        %1679 = vmatprep.subr.mxu0 0.0
        %1680 = vmatpush1.msra.mxu0 0.0
        %1681 = vmatprep.subr.mxu0 0.0
        %1682 = vmatpush1.msra.mxu0 0.0
        %1683 = vmatprep.subr.mxu0 0.0
        %1684 = vmatpush1.msra.mxu0 0.0
        %1685 = vmatprep.subr.mxu0 0.0
        %1686 = vmatpush1.msra.mxu0 0.0
        %1687 = vmatprep.subr.mxu0 0.0
        %1688 = vmatpush1.msra.mxu0 0.0
        %1689 = vmatprep.subr.mxu0 0.0
        %1690 = vmatpush1.msra.mxu0 0.0
        %1691 = vmatprep.subr.mxu0 0.0
        %1692 = vmatpush1.msra.mxu0 0.0
        %1693 = vmatprep.subr.mxu0 0.0
        %1694 = vmatpush1.msra.mxu0 0.0
        %1695 = vmatprep.subr.mxu0 0.0
        %1696 = vmatpush1.msra.mxu0 0.0
        %1697 = vmatprep.subr.mxu0 0.0
        %1698 = vmatpush1.msra.mxu0 0.0
        %1699 = vmatprep.subr.mxu0 0.0
        %1700 = vmatpush1.msra.mxu0 0.0
        %1701 = vmatprep.subr.mxu0 0.0
        %1702 = vmatpush1.msra.mxu0 0.0
        %1703 = vmatprep.subr.mxu0 0.0
        %1704 = vmatpush1.msra.mxu0 0.0
        %1705 = vmatprep.subr.mxu0 0.0
        %1706 = vmatpush1.msra.mxu0 0.0
        %1707 = vmatprep.subr.mxu0 0.0
        %1708 = vmatpush1.msra.mxu0 0.0
        %1709 = vmatprep.subr.mxu0 0.0
        %1710 = vmatpush1.msra.mxu0 0.0
        %1711 = vmatprep.subr.mxu0 0.0
        %1712 = vmatpush1.msra.mxu0 0.0
        %1713 = vmatprep.subr.mxu0 0.0
        %1714 = vmatpush1.msra.mxu0 0.0
        %1715 = vmatprep.subr.mxu0 0.0
        %1716 = vmatpush1.msra.mxu0 0.0
        %1717 = vmatprep.subr.mxu0 0.0
        %1718 = vmatpush1.msra.mxu0 0.0
        %1719 = vmatprep.subr.mxu0 0.0
        %1720 = vmatpush1.msra.mxu0 0.0
        %1721 = vmatprep.subr.mxu0 0.0
        %1722 = vmatpush1.msra.mxu0 0.0
        %1723 = vmatprep.subr.mxu0 0.0
        %1724 = vmatpush1.msra.mxu0 0.0
        %1725 = vmatprep.subr.mxu0 0.0
        %1726 = vmatpush1.msra.mxu0 0.0
        %1727 = vmatprep.subr.mxu0 0.0
        %1728 = vmatpush1.msra.mxu0 0.0
        %1729 = vmatprep.subr.mxu0 0.0
        %1730 = vmatpush1.msra.mxu0 0.0
        %1731 = vmatprep.subr.mxu0 0.0
        %1732 = vmatpush1.msra.mxu0 0.0
        %1733 = vmatprep.subr.mxu0 0.0
        %1734 = vmatpush1.msra.mxu0 0.0
        %1735 = vmatprep.subr.mxu0 0.0
        %1736 = vmatpush1.msra.mxu0 0.0
        %1737 = vmatprep.subr.mxu0 0.0
        %1738 = vmatpush1.msra.mxu0 0.0
        %1739 = vmatprep.mubr.f32.mxu0 0.0
        %1740 = vmatmul.mubr.f32.gmra.mrb[0].mxu0 %v1673
        %v1741 = vpop.f32.mrb[0].mxu0
        %v1742 = vadd.f32 0.0, %v1741
        %v1743 = vpop.f32.mrb[0].mxu0
        %1744 = vdwg.mxu0
        %1746 = vrot.lane.b32.xlu0 %v1742, 64
        %v1747 = vpop.permute.xlu0 %1746
        %1749 = vst.msk [vmem:[#allocation3 + $0x18] sm:$0xff] %vm789, %v1747
        %v1750 = vld [vmem:[#allocation2 + $0x8] sm:$0xff]
        %1752 = vrot.lane.b32.xlu0 %v1750, 16
        %v1753 = vpop.permute.xlu0 %1752
        %v1754 = vsel %vm551, %v1753, 0
        %1756 = vmatprep.subr.mxu0 0.0
        %1757 = vmatpush1.msra.mxu0 %v548
        %1758 = vmatprep.subr.mxu0 0.0
        %1759 = vmatpush1.msra.mxu0 %v549
        %1760 = vmatprep.subr.mxu0 0.0
        %1761 = vmatpush1.msra.mxu0 0.0
        %1762 = vmatprep.subr.mxu0 0.0
        %1763 = vmatpush1.msra.mxu0 0.0
        %1764 = vmatprep.subr.mxu0 0.0
        %1765 = vmatpush1.msra.mxu0 0.0
        %1766 = vmatprep.subr.mxu0 0.0
        %1767 = vmatpush1.msra.mxu0 0.0
        %1768 = vmatprep.subr.mxu0 0.0
        %1769 = vmatpush1.msra.mxu0 0.0
        %1770 = vmatprep.subr.mxu0 0.0
        %1771 = vmatpush1.msra.mxu0 0.0
        %1772 = vmatprep.subr.mxu0 0.0
        %1773 = vmatpush1.msra.mxu0 0.0
        %1774 = vmatprep.subr.mxu0 0.0
        %1775 = vmatpush1.msra.mxu0 0.0
        %1776 = vmatprep.subr.mxu0 0.0
        %1777 = vmatpush1.msra.mxu0 0.0
        %1778 = vmatprep.subr.mxu0 0.0
        %1779 = vmatpush1.msra.mxu0 0.0
        %1780 = vmatprep.subr.mxu0 0.0
        %1781 = vmatpush1.msra.mxu0 0.0
        %1782 = vmatprep.subr.mxu0 0.0
        %1783 = vmatpush1.msra.mxu0 0.0
        %1784 = vmatprep.subr.mxu0 0.0
        %1785 = vmatpush1.msra.mxu0 0.0
        %1786 = vmatprep.subr.mxu0 0.0
        %1787 = vmatpush1.msra.mxu0 0.0
        %1788 = vmatprep.subr.mxu0 0.0
        %1789 = vmatpush1.msra.mxu0 0.0
        %1790 = vmatprep.subr.mxu0 0.0
        %1791 = vmatpush1.msra.mxu0 0.0
        %1792 = vmatprep.subr.mxu0 0.0
        %1793 = vmatpush1.msra.mxu0 0.0
        %1794 = vmatprep.subr.mxu0 0.0
        %1795 = vmatpush1.msra.mxu0 0.0
        %1796 = vmatprep.subr.mxu0 0.0
        %1797 = vmatpush1.msra.mxu0 0.0
        %1798 = vmatprep.subr.mxu0 0.0
        %1799 = vmatpush1.msra.mxu0 0.0
        %1800 = vmatprep.subr.mxu0 0.0
        %1801 = vmatpush1.msra.mxu0 0.0
        %1802 = vmatprep.subr.mxu0 0.0
        %1803 = vmatpush1.msra.mxu0 0.0
        %1804 = vmatprep.subr.mxu0 0.0
        %1805 = vmatpush1.msra.mxu0 0.0
        %1806 = vmatprep.subr.mxu0 0.0
        %1807 = vmatpush1.msra.mxu0 0.0
        %1808 = vmatprep.subr.mxu0 0.0
        %1809 = vmatpush1.msra.mxu0 0.0
        %1810 = vmatprep.subr.mxu0 0.0
        %1811 = vmatpush1.msra.mxu0 0.0
        %1812 = vmatprep.subr.mxu0 0.0
        %1813 = vmatpush1.msra.mxu0 0.0
        %1814 = vmatprep.subr.mxu0 0.0
        %1815 = vmatpush1.msra.mxu0 0.0
        %1816 = vmatprep.subr.mxu0 0.0
        %1817 = vmatpush1.msra.mxu0 0.0
        %1818 = vmatprep.subr.mxu0 0.0
        %1819 = vmatpush1.msra.mxu0 0.0
        %1820 = vmatprep.mubr.f32.mxu0 0.0
        %1821 = vmatmul.mubr.f32.gmra.mrb[0].mxu0 %v1754
        %v1822 = vpop.f32.mrb[0].mxu0
        %v1823 = vadd.f32 0.0, %v1822
        %v1824 = vpop.f32.mrb[0].mxu0
        %1825 = vdwg.mxu0
        %1827 = vrot.lane.b32.xlu0 %v1823, 96
        %v1828 = vpop.permute.xlu0 %1827
        %1830 = vst.msk [vmem:[#allocation3 + $0x18] sm:$0xff] %vm871, %v1828
        %v1831 = vld [vmem:[#allocation3] sm:$0xff]
        %v1832 = vmul.f32 %v1831, 0.0
        %1834 = vrot.lane.b32.xlu0 %v1832, 96
        %v1835 = vpop.permute.xlu0 %1834
        %v1837 = vadd.f32 %v1831, %v1835
        %1838 = vst.msk [vmem:[#allocation4] sm:$0xff] %vm625, %v1837
        %v1839 = vld [vmem:[#allocation3] sm:$0xff]
        %v1840 = vmul.f32 %v1839, 0.516129
        %v1841 = vmul.f32 %v1839, 0.48387095
        %1843 = vrot.lane.b32.xlu0 %v1841, 96
        %v1844 = vpop.permute.xlu0 %1843
        %v1846 = vadd.f32 %v1840, %v1844
        %1848 = vrot.lane.b32.xlu0 %v1846, 32
        %v1849 = vpop.permute.xlu0 %1848
        %1851 = vst.msk [vmem:[#allocation4] sm:$0xff] %vm707, %v1849
        %v1852 = vld [vmem:[#allocation3] sm:$0xff]
        %v1853 = vmul.f32 %v1852, 0.032258064
        %v1854 = vmul.f32 %v1852, 0.9677419
        %1856 = vrot.lane.b32.xlu0 %v1854, 96
        %v1857 = vpop.permute.xlu0 %1856
        %v1859 = vadd.f32 %v1853, %v1857
        %1861 = vrot.lane.b32.xlu0 %v1859, 64
        %v1862 = vpop.permute.xlu0 %1861
        %1864 = vst.msk [vmem:[#allocation4] sm:$0xff] %vm789, %v1862
        %v1865 = vld [vmem:[#allocation3] sm:$0xff]
        %v1866 = vmul.f32 %v1865, 0.5483871
        %v1867 = vmul.f32 %v1865, 0.4516129
        %1869 = vrot.lane.b32.xlu0 %v1867, 96
        %v1870 = vpop.permute.xlu0 %1869
        %v1872 = vadd.f32 %v1866, %v1870
        %1874 = vrot.lane.b32.xlu0 %v1872, 64
        %v1875 = vpop.permute.xlu0 %1874
        %1877 = vst.msk [vmem:[#allocation4] sm:$0xff] %vm871, %v1875
        %v1878 = vld [vmem:[#allocation3] sm:$0xff]
        %v1879 = vmul.f32 %v1878, 0.06451613
        %v1880 = vmul.f32 %v1878, 0.9354839
        %1882 = vrot.lane.b32.xlu0 %v1880, 96
        %v1883 = vpop.permute.xlu0 %1882
        %v1885 = vadd.f32 %v1879, %v1883
        %1887 = vrot.lane.b32.xlu0 %v1885, 96
        %v1888 = vpop.permute.xlu0 %1887
        %1890 = vst.msk [vmem:[#allocation4 + $0x8] sm:$0xff] %vm625, %v1888
        %v1891 = vld [vmem:[#allocation3] sm:$0xff]
        %v1892 = vmul.f32 %v1891, 0.58064514
        %v1893 = vmul.f32 %v1891, 0.41935483
        %1895 = vrot.lane.b32.xlu0 %v1893, 96
        %v1896 = vpop.permute.xlu0 %1895
        %v1898 = vadd.f32 %v1892, %v1896
        %1900 = vrot.lane.b32.xlu0 %v1898, 96
        %v1901 = vpop.permute.xlu0 %1900
        %1903 = vst.msk [vmem:[#allocation4 + $0x8] sm:$0xff] %vm707, %v1901
        %v1904 = vld [vmem:[#allocation3] sm:$0xff]
        %v1905 = vmul.f32 %v1904, 0.09677419
        %v1906 = vmul.f32 %v1904, 0.9032258
        %1908 = vrot.lane.b32.xlu0 %v1906, 96
        %v1909 = vpop.permute.xlu0 %1908
        %v1911 = vadd.f32 %v1905, %v1909
        %1912 = vst.msk [vmem:[#allocation4 + $0x8] sm:$0xff] %vm789, %v1911
        %v1913 = vld [vmem:[#allocation3] sm:$0xff]
        %v1914 = vld [vmem:[#allocation3 + $0x8] sm:$0xff]
        %v1915 = vmul.f32 %v1913, 0.61290324
        %v1916 = vmul.f32 %v1914, 0.38709676
        %1918 = vrot.lane.b32.xlu0 %v1916, 96
        %v1919 = vpop.permute.xlu0 %1918
        %v1921 = vadd.f32 %v1915, %v1919
        %1922 = vst.msk [vmem:[#allocation4 + $0x8] sm:$0xff] %vm871, %v1921
        %v1923 = vld [vmem:[#allocation3] sm:$0xff]
        %v1924 = vld [vmem:[#allocation3 + $0x8] sm:$0xff]
        %v1925 = vmul.f32 %v1923, 0.12903225
        %v1926 = vmul.f32 %v1924, 0.87096775
        %1928 = vrot.lane.b32.xlu0 %v1926, 96
        %v1929 = vpop.permute.xlu0 %1928
        %v1931 = vadd.f32 %v1925, %v1929
        %1933 = vrot.lane.b32.xlu0 %v1931, 32
        %v1934 = vpop.permute.xlu0 %1933
        %1936 = vst.msk [vmem:[#allocation4 + $0x10] sm:$0xff] %vm625, %v1934
        %v1937 = vld [vmem:[#allocation3 + $0x8] sm:$0xff]
        %v1938 = vmul.f32 %v1937, 0.6451613
        %v1939 = vmul.f32 %v1937, 0.3548387
        %1941 = vrot.lane.b32.xlu0 %v1939, 96
        %v1942 = vpop.permute.xlu0 %1941
        %v1944 = vadd.f32 %v1938, %v1942
        %1946 = vrot.lane.b32.xlu0 %v1944, 32
        %v1947 = vpop.permute.xlu0 %1946
        %1949 = vst.msk [vmem:[#allocation4 + $0x10] sm:$0xff] %vm707, %v1947
        %v1950 = vld [vmem:[#allocation3 + $0x8] sm:$0xff]
        %v1951 = vmul.f32 %v1950, 0.16129032
        %v1952 = vmul.f32 %v1950, 0.83870965
        %1954 = vrot.lane.b32.xlu0 %v1952, 96
        %v1955 = vpop.permute.xlu0 %1954
        %v1957 = vadd.f32 %v1951, %v1955
        %1959 = vrot.lane.b32.xlu0 %v1957, 64
        %v1960 = vpop.permute.xlu0 %1959
        %1962 = vst.msk [vmem:[#allocation4 + $0x10] sm:$0xff] %vm789, %v1960
        %v1963 = vld [vmem:[#allocation3 + $0x8] sm:$0xff]
        %v1964 = vmul.f32 %v1963, 0.67741936
        %v1965 = vmul.f32 %v1963, 0.32258064
        %1967 = vrot.lane.b32.xlu0 %v1965, 96
        %v1968 = vpop.permute.xlu0 %1967
        %v1970 = vadd.f32 %v1964, %v1968
        %1972 = vrot.lane.b32.xlu0 %v1970, 64
        %v1973 = vpop.permute.xlu0 %1972
        %1975 = vst.msk [vmem:[#allocation4 + $0x10] sm:$0xff] %vm871, %v1973
        %v1976 = vld [vmem:[#allocation3 + $0x8] sm:$0xff]
        %v1977 = vmul.f32 %v1976, 0.19354838
        %v1978 = vmul.f32 %v1976, 0.8064516
        %1980 = vrot.lane.b32.xlu0 %v1978, 96
        %v1981 = vpop.permute.xlu0 %1980
        %v1983 = vadd.f32 %v1977, %v1981
        %1985 = vrot.lane.b32.xlu0 %v1983, 96
        %v1986 = vpop.permute.xlu0 %1985
        %1988 = vst.msk [vmem:[#allocation4 + $0x18] sm:$0xff] %vm625, %v1986
        %v1989 = vld [vmem:[#allocation3 + $0x8] sm:$0xff]
        %v1990 = vmul.f32 %v1989, 0.7096774
        %v1991 = vmul.f32 %v1989, 0.29032257
        %1993 = vrot.lane.b32.xlu0 %v1991, 96
        %v1994 = vpop.permute.xlu0 %1993
        %v1996 = vadd.f32 %v1990, %v1994
        %1998 = vrot.lane.b32.xlu0 %v1996, 96
        %v1999 = vpop.permute.xlu0 %1998
        %2001 = vst.msk [vmem:[#allocation4 + $0x18] sm:$0xff] %vm707, %v1999
        %v2002 = vld [vmem:[#allocation3 + $0x8] sm:$0xff]
        %v2003 = vmul.f32 %v2002, 0.22580644
        %v2004 = vmul.f32 %v2002, 0.7741935
        %2006 = vrot.lane.b32.xlu0 %v2004, 96
        %v2007 = vpop.permute.xlu0 %2006
        %v2009 = vadd.f32 %v2003, %v2007
        %2010 = vst.msk [vmem:[#allocation4 + $0x18] sm:$0xff] %vm789, %v2009
        %v2011 = vld [vmem:[#allocation3 + $0x8] sm:$0xff]
        %v2012 = vld [vmem:[#allocation3 + $0x10] sm:$0xff]
        %v2013 = vmul.f32 %v2011, 0.7419355
        %v2014 = vmul.f32 %v2012, 0.2580645
        %2016 = vrot.lane.b32.xlu0 %v2014, 96
        %v2017 = vpop.permute.xlu0 %2016
        %v2019 = vadd.f32 %v2013, %v2017
        %2020 = vst.msk [vmem:[#allocation4 + $0x18] sm:$0xff] %vm871, %v2019
        %v2021 = vld [vmem:[#allocation3 + $0x8] sm:$0xff]
        %v2022 = vld [vmem:[#allocation3 + $0x10] sm:$0xff]
        %v2023 = vmul.f32 %v2021, 0.2580645
        %v2024 = vmul.f32 %v2022, 0.7419355
        %2026 = vrot.lane.b32.xlu0 %v2024, 96
        %v2027 = vpop.permute.xlu0 %2026
        %v2029 = vadd.f32 %v2023, %v2027
        %2031 = vrot.lane.b32.xlu0 %v2029, 32
        %v2032 = vpop.permute.xlu0 %2031
        %2034 = vst.msk [vmem:[#allocation4 + $0x20] sm:$0xff] %vm625, %v2032
        %v2035 = vld [vmem:[#allocation3 + $0x10] sm:$0xff]
        %v2036 = vmul.f32 %v2035, 0.7741935
        %v2037 = vmul.f32 %v2035, 0.22580644
        %2039 = vrot.lane.b32.xlu0 %v2037, 96
        %v2040 = vpop.permute.xlu0 %2039
        %v2042 = vadd.f32 %v2036, %v2040
        %2044 = vrot.lane.b32.xlu0 %v2042, 32
        %v2045 = vpop.permute.xlu0 %2044
        %2047 = vst.msk [vmem:[#allocation4 + $0x20] sm:$0xff] %vm707, %v2045
        %v2048 = vld [vmem:[#allocation3 + $0x10] sm:$0xff]
        %v2049 = vmul.f32 %v2048, 0.29032257
        %v2050 = vmul.f32 %v2048, 0.7096774
        %2052 = vrot.lane.b32.xlu0 %v2050, 96
        %v2053 = vpop.permute.xlu0 %2052
        %v2055 = vadd.f32 %v2049, %v2053
        %2057 = vrot.lane.b32.xlu0 %v2055, 64
        %v2058 = vpop.permute.xlu0 %2057
        %2060 = vst.msk [vmem:[#allocation4 + $0x20] sm:$0xff] %vm789, %v2058
        %v2061 = vld [vmem:[#allocation3 + $0x10] sm:$0xff]
        %v2062 = vmul.f32 %v2061, 0.8064516
        %v2063 = vmul.f32 %v2061, 0.19354838
        %2065 = vrot.lane.b32.xlu0 %v2063, 96
        %v2066 = vpop.permute.xlu0 %2065
        %v2068 = vadd.f32 %v2062, %v2066
        %2070 = vrot.lane.b32.xlu0 %v2068, 64
        %v2071 = vpop.permute.xlu0 %2070
        %2073 = vst.msk [vmem:[#allocation4 + $0x20] sm:$0xff] %vm871, %v2071
        %v2074 = vld [vmem:[#allocation3 + $0x10] sm:$0xff]
        %v2075 = vmul.f32 %v2074, 0.32258064
        %v2076 = vmul.f32 %v2074, 0.67741936
        %2078 = vrot.lane.b32.xlu0 %v2076, 96
        %v2079 = vpop.permute.xlu0 %2078
        %v2081 = vadd.f32 %v2075, %v2079
        %2083 = vrot.lane.b32.xlu0 %v2081, 96
        %v2084 = vpop.permute.xlu0 %2083
        %2086 = vst.msk [vmem:[#allocation4 + $0x28] sm:$0xff] %vm625, %v2084
        %v2087 = vld [vmem:[#allocation3 + $0x10] sm:$0xff]
        %v2088 = vmul.f32 %v2087, 0.83870965
        %v2089 = vmul.f32 %v2087, 0.16129032
        %2091 = vrot.lane.b32.xlu0 %v2089, 96
        %v2092 = vpop.permute.xlu0 %2091
        %v2094 = vadd.f32 %v2088, %v2092
        %2096 = vrot.lane.b32.xlu0 %v2094, 96
        %v2097 = vpop.permute.xlu0 %2096
        %2099 = vst.msk [vmem:[#allocation4 + $0x28] sm:$0xff] %vm707, %v2097
        %v2100 = vld [vmem:[#allocation3 + $0x10] sm:$0xff]
        %v2101 = vmul.f32 %v2100, 0.3548387
        %v2102 = vmul.f32 %v2100, 0.6451613
        %2104 = vrot.lane.b32.xlu0 %v2102, 96
        %v2105 = vpop.permute.xlu0 %2104
        %v2107 = vadd.f32 %v2101, %v2105
        %2108 = vst.msk [vmem:[#allocation4 + $0x28] sm:$0xff] %vm789, %v2107
        %v2109 = vld [vmem:[#allocation3 + $0x10] sm:$0xff]
        %v2110 = vld [vmem:[#allocation3 + $0x18] sm:$0xff]
        %v2111 = vmul.f32 %v2109, 0.87096775
        %v2112 = vmul.f32 %v2110, 0.12903225
        %2114 = vrot.lane.b32.xlu0 %v2112, 96
        %v2115 = vpop.permute.xlu0 %2114
        %v2117 = vadd.f32 %v2111, %v2115
        %2118 = vst.msk [vmem:[#allocation4 + $0x28] sm:$0xff] %vm871, %v2117
        %v2119 = vld [vmem:[#allocation3 + $0x10] sm:$0xff]
        %v2120 = vld [vmem:[#allocation3 + $0x18] sm:$0xff]
        %v2121 = vmul.f32 %v2119, 0.38709676
        %v2122 = vmul.f32 %v2120, 0.61290324
        %2124 = vrot.lane.b32.xlu0 %v2122, 96
        %v2125 = vpop.permute.xlu0 %2124
        %v2127 = vadd.f32 %v2121, %v2125
        %2129 = vrot.lane.b32.xlu0 %v2127, 32
        %v2130 = vpop.permute.xlu0 %2129
        %2132 = vst.msk [vmem:[#allocation4 + $0x30] sm:$0xff] %vm625, %v2130
        %v2133 = vld [vmem:[#allocation3 + $0x18] sm:$0xff]
        %v2134 = vmul.f32 %v2133, 0.9032258
        %v2135 = vmul.f32 %v2133, 0.09677419
        %2137 = vrot.lane.b32.xlu0 %v2135, 96
        %v2138 = vpop.permute.xlu0 %2137
        %v2140 = vadd.f32 %v2134, %v2138
        %2142 = vrot.lane.b32.xlu0 %v2140, 32
        %v2143 = vpop.permute.xlu0 %2142
        %2145 = vst.msk [vmem:[#allocation4 + $0x30] sm:$0xff] %vm707, %v2143
        %v2146 = vld [vmem:[#allocation3 + $0x18] sm:$0xff]
        %v2147 = vmul.f32 %v2146, 0.41935483
        %v2148 = vmul.f32 %v2146, 0.58064514
        %2150 = vrot.lane.b32.xlu0 %v2148, 96
        %v2151 = vpop.permute.xlu0 %2150
        %v2153 = vadd.f32 %v2147, %v2151
        %2155 = vrot.lane.b32.xlu0 %v2153, 64
        %v2156 = vpop.permute.xlu0 %2155
        %2158 = vst.msk [vmem:[#allocation4 + $0x30] sm:$0xff] %vm789, %v2156
        %v2159 = vld [vmem:[#allocation3 + $0x18] sm:$0xff]
        %v2160 = vmul.f32 %v2159, 0.9354839
        %v2161 = vmul.f32 %v2159, 0.06451613
        %2163 = vrot.lane.b32.xlu0 %v2161, 96
        %v2164 = vpop.permute.xlu0 %2163
        %v2166 = vadd.f32 %v2160, %v2164
        %2168 = vrot.lane.b32.xlu0 %v2166, 64
        %v2169 = vpop.permute.xlu0 %2168
        %2171 = vst.msk [vmem:[#allocation4 + $0x30] sm:$0xff] %vm871, %v2169
        %v2172 = vld [vmem:[#allocation3 + $0x18] sm:$0xff]
        %v2173 = vmul.f32 %v2172, 0.4516129
        %v2174 = vmul.f32 %v2172, 0.5483871
        %2176 = vrot.lane.b32.xlu0 %v2174, 96
        %v2177 = vpop.permute.xlu0 %2176
        %v2179 = vadd.f32 %v2173, %v2177
        %2181 = vrot.lane.b32.xlu0 %v2179, 96
        %v2182 = vpop.permute.xlu0 %2181
        %2184 = vst.msk [vmem:[#allocation4 + $0x38] sm:$0xff] %vm625, %v2182
        %v2185 = vld [vmem:[#allocation3 + $0x18] sm:$0xff]
        %v2186 = vmul.f32 %v2185, 0.9677419
        %v2187 = vmul.f32 %v2185, 0.032258064
        %2189 = vrot.lane.b32.xlu0 %v2187, 96
        %v2190 = vpop.permute.xlu0 %2189
        %v2192 = vadd.f32 %v2186, %v2190
        %2194 = vrot.lane.b32.xlu0 %v2192, 96
        %v2195 = vpop.permute.xlu0 %2194
        %2197 = vst.msk [vmem:[#allocation4 + $0x38] sm:$0xff] %vm707, %v2195
        %v2198 = vld [vmem:[#allocation3 + $0x18] sm:$0xff]
        %v2199 = vmul.f32 %v2198, 0.48387095
        %v2200 = vmul.f32 %v2198, 0.516129
        %2202 = vrot.lane.b32.xlu0 %v2200, 96
        %v2203 = vpop.permute.xlu0 %2202
        %v2205 = vadd.f32 %v2199, %v2203
        %2206 = vst.msk [vmem:[#allocation4 + $0x38] sm:$0xff] %vm789, %v2205
        %v2207 = vld [vmem:[#allocation3 + $0x18] sm:$0xff]
        %v2208 = vmul.f32 %v2207, 0.0
        %2210 = vrot.lane.b32.xlu0 %v2207, 96
        %v2211 = vpop.permute.xlu0 %2210
        %v2213 = vadd.f32 %v2208, %v2211
        %2215 = vrot.lane.b32.xlu0 %v2213, 32
        %v2216 = vpop.permute.xlu0 %2215
        %2218 = vst.msk [vmem:[#allocation4 + $0x38] sm:$0xff] %vm871, %v2216
        %v2223 = vcombine.high %v448, %v448
        %v2224 = vcombine.high %v449, %v449
        %v2225 = vcombine.high %v450, %v450
        %v2226 = vcombine.high %v451, %v451
        %2231 = vst [vmem:[#allocation4 + $0x40] sm:$0xf] %v448
        %2232 = vst [vmem:[#allocation4 + $0x48] sm:$0xf] %v2223
        %2233 = vst [vmem:[#allocation4 + $0x50] sm:$0xf] %v449
        %2234 = vst [vmem:[#allocation4 + $0x58] sm:$0xf] %v2224
        %2235 = vst [vmem:[#allocation4 + $0x60] sm:$0xf] %v450
        %2236 = vst [vmem:[#allocation4 + $0x68] sm:$0xf] %v2225
        %2237 = vst [vmem:[#allocation4 + $0x70] sm:$0xf] %v451
        %2238 = vst [vmem:[#allocation4 + $0x78] sm:$0xf] %v2226
        %v2239 = vlaneseq
        %v2240 = vand.u32 %v2239, 127
        %v2241 = vadd.s32 %v2240, 128
        %v2242 = vadd.s32 %v2240, 256
        %v2243 = vadd.s32 %v2240, 384
        %v2244 = vadd.s32 %v2240, 512
        %v2245 = vadd.s32 %v2240, 640
        %v2246 = vadd.s32 %v2240, 768
        %v2247 = vadd.s32 %v2240, 896
        %v2248 = vcvt.s32.f32 %v2240
        %v2249 = vcvt.s32.f32 %v2241
        %v2250 = vcvt.s32.f32 %v2242
        %v2251 = vcvt.s32.f32 %v2243
        %v2252 = vcvt.s32.f32 %v2244
        %v2253 = vcvt.s32.f32 %v2245
        %v2254 = vcvt.s32.f32 %v2246
        %v2255 = vcvt.s32.f32 %v2247
        %v2256 = vadd.f32 %v2248, 0.5
        %v2257 = vadd.f32 %v2249, 0.5
        %v2258 = vadd.f32 %v2250, 0.5
        %v2259 = vadd.f32 %v2251, 0.5
        %v2260 = vadd.f32 %v2252, 0.5
        %v2261 = vadd.f32 %v2253, 0.5
        %v2262 = vadd.f32 %v2254, 0.5
        %v2263 = vadd.f32 %v2255, 0.5
        %v2264 = vmul.f32 %v2256, 0.03125
        %v2265 = vmul.f32 %v2257, 0.03125
        %v2266 = vmul.f32 %v2258, 0.03125
        %v2267 = vmul.f32 %v2259, 0.03125
        %v2268 = vmul.f32 %v2260, 0.03125
        %v2269 = vmul.f32 %v2261, 0.03125
        %v2270 = vmul.f32 %v2262, 0.03125
        %v2271 = vmul.f32 %v2263, 0.03125
        %v2272 = vfloor.f32 %v2264
        %v2273 = vfloor.f32 %v2265
        %v2274 = vfloor.f32 %v2266
        %v2275 = vfloor.f32 %v2267
        %v2276 = vfloor.f32 %v2268
        %v2277 = vfloor.f32 %v2269
        %v2278 = vfloor.f32 %v2270
        %v2279 = vfloor.f32 %v2271
        %v2280 = vmul.f32 %v2272, 32.0
        %v2281 = vmul.f32 %v2273, 32.0
        %v2282 = vmul.f32 %v2274, 32.0
        %v2283 = vmul.f32 %v2275, 32.0
        %v2284 = vmul.f32 %v2276, 32.0
        %v2285 = vmul.f32 %v2277, 32.0
        %v2286 = vmul.f32 %v2278, 32.0
        %v2287 = vmul.f32 %v2279, 32.0
        %v2288 = vsub.f32 %v2248, %v2280
        %v2289 = vsub.f32 %v2249, %v2281
        %v2290 = vsub.f32 %v2250, %v2282
        %v2291 = vsub.f32 %v2251, %v2283
        %v2292 = vsub.f32 %v2252, %v2284
        %v2293 = vsub.f32 %v2253, %v2285
        %v2294 = vsub.f32 %v2254, %v2286
        %v2295 = vsub.f32 %v2255, %v2287
        %vm2296 = vcmp.ge.s32.totalorder %v2240, 32
        %vm2297 = vcmp.ge.s32.totalorder %v2241, 32
        %vm2298 = vcmp.ge.s32.totalorder %v2242, 32
        %vm2299 = vcmp.ge.s32.totalorder %v2243, 32
        %vm2300 = vcmp.ge.s32.totalorder %v2244, 32
        %vm2301 = vcmp.ge.s32.totalorder %v2245, 32
        %vm2302 = vcmp.ge.s32.totalorder %v2246, 32
        %vm2303 = vcmp.ge.s32.totalorder %v2247, 32
        %vm2304 = vcmp.lt.s32.totalorder %v2240, 992
        %vm2305 = vcmp.lt.s32.totalorder %v2241, 992
        %vm2306 = vcmp.lt.s32.totalorder %v2242, 992
        %vm2307 = vcmp.lt.s32.totalorder %v2243, 992
        %vm2308 = vcmp.lt.s32.totalorder %v2244, 992
        %vm2309 = vcmp.lt.s32.totalorder %v2245, 992
        %vm2310 = vcmp.lt.s32.totalorder %v2246, 992
        %vm2311 = vcmp.lt.s32.totalorder %v2247, 992
        %vm2312 = vcmp.gt.f32.partialorder %v2288, 0.5
        %vm2313 = vcmp.gt.f32.partialorder %v2289, 0.5
        %vm2314 = vcmp.gt.f32.partialorder %v2290, 0.5
        %vm2315 = vcmp.gt.f32.partialorder %v2291, 0.5
        %vm2316 = vcmp.gt.f32.partialorder %v2292, 0.5
        %vm2317 = vcmp.gt.f32.partialorder %v2293, 0.5
        %vm2318 = vcmp.gt.f32.partialorder %v2294, 0.5
        %vm2319 = vcmp.gt.f32.partialorder %v2295, 0.5
        %vm2320 = vcmp.lt.f32.partialorder %v2288, 30.5
        %vm2321 = vcmp.lt.f32.partialorder %v2289, 30.5
        %vm2322 = vcmp.lt.f32.partialorder %v2290, 30.5
        %vm2323 = vcmp.lt.f32.partialorder %v2291, 30.5
        %vm2324 = vcmp.lt.f32.partialorder %v2292, 30.5
        %vm2325 = vcmp.lt.f32.partialorder %v2293, 30.5
        %vm2326 = vcmp.lt.f32.partialorder %v2294, 30.5
        %vm2327 = vcmp.lt.f32.partialorder %v2295, 30.5
        %v2328 = vld [vmem:[#allocation4] sm:$0xff]
        %v2329 = vld [vmem:[#allocation4 + $0x8] sm:$0xff]
        %v2330 = vld [vmem:[#allocation4 + $0x10] sm:$0xff]
        %v2331 = vld [vmem:[#allocation4 + $0x18] sm:$0xff]
        %v2332 = vld [vmem:[#allocation4 + $0x20] sm:$0xff]
        %v2333 = vld [vmem:[#allocation4 + $0x28] sm:$0xff]
        %v2334 = vld [vmem:[#allocation4 + $0x30] sm:$0xff]
        %v2335 = vld [vmem:[#allocation4 + $0x38] sm:$0xff]
        %v2336 = vld [vmem:[#allocation4 + $0x40] sm:$0xf]
        %v2337 = vld [vmem:[#allocation4 + $0x48] sm:$0xf]
        %v2338 = vld [vmem:[#allocation4 + $0x50] sm:$0xf]
        %v2339 = vld [vmem:[#allocation4 + $0x58] sm:$0xf]
        %v2340 = vld [vmem:[#allocation4 + $0x60] sm:$0xf]
        %v2341 = vld [vmem:[#allocation4 + $0x68] sm:$0xf]
        %v2342 = vld [vmem:[#allocation4 + $0x70] sm:$0xf]
        %v2343 = vld [vmem:[#allocation4 + $0x78] sm:$0xf]
        %2344 = vrot.lane.b32.xlu0 %v2328, 33
        %v2345 = vpop.permute.xlu0 %2344
        %2346 = vrot.lane.b32.xlu0 %v2336, 33
        %v2347 = vpop.permute.xlu0 %2346
        %2348 = vrot.lane.b32.xlu0 %v2329, 33
        %v2349 = vpop.permute.xlu0 %2348
        %2350 = vrot.lane.b32.xlu0 %v2337, 33
        %v2351 = vpop.permute.xlu0 %2350
        %2352 = vrot.lane.b32.xlu0 %v2330, 33
        %v2353 = vpop.permute.xlu0 %2352
        %2354 = vrot.lane.b32.xlu0 %v2338, 33
        %v2355 = vpop.permute.xlu0 %2354
        %2356 = vrot.lane.b32.xlu0 %v2331, 33
        %v2357 = vpop.permute.xlu0 %2356
        %2358 = vrot.lane.b32.xlu0 %v2339, 33
        %v2359 = vpop.permute.xlu0 %2358
        %2360 = vrot.lane.b32.xlu0 %v2332, 33
        %v2361 = vpop.permute.xlu0 %2360
        %2362 = vrot.lane.b32.xlu0 %v2340, 33
        %v2363 = vpop.permute.xlu0 %2362
        %2364 = vrot.lane.b32.xlu0 %v2333, 33
        %v2365 = vpop.permute.xlu0 %2364
        %2366 = vrot.lane.b32.xlu0 %v2341, 33
        %v2367 = vpop.permute.xlu0 %2366
        %2368 = vrot.lane.b32.xlu0 %v2334, 33
        %v2369 = vpop.permute.xlu0 %2368
        %2370 = vrot.lane.b32.xlu0 %v2342, 33
        %v2371 = vpop.permute.xlu0 %2370
        %2372 = vrot.lane.b32.xlu0 %v2335, 33
        %v2373 = vpop.permute.xlu0 %2372
        %2374 = vrot.lane.b32.xlu0 %v2343, 33
        %v2375 = vpop.permute.xlu0 %2374
        %vm2376 = vcmp.lt.s32.totalorder %v2240, 33
        %v2377 = vsel %vm2376, %v2369, %v2373
        %v2378 = vsel %vm2376, %v2371, %v2375
        %v2379 = vsel %vm2376, %v2365, %v2369
        %v2380 = vsel %vm2376, %v2367, %v2371
        %v2381 = vsel %vm2376, %v2361, %v2365
        %v2382 = vsel %vm2376, %v2363, %v2367
        %v2383 = vsel %vm2376, %v2357, %v2361
        %v2384 = vsel %vm2376, %v2359, %v2363
        %v2385 = vsel %vm2376, %v2353, %v2357
        %v2386 = vsel %vm2376, %v2355, %v2359
        %v2387 = vsel %vm2376, %v2349, %v2353
        %v2388 = vsel %vm2376, %v2351, %v2355
        %v2389 = vsel %vm2376, %v2345, %v2349
        %v2390 = vsel %vm2376, %v2347, %v2351
        %v2391 = vsel %vm2376, %v2373, %v2345
        %v2392 = vsel %vm2376, %v2375, %v2347
        %vm2393 = vmand %vm2296, %vm2312
        %vm2394 = vmand %vm2297, %vm2313
        %vm2395 = vmand %vm2298, %vm2314
        %vm2396 = vmand %vm2299, %vm2315
        %vm2397 = vmand %vm2300, %vm2316
        %vm2398 = vmand %vm2301, %vm2317
        %vm2399 = vmand %vm2302, %vm2318
        %vm2400 = vmand %vm2303, %vm2319
        %v2401 = vsel %vm2393, 1, 0
        %v2402 = vsel %vm2394, 1, 0
        %v2403 = vsel %vm2395, 1, 0
        %v2404 = vsel %vm2396, 1, 0
        %v2405 = vsel %vm2397, 1, 0
        %v2406 = vsel %vm2398, 1, 0
        %v2407 = vsel %vm2399, 1, 0
        %v2408 = vsel %vm2400, 1, 0
        %vm2409 = vcmp.eq.s32.totalorder %v2401, 1
        %vm2410 = vcmp.eq.s32.totalorder %v2402, 1
        %vm2411 = vcmp.eq.s32.totalorder %v2403, 1
        %vm2412 = vcmp.eq.s32.totalorder %v2404, 1
        %vm2413 = vcmp.eq.s32.totalorder %v2405, 1
        %vm2414 = vcmp.eq.s32.totalorder %v2406, 1
        %vm2415 = vcmp.eq.s32.totalorder %v2407, 1
        %vm2416 = vcmp.eq.s32.totalorder %v2408, 1
        %v2417 = vsel %vm2409, %v2391, 0.0
        %v2418 = vsel %vm2410, %v2389, 0.0
        %v2419 = vsel %vm2411, %v2387, 0.0
        %v2420 = vsel %vm2412, %v2385, 0.0
        %v2421 = vsel %vm2413, %v2383, 0.0
        %v2422 = vsel %vm2414, %v2381, 0.0
        %v2423 = vsel %vm2415, %v2379, 0.0
        %v2424 = vsel %vm2416, %v2377, 0.0
        %v2425 = vsel %vm2409, %v2392, 0.0
        %v2426 = vsel %vm2410, %v2390, 0.0
        %v2427 = vsel %vm2411, %v2388, 0.0
        %v2428 = vsel %vm2412, %v2386, 0.0
        %v2429 = vsel %vm2413, %v2384, 0.0
        %v2430 = vsel %vm2414, %v2382, 0.0
        %v2431 = vsel %vm2415, %v2380, 0.0
        %v2432 = vsel %vm2416, %v2378, 0.0
        %2433 = vst [vmem:[#allocation5] sm:$0xff] %v2417
        %2434 = vst [vmem:[#allocation5 + $0x8] sm:$0xff] %v2418
        %2435 = vst [vmem:[#allocation5 + $0x10] sm:$0xff] %v2419
        %2436 = vst [vmem:[#allocation5 + $0x18] sm:$0xff] %v2420
        %2437 = vst [vmem:[#allocation5 + $0x20] sm:$0xff] %v2421
        %2438 = vst [vmem:[#allocation5 + $0x28] sm:$0xff] %v2422
        %2439 = vst [vmem:[#allocation5 + $0x30] sm:$0xff] %v2423
        %2440 = vst [vmem:[#allocation5 + $0x38] sm:$0xff] %v2424
        %2441 = vst [vmem:[#allocation5 + $0x40] sm:$0xf] %v2425
        %2442 = vst [vmem:[#allocation5 + $0x48] sm:$0xf] %v2426
        %2443 = vst [vmem:[#allocation5 + $0x50] sm:$0xf] %v2427
        %2444 = vst [vmem:[#allocation5 + $0x58] sm:$0xf] %v2428
        %2445 = vst [vmem:[#allocation5 + $0x60] sm:$0xf] %v2429
        %2446 = vst [vmem:[#allocation5 + $0x68] sm:$0xf] %v2430
        %2447 = vst [vmem:[#allocation5 + $0x70] sm:$0xf] %v2431
        %2448 = vst [vmem:[#allocation5 + $0x78] sm:$0xf] %v2432
        %2449 = vrot.lane.b32.xlu0 %v2328, 32
        %v2450 = vpop.permute.xlu0 %2449
        %2451 = vrot.lane.b32.xlu0 %v2336, 32
        %v2452 = vpop.permute.xlu0 %2451
        %2453 = vrot.lane.b32.xlu0 %v2329, 32
        %v2454 = vpop.permute.xlu0 %2453
        %2455 = vrot.lane.b32.xlu0 %v2337, 32
        %v2456 = vpop.permute.xlu0 %2455
        %2457 = vrot.lane.b32.xlu0 %v2330, 32
        %v2458 = vpop.permute.xlu0 %2457
        %2459 = vrot.lane.b32.xlu0 %v2338, 32
        %v2460 = vpop.permute.xlu0 %2459
        %2461 = vrot.lane.b32.xlu0 %v2331, 32
        %v2462 = vpop.permute.xlu0 %2461
        %2463 = vrot.lane.b32.xlu0 %v2339, 32
        %v2464 = vpop.permute.xlu0 %2463
        %2465 = vrot.lane.b32.xlu0 %v2332, 32
        %v2466 = vpop.permute.xlu0 %2465
        %2467 = vrot.lane.b32.xlu0 %v2340, 32
        %v2468 = vpop.permute.xlu0 %2467
        %2469 = vrot.lane.b32.xlu0 %v2333, 32
        %v2470 = vpop.permute.xlu0 %2469
        %2471 = vrot.lane.b32.xlu0 %v2341, 32
        %v2472 = vpop.permute.xlu0 %2471
        %2473 = vrot.lane.b32.xlu0 %v2334, 32
        %v2474 = vpop.permute.xlu0 %2473
        %2475 = vrot.lane.b32.xlu0 %v2342, 32
        %v2476 = vpop.permute.xlu0 %2475
        %2477 = vrot.lane.b32.xlu0 %v2335, 32
        %v2478 = vpop.permute.xlu0 %2477
        %2479 = vrot.lane.b32.xlu0 %v2343, 32
        %v2480 = vpop.permute.xlu0 %2479
        %vm2481 = vcmp.lt.s32.totalorder %v2240, 32
        %v2482 = vsel %vm2481, %v2474, %v2478
        %v2483 = vsel %vm2481, %v2476, %v2480
        %v2484 = vsel %vm2481, %v2470, %v2474
        %v2485 = vsel %vm2481, %v2472, %v2476
        %v2486 = vsel %vm2481, %v2466, %v2470
        %v2487 = vsel %vm2481, %v2468, %v2472
        %v2488 = vsel %vm2481, %v2462, %v2466
        %v2489 = vsel %vm2481, %v2464, %v2468
        %v2490 = vsel %vm2481, %v2458, %v2462
        %v2491 = vsel %vm2481, %v2460, %v2464
        %v2492 = vsel %vm2481, %v2454, %v2458
        %v2493 = vsel %vm2481, %v2456, %v2460
        %v2494 = vsel %vm2481, %v2450, %v2454
        %v2495 = vsel %vm2481, %v2452, %v2456
        %v2496 = vsel %vm2481, %v2478, %v2450
        %v2497 = vsel %vm2481, %v2480, %v2452
        %v2498 = vsel %vm2296, 1, 0
        %v2499 = vsel %vm2297, 1, 0
        %v2500 = vsel %vm2298, 1, 0
        %v2501 = vsel %vm2299, 1, 0
        %v2502 = vsel %vm2300, 1, 0
        %v2503 = vsel %vm2301, 1, 0
        %v2504 = vsel %vm2302, 1, 0
        %v2505 = vsel %vm2303, 1, 0
        %vm2506 = vcmp.eq.s32.totalorder %v2498, 1
        %vm2507 = vcmp.eq.s32.totalorder %v2499, 1
        %vm2508 = vcmp.eq.s32.totalorder %v2500, 1
        %vm2509 = vcmp.eq.s32.totalorder %v2501, 1
        %vm2510 = vcmp.eq.s32.totalorder %v2502, 1
        %vm2511 = vcmp.eq.s32.totalorder %v2503, 1
        %vm2512 = vcmp.eq.s32.totalorder %v2504, 1
        %vm2513 = vcmp.eq.s32.totalorder %v2505, 1
        %v2514 = vsel %vm2506, %v2496, 0.0
        %v2515 = vsel %vm2507, %v2494, 0.0
        %v2516 = vsel %vm2508, %v2492, 0.0
        %v2517 = vsel %vm2509, %v2490, 0.0
        %v2518 = vsel %vm2510, %v2488, 0.0
        %v2519 = vsel %vm2511, %v2486, 0.0
        %v2520 = vsel %vm2512, %v2484, 0.0
        %v2521 = vsel %vm2513, %v2482, 0.0
        %v2522 = vsel %vm2506, %v2497, 0.0
        %v2523 = vsel %vm2507, %v2495, 0.0
        %v2524 = vsel %vm2508, %v2493, 0.0
        %v2525 = vsel %vm2509, %v2491, 0.0
        %v2526 = vsel %vm2510, %v2489, 0.0
        %v2527 = vsel %vm2511, %v2487, 0.0
        %v2528 = vsel %vm2512, %v2485, 0.0
        %v2529 = vsel %vm2513, %v2483, 0.0
        %vm2546 = vcmask 1043456
        %v2547 = vrot.slane %v2514, 4
        %v2548 = vrot.slane %v2515, 4
        %v2549 = vrot.slane %v2516, 4
        %v2550 = vrot.slane %v2517, 4
        %v2551 = vrot.slane %v2518, 4
        %v2552 = vrot.slane %v2519, 4
        %v2553 = vrot.slane %v2520, 4
        %v2554 = vrot.slane %v2521, 4
        %v2555 = vrot.slane %v2522, 4
        %v2556 = vsel %vm2546, %v2547, %v2555
        %v2557 = vrot.slane %v2523, 4
        %v2558 = vsel %vm2546, %v2548, %v2557
        %v2559 = vrot.slane %v2524, 4
        %v2560 = vsel %vm2546, %v2549, %v2559
        %v2561 = vrot.slane %v2525, 4
        %v2562 = vsel %vm2546, %v2550, %v2561
        %v2563 = vrot.slane %v2526, 4
        %v2564 = vsel %vm2546, %v2551, %v2563
        %v2565 = vrot.slane %v2527, 4
        %v2566 = vsel %vm2546, %v2552, %v2565
        %v2567 = vrot.slane %v2528, 4
        %v2568 = vsel %vm2546, %v2553, %v2567
        %v2569 = vrot.slane %v2529, 4
        %v2570 = vsel %vm2546, %v2554, %v2569
        %2587 = vst [vmem:[#allocation5 + $0x40] sm:$0xf0] %v2547
        %2588 = vst [vmem:[#allocation5 + $0x48] sm:$0xf0] %v2548
        %2589 = vst [vmem:[#allocation5 + $0x50] sm:$0xf0] %v2549
        %2590 = vst [vmem:[#allocation5 + $0x58] sm:$0xf0] %v2550
        %2591 = vst [vmem:[#allocation5 + $0x60] sm:$0xf0] %v2551
        %2592 = vst [vmem:[#allocation5 + $0x68] sm:$0xf0] %v2552
        %2593 = vst [vmem:[#allocation5 + $0x70] sm:$0xf0] %v2553
        %2594 = vst [vmem:[#allocation5 + $0x78] sm:$0xf0] %v2554
        %2595 = vst [vmem:[#allocation5 + $0x80] sm:$0xff] %v2556
        %2596 = vst [vmem:[#allocation5 + $0x88] sm:$0xff] %v2558
        %2597 = vst [vmem:[#allocation5 + $0x90] sm:$0xff] %v2560
        %2598 = vst [vmem:[#allocation5 + $0x98] sm:$0xff] %v2562
        %2599 = vst [vmem:[#allocation5 + $0xa0] sm:$0xff] %v2564
        %2600 = vst [vmem:[#allocation5 + $0xa8] sm:$0xff] %v2566
        %2601 = vst [vmem:[#allocation5 + $0xb0] sm:$0xff] %v2568
        %2602 = vst [vmem:[#allocation5 + $0xb8] sm:$0xff] %v2570
        %2603 = vrot.lane.b32.xlu0 %v2328, 31
        %v2604 = vpop.permute.xlu0 %2603
        %2605 = vrot.lane.b32.xlu0 %v2336, 31
        %v2606 = vpop.permute.xlu0 %2605
        %2607 = vrot.lane.b32.xlu0 %v2329, 31
        %v2608 = vpop.permute.xlu0 %2607
        %2609 = vrot.lane.b32.xlu0 %v2337, 31
        %v2610 = vpop.permute.xlu0 %2609
        %2611 = vrot.lane.b32.xlu0 %v2330, 31
        %v2612 = vpop.permute.xlu0 %2611
        %2613 = vrot.lane.b32.xlu0 %v2338, 31
        %v2614 = vpop.permute.xlu0 %2613
        %2615 = vrot.lane.b32.xlu0 %v2331, 31
        %v2616 = vpop.permute.xlu0 %2615
        %2617 = vrot.lane.b32.xlu0 %v2339, 31
        %v2618 = vpop.permute.xlu0 %2617
        %2619 = vrot.lane.b32.xlu0 %v2332, 31
        %v2620 = vpop.permute.xlu0 %2619
        %2621 = vrot.lane.b32.xlu0 %v2340, 31
        %v2622 = vpop.permute.xlu0 %2621
        %2623 = vrot.lane.b32.xlu0 %v2333, 31
        %v2624 = vpop.permute.xlu0 %2623
        %2625 = vrot.lane.b32.xlu0 %v2341, 31
        %v2626 = vpop.permute.xlu0 %2625
        %2627 = vrot.lane.b32.xlu0 %v2334, 31
        %v2628 = vpop.permute.xlu0 %2627
        %2629 = vrot.lane.b32.xlu0 %v2342, 31
        %v2630 = vpop.permute.xlu0 %2629
        %2631 = vrot.lane.b32.xlu0 %v2335, 31
        %v2632 = vpop.permute.xlu0 %2631
        %2633 = vrot.lane.b32.xlu0 %v2343, 31
        %v2634 = vpop.permute.xlu0 %2633
        %vm2635 = vcmp.lt.s32.totalorder %v2240, 31
        %v2636 = vsel %vm2635, %v2628, %v2632
        %v2637 = vsel %vm2635, %v2630, %v2634
        %v2638 = vsel %vm2635, %v2624, %v2628
        %v2639 = vsel %vm2635, %v2626, %v2630
        %v2640 = vsel %vm2635, %v2620, %v2624
        %v2641 = vsel %vm2635, %v2622, %v2626
        %v2642 = vsel %vm2635, %v2616, %v2620
        %v2643 = vsel %vm2635, %v2618, %v2622
        %v2644 = vsel %vm2635, %v2612, %v2616
        %v2645 = vsel %vm2635, %v2614, %v2618
        %v2646 = vsel %vm2635, %v2608, %v2612
        %v2647 = vsel %vm2635, %v2610, %v2614
        %v2648 = vsel %vm2635, %v2604, %v2608
        %v2649 = vsel %vm2635, %v2606, %v2610
        %v2650 = vsel %vm2635, %v2632, %v2604
        %v2651 = vsel %vm2635, %v2634, %v2606
        %vm2652 = vmand %vm2296, %vm2320
        %vm2653 = vmand %vm2297, %vm2321
        %vm2654 = vmand %vm2298, %vm2322
        %vm2655 = vmand %vm2299, %vm2323
        %vm2656 = vmand %vm2300, %vm2324
        %vm2657 = vmand %vm2301, %vm2325
        %vm2658 = vmand %vm2302, %vm2326
        %vm2659 = vmand %vm2303, %vm2327
        %v2660 = vsel %vm2652, 1, 0
        %v2661 = vsel %vm2653, 1, 0
        %v2662 = vsel %vm2654, 1, 0
        %v2663 = vsel %vm2655, 1, 0
        %v2664 = vsel %vm2656, 1, 0
        %v2665 = vsel %vm2657, 1, 0
        %v2666 = vsel %vm2658, 1, 0
        %v2667 = vsel %vm2659, 1, 0
        %vm2668 = vcmp.eq.s32.totalorder %v2660, 1
        %vm2669 = vcmp.eq.s32.totalorder %v2661, 1
        %vm2670 = vcmp.eq.s32.totalorder %v2662, 1
        %vm2671 = vcmp.eq.s32.totalorder %v2663, 1
        %vm2672 = vcmp.eq.s32.totalorder %v2664, 1
        %vm2673 = vcmp.eq.s32.totalorder %v2665, 1
        %vm2674 = vcmp.eq.s32.totalorder %v2666, 1
        %vm2675 = vcmp.eq.s32.totalorder %v2667, 1
        %v2676 = vsel %vm2668, %v2650, 0.0
        %v2677 = vsel %vm2669, %v2648, 0.0
        %v2678 = vsel %vm2670, %v2646, 0.0
        %v2679 = vsel %vm2671, %v2644, 0.0
        %v2680 = vsel %vm2672, %v2642, 0.0
        %v2681 = vsel %vm2673, %v2640, 0.0
        %v2682 = vsel %vm2674, %v2638, 0.0
        %v2683 = vsel %vm2675, %v2636, 0.0
        %v2684 = vsel %vm2668, %v2651, 0.0
        %v2685 = vsel %vm2669, %v2649, 0.0
        %v2686 = vsel %vm2670, %v2647, 0.0
        %v2687 = vsel %vm2671, %v2645, 0.0
        %v2688 = vsel %vm2672, %v2643, 0.0
        %v2689 = vsel %vm2673, %v2641, 0.0
        %v2690 = vsel %vm2674, %v2639, 0.0
        %v2691 = vsel %vm2675, %v2637, 0.0
        %2692 = vst [vmem:[#allocation5 + $0xc0] sm:$0xff] %v2676
        %2693 = vst [vmem:[#allocation5 + $0xc8] sm:$0xff] %v2677
        %2694 = vst [vmem:[#allocation5 + $0xd0] sm:$0xff] %v2678
        %2695 = vst [vmem:[#allocation5 + $0xd8] sm:$0xff] %v2679
        %2696 = vst [vmem:[#allocation5 + $0xe0] sm:$0xff] %v2680
        %2697 = vst [vmem:[#allocation5 + $0xe8] sm:$0xff] %v2681
        %2698 = vst [vmem:[#allocation5 + $0xf0] sm:$0xff] %v2682
        %2699 = vst [vmem:[#allocation5 + $0xf8] sm:$0xff] %v2683
        %2700 = vst [vmem:[#allocation5 + $0x100] sm:$0xf] %v2684
        %2701 = vst [vmem:[#allocation5 + $0x108] sm:$0xf] %v2685
        %2702 = vst [vmem:[#allocation5 + $0x110] sm:$0xf] %v2686
        %2703 = vst [vmem:[#allocation5 + $0x118] sm:$0xf] %v2687
        %2704 = vst [vmem:[#allocation5 + $0x120] sm:$0xf] %v2688
        %2705 = vst [vmem:[#allocation5 + $0x128] sm:$0xf] %v2689
        %2706 = vst [vmem:[#allocation5 + $0x130] sm:$0xf] %v2690
        %2707 = vst [vmem:[#allocation5 + $0x138] sm:$0xf] %v2691
        %2708 = vrot.lane.b32.xlu0 %v2328, 1
        %v2709 = vpop.permute.xlu0 %2708
        %2710 = vrot.lane.b32.xlu0 %v2336, 1
        %v2711 = vpop.permute.xlu0 %2710
        %2712 = vrot.lane.b32.xlu0 %v2329, 1
        %v2713 = vpop.permute.xlu0 %2712
        %2714 = vrot.lane.b32.xlu0 %v2337, 1
        %v2715 = vpop.permute.xlu0 %2714
        %2716 = vrot.lane.b32.xlu0 %v2330, 1
        %v2717 = vpop.permute.xlu0 %2716
        %2718 = vrot.lane.b32.xlu0 %v2338, 1
        %v2719 = vpop.permute.xlu0 %2718
        %2720 = vrot.lane.b32.xlu0 %v2331, 1
        %v2721 = vpop.permute.xlu0 %2720
        %2722 = vrot.lane.b32.xlu0 %v2339, 1
        %v2723 = vpop.permute.xlu0 %2722
        %2724 = vrot.lane.b32.xlu0 %v2332, 1
        %v2725 = vpop.permute.xlu0 %2724
        %2726 = vrot.lane.b32.xlu0 %v2340, 1
        %v2727 = vpop.permute.xlu0 %2726
        %2728 = vrot.lane.b32.xlu0 %v2333, 1
        %v2729 = vpop.permute.xlu0 %2728
        %2730 = vrot.lane.b32.xlu0 %v2341, 1
        %v2731 = vpop.permute.xlu0 %2730
        %2732 = vrot.lane.b32.xlu0 %v2334, 1
        %v2733 = vpop.permute.xlu0 %2732
        %2734 = vrot.lane.b32.xlu0 %v2342, 1
        %v2735 = vpop.permute.xlu0 %2734
        %2736 = vrot.lane.b32.xlu0 %v2335, 1
        %v2737 = vpop.permute.xlu0 %2736
        %2738 = vrot.lane.b32.xlu0 %v2343, 1
        %v2739 = vpop.permute.xlu0 %2738
        %vm2740 = vcmp.lt.s32.totalorder %v2240, 1
        %v2741 = vsel %vm2740, %v2733, %v2737
        %v2742 = vsel %vm2740, %v2735, %v2739
        %v2743 = vsel %vm2740, %v2729, %v2733
        %v2744 = vsel %vm2740, %v2731, %v2735
        %v2745 = vsel %vm2740, %v2725, %v2729
        %v2746 = vsel %vm2740, %v2727, %v2731
        %v2747 = vsel %vm2740, %v2721, %v2725
        %v2748 = vsel %vm2740, %v2723, %v2727
        %v2749 = vsel %vm2740, %v2717, %v2721
        %v2750 = vsel %vm2740, %v2719, %v2723
        %v2751 = vsel %vm2740, %v2713, %v2717
        %v2752 = vsel %vm2740, %v2715, %v2719
        %v2753 = vsel %vm2740, %v2709, %v2713
        %v2754 = vsel %vm2740, %v2711, %v2715
        %v2755 = vsel %vm2740, %v2737, %v2709
        %v2756 = vsel %vm2740, %v2739, %v2711
        %v2757 = vsel %vm2312, 1, 0
        %v2758 = vsel %vm2313, 1, 0
        %v2759 = vsel %vm2314, 1, 0
        %v2760 = vsel %vm2315, 1, 0
        %v2761 = vsel %vm2316, 1, 0
        %v2762 = vsel %vm2317, 1, 0
        %v2763 = vsel %vm2318, 1, 0
        %v2764 = vsel %vm2319, 1, 0
        %vm2765 = vcmp.eq.s32.totalorder %v2757, 1
        %vm2766 = vcmp.eq.s32.totalorder %v2758, 1
        %vm2767 = vcmp.eq.s32.totalorder %v2759, 1
        %vm2768 = vcmp.eq.s32.totalorder %v2760, 1
        %vm2769 = vcmp.eq.s32.totalorder %v2761, 1
        %vm2770 = vcmp.eq.s32.totalorder %v2762, 1
        %vm2771 = vcmp.eq.s32.totalorder %v2763, 1
        %vm2772 = vcmp.eq.s32.totalorder %v2764, 1
        %v2773 = vsel %vm2765, %v2755, 0.0
        %v2774 = vsel %vm2766, %v2753, 0.0
        %v2775 = vsel %vm2767, %v2751, 0.0
        %v2776 = vsel %vm2768, %v2749, 0.0
        %v2777 = vsel %vm2769, %v2747, 0.0
        %v2778 = vsel %vm2770, %v2745, 0.0
        %v2779 = vsel %vm2771, %v2743, 0.0
        %v2780 = vsel %vm2772, %v2741, 0.0
        %v2781 = vsel %vm2765, %v2756, 0.0
        %v2782 = vsel %vm2766, %v2754, 0.0
        %v2783 = vsel %vm2767, %v2752, 0.0
        %v2784 = vsel %vm2768, %v2750, 0.0
        %v2785 = vsel %vm2769, %v2748, 0.0
        %v2786 = vsel %vm2770, %v2746, 0.0
        %v2787 = vsel %vm2771, %v2744, 0.0
        %v2788 = vsel %vm2772, %v2742, 0.0
        %v2805 = vrot.slane %v2773, 4
        %v2806 = vrot.slane %v2774, 4
        %v2807 = vrot.slane %v2775, 4
        %v2808 = vrot.slane %v2776, 4
        %v2809 = vrot.slane %v2777, 4
        %v2810 = vrot.slane %v2778, 4
        %v2811 = vrot.slane %v2779, 4
        %v2812 = vrot.slane %v2780, 4
        %v2813 = vrot.slane %v2781, 4
        %v2814 = vsel %vm2546, %v2805, %v2813
        %v2815 = vrot.slane %v2782, 4
        %v2816 = vsel %vm2546, %v2806, %v2815
        %v2817 = vrot.slane %v2783, 4
        %v2818 = vsel %vm2546, %v2807, %v2817
        %v2819 = vrot.slane %v2784, 4
        %v2820 = vsel %vm2546, %v2808, %v2819
        %v2821 = vrot.slane %v2785, 4
        %v2822 = vsel %vm2546, %v2809, %v2821
        %v2823 = vrot.slane %v2786, 4
        %v2824 = vsel %vm2546, %v2810, %v2823
        %v2825 = vrot.slane %v2787, 4
        %v2826 = vsel %vm2546, %v2811, %v2825
        %v2827 = vrot.slane %v2788, 4
        %v2828 = vsel %vm2546, %v2812, %v2827
        %2845 = vst [vmem:[#allocation5 + $0x100] sm:$0xf0] %v2805
        %2846 = vst [vmem:[#allocation5 + $0x108] sm:$0xf0] %v2806
        %2847 = vst [vmem:[#allocation5 + $0x110] sm:$0xf0] %v2807
        %2848 = vst [vmem:[#allocation5 + $0x118] sm:$0xf0] %v2808
        %2849 = vst [vmem:[#allocation5 + $0x120] sm:$0xf0] %v2809
        %2850 = vst [vmem:[#allocation5 + $0x128] sm:$0xf0] %v2810
        %2851 = vst [vmem:[#allocation5 + $0x130] sm:$0xf0] %v2811
        %2852 = vst [vmem:[#allocation5 + $0x138] sm:$0xf0] %v2812
        %2853 = vst [vmem:[#allocation5 + $0x140] sm:$0xff] %v2814
        %2854 = vst [vmem:[#allocation5 + $0x148] sm:$0xff] %v2816
        %2855 = vst [vmem:[#allocation5 + $0x150] sm:$0xff] %v2818
        %2856 = vst [vmem:[#allocation5 + $0x158] sm:$0xff] %v2820
        %2857 = vst [vmem:[#allocation5 + $0x160] sm:$0xff] %v2822
        %2858 = vst [vmem:[#allocation5 + $0x168] sm:$0xff] %v2824
        %2859 = vst [vmem:[#allocation5 + $0x170] sm:$0xff] %v2826
        %2860 = vst [vmem:[#allocation5 + $0x178] sm:$0xff] %v2828
        %2861 = vst [vmem:[#allocation5 + $0x180] sm:$0xff] %v2328
        %2862 = vst [vmem:[#allocation5 + $0x188] sm:$0xff] %v2329
        %2863 = vst [vmem:[#allocation5 + $0x190] sm:$0xff] %v2330
        %2864 = vst [vmem:[#allocation5 + $0x198] sm:$0xff] %v2331
        %2865 = vst [vmem:[#allocation5 + $0x1a0] sm:$0xff] %v2332
        %2866 = vst [vmem:[#allocation5 + $0x1a8] sm:$0xff] %v2333
        %2867 = vst [vmem:[#allocation5 + $0x1b0] sm:$0xff] %v2334
        %2868 = vst [vmem:[#allocation5 + $0x1b8] sm:$0xff] %v2335
        %2869 = vst [vmem:[#allocation5 + $0x1c0] sm:$0xf] %v2336
        %2870 = vst [vmem:[#allocation5 + $0x1c8] sm:$0xf] %v2337
        %2871 = vst [vmem:[#allocation5 + $0x1d0] sm:$0xf] %v2338
        %2872 = vst [vmem:[#allocation5 + $0x1d8] sm:$0xf] %v2339
        %2873 = vst [vmem:[#allocation5 + $0x1e0] sm:$0xf] %v2340
        %2874 = vst [vmem:[#allocation5 + $0x1e8] sm:$0xf] %v2341
        %2875 = vst [vmem:[#allocation5 + $0x1f0] sm:$0xf] %v2342
        %2876 = vst [vmem:[#allocation5 + $0x1f8] sm:$0xf] %v2343
        %2877 = vrot.lane.b32.xlu0 %v2328, 127
        %v2878 = vpop.permute.xlu0 %2877
        %2879 = vrot.lane.b32.xlu0 %v2336, 127
        %v2880 = vpop.permute.xlu0 %2879
        %2881 = vrot.lane.b32.xlu0 %v2329, 127
        %v2882 = vpop.permute.xlu0 %2881
        %2883 = vrot.lane.b32.xlu0 %v2337, 127
        %v2884 = vpop.permute.xlu0 %2883
        %2885 = vrot.lane.b32.xlu0 %v2330, 127
        %v2886 = vpop.permute.xlu0 %2885
        %2887 = vrot.lane.b32.xlu0 %v2338, 127
        %v2888 = vpop.permute.xlu0 %2887
        %2889 = vrot.lane.b32.xlu0 %v2331, 127
        %v2890 = vpop.permute.xlu0 %2889
        %2891 = vrot.lane.b32.xlu0 %v2339, 127
        %v2892 = vpop.permute.xlu0 %2891
        %2893 = vrot.lane.b32.xlu0 %v2332, 127
        %v2894 = vpop.permute.xlu0 %2893
        %2895 = vrot.lane.b32.xlu0 %v2340, 127
        %v2896 = vpop.permute.xlu0 %2895
        %2897 = vrot.lane.b32.xlu0 %v2333, 127
        %v2898 = vpop.permute.xlu0 %2897
        %2899 = vrot.lane.b32.xlu0 %v2341, 127
        %v2900 = vpop.permute.xlu0 %2899
        %2901 = vrot.lane.b32.xlu0 %v2334, 127
        %v2902 = vpop.permute.xlu0 %2901
        %2903 = vrot.lane.b32.xlu0 %v2342, 127
        %v2904 = vpop.permute.xlu0 %2903
        %2905 = vrot.lane.b32.xlu0 %v2335, 127
        %v2906 = vpop.permute.xlu0 %2905
        %2907 = vrot.lane.b32.xlu0 %v2343, 127
        %v2908 = vpop.permute.xlu0 %2907
        %vm2909 = vcmp.lt.s32.totalorder %v2240, 127
        %v2910 = vsel %vm2909, %v2902, %v2906
        %v2911 = vsel %vm2909, %v2904, %v2908
        %v2912 = vsel %vm2909, %v2898, %v2902
        %v2913 = vsel %vm2909, %v2900, %v2904
        %v2914 = vsel %vm2909, %v2894, %v2898
        %v2915 = vsel %vm2909, %v2896, %v2900
        %v2916 = vsel %vm2909, %v2890, %v2894
        %v2917 = vsel %vm2909, %v2892, %v2896
        %v2918 = vsel %vm2909, %v2886, %v2890
        %v2919 = vsel %vm2909, %v2888, %v2892
        %v2920 = vsel %vm2909, %v2882, %v2886
        %v2921 = vsel %vm2909, %v2884, %v2888
        %v2922 = vsel %vm2909, %v2878, %v2882
        %v2923 = vsel %vm2909, %v2880, %v2884
        %v2924 = vsel %vm2909, %v2906, %v2878
        %v2925 = vsel %vm2909, %v2908, %v2880
        %v2926 = vsel %vm2320, 1, 0
        %v2927 = vsel %vm2321, 1, 0
        %v2928 = vsel %vm2322, 1, 0
        %v2929 = vsel %vm2323, 1, 0
        %v2930 = vsel %vm2324, 1, 0
        %v2931 = vsel %vm2325, 1, 0
        %v2932 = vsel %vm2326, 1, 0
        %v2933 = vsel %vm2327, 1, 0
        %vm2934 = vcmp.eq.s32.totalorder %v2926, 1
        %vm2935 = vcmp.eq.s32.totalorder %v2927, 1
        %vm2936 = vcmp.eq.s32.totalorder %v2928, 1
        %vm2937 = vcmp.eq.s32.totalorder %v2929, 1
        %vm2938 = vcmp.eq.s32.totalorder %v2930, 1
        %vm2939 = vcmp.eq.s32.totalorder %v2931, 1
        %vm2940 = vcmp.eq.s32.totalorder %v2932, 1
        %vm2941 = vcmp.eq.s32.totalorder %v2933, 1
        %v2942 = vsel %vm2934, %v2922, 0.0
        %v2943 = vsel %vm2935, %v2920, 0.0
        %v2944 = vsel %vm2936, %v2918, 0.0
        %v2945 = vsel %vm2937, %v2916, 0.0
        %v2946 = vsel %vm2938, %v2914, 0.0
        %v2947 = vsel %vm2939, %v2912, 0.0
        %v2948 = vsel %vm2940, %v2910, 0.0
        %v2949 = vsel %vm2941, %v2924, 0.0
        %v2950 = vsel %vm2934, %v2923, 0.0
        %v2951 = vsel %vm2935, %v2921, 0.0
        %v2952 = vsel %vm2936, %v2919, 0.0
        %v2953 = vsel %vm2937, %v2917, 0.0
        %v2954 = vsel %vm2938, %v2915, 0.0
        %v2955 = vsel %vm2939, %v2913, 0.0
        %v2956 = vsel %vm2940, %v2911, 0.0
        %v2957 = vsel %vm2941, %v2925, 0.0
        %v2974 = vrot.slane %v2942, 4
        %v2975 = vrot.slane %v2943, 4
        %v2976 = vrot.slane %v2944, 4
        %v2977 = vrot.slane %v2945, 4
        %v2978 = vrot.slane %v2946, 4
        %v2979 = vrot.slane %v2947, 4
        %v2980 = vrot.slane %v2948, 4
        %v2981 = vrot.slane %v2949, 4
        %v2982 = vrot.slane %v2950, 4
        %v2983 = vsel %vm2546, %v2974, %v2982
        %v2984 = vrot.slane %v2951, 4
        %v2985 = vsel %vm2546, %v2975, %v2984
        %v2986 = vrot.slane %v2952, 4
        %v2987 = vsel %vm2546, %v2976, %v2986
        %v2988 = vrot.slane %v2953, 4
        %v2989 = vsel %vm2546, %v2977, %v2988
        %v2990 = vrot.slane %v2954, 4
        %v2991 = vsel %vm2546, %v2978, %v2990
        %v2992 = vrot.slane %v2955, 4
        %v2993 = vsel %vm2546, %v2979, %v2992
        %v2994 = vrot.slane %v2956, 4
        %v2995 = vsel %vm2546, %v2980, %v2994
        %v2996 = vrot.slane %v2957, 4
        %v2997 = vsel %vm2546, %v2981, %v2996
        %3014 = vst [vmem:[#allocation5 + $0x1c0] sm:$0xf0] %v2974
        %3015 = vst [vmem:[#allocation5 + $0x1c8] sm:$0xf0] %v2975
        %3016 = vst [vmem:[#allocation5 + $0x1d0] sm:$0xf0] %v2976
        %3017 = vst [vmem:[#allocation5 + $0x1d8] sm:$0xf0] %v2977
        %3018 = vst [vmem:[#allocation5 + $0x1e0] sm:$0xf0] %v2978
        %3019 = vst [vmem:[#allocation5 + $0x1e8] sm:$0xf0] %v2979
        %3020 = vst [vmem:[#allocation5 + $0x1f0] sm:$0xf0] %v2980
        %3021 = vst [vmem:[#allocation5 + $0x1f8] sm:$0xf0] %v2981
        %3022 = vst [vmem:[#allocation5 + $0x200] sm:$0xff] %v2983
        %3023 = vst [vmem:[#allocation5 + $0x208] sm:$0xff] %v2985
        %3024 = vst [vmem:[#allocation5 + $0x210] sm:$0xff] %v2987
        %3025 = vst [vmem:[#allocation5 + $0x218] sm:$0xff] %v2989
        %3026 = vst [vmem:[#allocation5 + $0x220] sm:$0xff] %v2991
        %3027 = vst [vmem:[#allocation5 + $0x228] sm:$0xff] %v2993
        %3028 = vst [vmem:[#allocation5 + $0x230] sm:$0xff] %v2995
        %3029 = vst [vmem:[#allocation5 + $0x238] sm:$0xff] %v2997
        %3030 = vrot.lane.b32.xlu0 %v2328, 97
        %v3031 = vpop.permute.xlu0 %3030
        %3032 = vrot.lane.b32.xlu0 %v2336, 97
        %v3033 = vpop.permute.xlu0 %3032
        %3034 = vrot.lane.b32.xlu0 %v2329, 97
        %v3035 = vpop.permute.xlu0 %3034
        %3036 = vrot.lane.b32.xlu0 %v2337, 97
        %v3037 = vpop.permute.xlu0 %3036
        %3038 = vrot.lane.b32.xlu0 %v2330, 97
        %v3039 = vpop.permute.xlu0 %3038
        %3040 = vrot.lane.b32.xlu0 %v2338, 97
        %v3041 = vpop.permute.xlu0 %3040
        %3042 = vrot.lane.b32.xlu0 %v2331, 97
        %v3043 = vpop.permute.xlu0 %3042
        %3044 = vrot.lane.b32.xlu0 %v2339, 97
        %v3045 = vpop.permute.xlu0 %3044
        %3046 = vrot.lane.b32.xlu0 %v2332, 97
        %v3047 = vpop.permute.xlu0 %3046
        %3048 = vrot.lane.b32.xlu0 %v2340, 97
        %v3049 = vpop.permute.xlu0 %3048
        %3050 = vrot.lane.b32.xlu0 %v2333, 97
        %v3051 = vpop.permute.xlu0 %3050
        %3052 = vrot.lane.b32.xlu0 %v2341, 97
        %v3053 = vpop.permute.xlu0 %3052
        %3054 = vrot.lane.b32.xlu0 %v2334, 97
        %v3055 = vpop.permute.xlu0 %3054
        %3056 = vrot.lane.b32.xlu0 %v2342, 97
        %v3057 = vpop.permute.xlu0 %3056
        %3058 = vrot.lane.b32.xlu0 %v2335, 97
        %v3059 = vpop.permute.xlu0 %3058
        %3060 = vrot.lane.b32.xlu0 %v2343, 97
        %v3061 = vpop.permute.xlu0 %3060
        %vm3062 = vcmp.lt.s32.totalorder %v2240, 97
        %v3063 = vsel %vm3062, %v3055, %v3059
        %v3064 = vsel %vm3062, %v3057, %v3061
        %v3065 = vsel %vm3062, %v3051, %v3055
        %v3066 = vsel %vm3062, %v3053, %v3057
        %v3067 = vsel %vm3062, %v3047, %v3051
        %v3068 = vsel %vm3062, %v3049, %v3053
        %v3069 = vsel %vm3062, %v3043, %v3047
        %v3070 = vsel %vm3062, %v3045, %v3049
        %v3071 = vsel %vm3062, %v3039, %v3043
        %v3072 = vsel %vm3062, %v3041, %v3045
        %v3073 = vsel %vm3062, %v3035, %v3039
        %v3074 = vsel %vm3062, %v3037, %v3041
        %v3075 = vsel %vm3062, %v3031, %v3035
        %v3076 = vsel %vm3062, %v3033, %v3037
        %v3077 = vsel %vm3062, %v3059, %v3031
        %v3078 = vsel %vm3062, %v3061, %v3033
        %vm3079 = vmand %vm2304, %vm2312
        %vm3080 = vmand %vm2305, %vm2313
        %vm3081 = vmand %vm2306, %vm2314
        %vm3082 = vmand %vm2307, %vm2315
        %vm3083 = vmand %vm2308, %vm2316
        %vm3084 = vmand %vm2309, %vm2317
        %vm3085 = vmand %vm2310, %vm2318
        %vm3086 = vmand %vm2311, %vm2319
        %v3087 = vsel %vm3079, 1, 0
        %v3088 = vsel %vm3080, 1, 0
        %v3089 = vsel %vm3081, 1, 0
        %v3090 = vsel %vm3082, 1, 0
        %v3091 = vsel %vm3083, 1, 0
        %v3092 = vsel %vm3084, 1, 0
        %v3093 = vsel %vm3085, 1, 0
        %v3094 = vsel %vm3086, 1, 0
        %vm3095 = vcmp.eq.s32.totalorder %v3087, 1
        %vm3096 = vcmp.eq.s32.totalorder %v3088, 1
        %vm3097 = vcmp.eq.s32.totalorder %v3089, 1
        %vm3098 = vcmp.eq.s32.totalorder %v3090, 1
        %vm3099 = vcmp.eq.s32.totalorder %v3091, 1
        %vm3100 = vcmp.eq.s32.totalorder %v3092, 1
        %vm3101 = vcmp.eq.s32.totalorder %v3093, 1
        %vm3102 = vcmp.eq.s32.totalorder %v3094, 1
        %v3103 = vsel %vm3095, %v3075, 0.0
        %v3104 = vsel %vm3096, %v3073, 0.0
        %v3105 = vsel %vm3097, %v3071, 0.0
        %v3106 = vsel %vm3098, %v3069, 0.0
        %v3107 = vsel %vm3099, %v3067, 0.0
        %v3108 = vsel %vm3100, %v3065, 0.0
        %v3109 = vsel %vm3101, %v3063, 0.0
        %v3110 = vsel %vm3102, %v3077, 0.0
        %v3111 = vsel %vm3095, %v3076, 0.0
        %v3112 = vsel %vm3096, %v3074, 0.0
        %v3113 = vsel %vm3097, %v3072, 0.0
        %v3114 = vsel %vm3098, %v3070, 0.0
        %v3115 = vsel %vm3099, %v3068, 0.0
        %v3116 = vsel %vm3100, %v3066, 0.0
        %v3117 = vsel %vm3101, %v3064, 0.0
        %v3118 = vsel %vm3102, %v3078, 0.0
        %3119 = vst [vmem:[#allocation5 + $0x240] sm:$0xff] %v3103
        %3120 = vst [vmem:[#allocation5 + $0x248] sm:$0xff] %v3104
        %3121 = vst [vmem:[#allocation5 + $0x250] sm:$0xff] %v3105
        %3122 = vst [vmem:[#allocation5 + $0x258] sm:$0xff] %v3106
        %3123 = vst [vmem:[#allocation5 + $0x260] sm:$0xff] %v3107
        %3124 = vst [vmem:[#allocation5 + $0x268] sm:$0xff] %v3108
        %3125 = vst [vmem:[#allocation5 + $0x270] sm:$0xff] %v3109
        %3126 = vst [vmem:[#allocation5 + $0x278] sm:$0xff] %v3110
        %3127 = vst [vmem:[#allocation5 + $0x280] sm:$0xf] %v3111
        %3128 = vst [vmem:[#allocation5 + $0x288] sm:$0xf] %v3112
        %3129 = vst [vmem:[#allocation5 + $0x290] sm:$0xf] %v3113
        %3130 = vst [vmem:[#allocation5 + $0x298] sm:$0xf] %v3114
        %3131 = vst [vmem:[#allocation5 + $0x2a0] sm:$0xf] %v3115
        %3132 = vst [vmem:[#allocation5 + $0x2a8] sm:$0xf] %v3116
        %3133 = vst [vmem:[#allocation5 + $0x2b0] sm:$0xf] %v3117
        %3134 = vst [vmem:[#allocation5 + $0x2b8] sm:$0xf] %v3118
        %3135 = vrot.lane.b32.xlu0 %v2328, 96
        %v3136 = vpop.permute.xlu0 %3135
        %3137 = vrot.lane.b32.xlu0 %v2336, 96
        %v3138 = vpop.permute.xlu0 %3137
        %3139 = vrot.lane.b32.xlu0 %v2329, 96
        %v3140 = vpop.permute.xlu0 %3139
        %3141 = vrot.lane.b32.xlu0 %v2337, 96
        %v3142 = vpop.permute.xlu0 %3141
        %3143 = vrot.lane.b32.xlu0 %v2330, 96
        %v3144 = vpop.permute.xlu0 %3143
        %3145 = vrot.lane.b32.xlu0 %v2338, 96
        %v3146 = vpop.permute.xlu0 %3145
        %3147 = vrot.lane.b32.xlu0 %v2331, 96
        %v3148 = vpop.permute.xlu0 %3147
        %3149 = vrot.lane.b32.xlu0 %v2339, 96
        %v3150 = vpop.permute.xlu0 %3149
        %3151 = vrot.lane.b32.xlu0 %v2332, 96
        %v3152 = vpop.permute.xlu0 %3151
        %3153 = vrot.lane.b32.xlu0 %v2340, 96
        %v3154 = vpop.permute.xlu0 %3153
        %3155 = vrot.lane.b32.xlu0 %v2333, 96
        %v3156 = vpop.permute.xlu0 %3155
        %3157 = vrot.lane.b32.xlu0 %v2341, 96
        %v3158 = vpop.permute.xlu0 %3157
        %3159 = vrot.lane.b32.xlu0 %v2334, 96
        %v3160 = vpop.permute.xlu0 %3159
        %3161 = vrot.lane.b32.xlu0 %v2342, 96
        %v3162 = vpop.permute.xlu0 %3161
        %3163 = vrot.lane.b32.xlu0 %v2335, 96
        %v3164 = vpop.permute.xlu0 %3163
        %3165 = vrot.lane.b32.xlu0 %v2343, 96
        %v3166 = vpop.permute.xlu0 %3165
        %vm3167 = vcmp.lt.s32.totalorder %v2240, 96
        %v3168 = vsel %vm3167, %v3160, %v3164
        %v3169 = vsel %vm3167, %v3162, %v3166
        %v3170 = vsel %vm3167, %v3156, %v3160
        %v3171 = vsel %vm3167, %v3158, %v3162
        %v3172 = vsel %vm3167, %v3152, %v3156
        %v3173 = vsel %vm3167, %v3154, %v3158
        %v3174 = vsel %vm3167, %v3148, %v3152
        %v3175 = vsel %vm3167, %v3150, %v3154
        %v3176 = vsel %vm3167, %v3144, %v3148
        %v3177 = vsel %vm3167, %v3146, %v3150
        %v3178 = vsel %vm3167, %v3140, %v3144
        %v3179 = vsel %vm3167, %v3142, %v3146
        %v3180 = vsel %vm3167, %v3136, %v3140
        %v3181 = vsel %vm3167, %v3138, %v3142
        %v3182 = vsel %vm3167, %v3164, %v3136
        %v3183 = vsel %vm3167, %v3166, %v3138
        %v3184 = vsel %vm2304, 1, 0
        %v3185 = vsel %vm2305, 1, 0
        %v3186 = vsel %vm2306, 1, 0
        %v3187 = vsel %vm2307, 1, 0
        %v3188 = vsel %vm2308, 1, 0
        %v3189 = vsel %vm2309, 1, 0
        %v3190 = vsel %vm2310, 1, 0
        %v3191 = vsel %vm2311, 1, 0
        %vm3192 = vcmp.eq.s32.totalorder %v3184, 1
        %vm3193 = vcmp.eq.s32.totalorder %v3185, 1
        %vm3194 = vcmp.eq.s32.totalorder %v3186, 1
        %vm3195 = vcmp.eq.s32.totalorder %v3187, 1
        %vm3196 = vcmp.eq.s32.totalorder %v3188, 1
        %vm3197 = vcmp.eq.s32.totalorder %v3189, 1
        %vm3198 = vcmp.eq.s32.totalorder %v3190, 1
        %vm3199 = vcmp.eq.s32.totalorder %v3191, 1
        %v3200 = vsel %vm3192, %v3180, 0.0
        %v3201 = vsel %vm3193, %v3178, 0.0
        %v3202 = vsel %vm3194, %v3176, 0.0
        %v3203 = vsel %vm3195, %v3174, 0.0
        %v3204 = vsel %vm3196, %v3172, 0.0
        %v3205 = vsel %vm3197, %v3170, 0.0
        %v3206 = vsel %vm3198, %v3168, 0.0
        %v3207 = vsel %vm3199, %v3182, 0.0
        %v3208 = vsel %vm3192, %v3181, 0.0
        %v3209 = vsel %vm3193, %v3179, 0.0
        %v3210 = vsel %vm3194, %v3177, 0.0
        %v3211 = vsel %vm3195, %v3175, 0.0
        %v3212 = vsel %vm3196, %v3173, 0.0
        %v3213 = vsel %vm3197, %v3171, 0.0
        %v3214 = vsel %vm3198, %v3169, 0.0
        %v3215 = vsel %vm3199, %v3183, 0.0
        %v3232 = vrot.slane %v3200, 4
        %v3233 = vrot.slane %v3201, 4
        %v3234 = vrot.slane %v3202, 4
        %v3235 = vrot.slane %v3203, 4
        %v3236 = vrot.slane %v3204, 4
        %v3237 = vrot.slane %v3205, 4
        %v3238 = vrot.slane %v3206, 4
        %v3239 = vrot.slane %v3207, 4
        %v3240 = vrot.slane %v3208, 4
        %v3241 = vsel %vm2546, %v3232, %v3240
        %v3242 = vrot.slane %v3209, 4
        %v3243 = vsel %vm2546, %v3233, %v3242
        %v3244 = vrot.slane %v3210, 4
        %v3245 = vsel %vm2546, %v3234, %v3244
        %v3246 = vrot.slane %v3211, 4
        %v3247 = vsel %vm2546, %v3235, %v3246
        %v3248 = vrot.slane %v3212, 4
        %v3249 = vsel %vm2546, %v3236, %v3248
        %v3250 = vrot.slane %v3213, 4
        %v3251 = vsel %vm2546, %v3237, %v3250
        %v3252 = vrot.slane %v3214, 4
        %v3253 = vsel %vm2546, %v3238, %v3252
        %v3254 = vrot.slane %v3215, 4
        %v3255 = vsel %vm2546, %v3239, %v3254
        %3272 = vst [vmem:[#allocation5 + $0x280] sm:$0xf0] %v3232
        %3273 = vst [vmem:[#allocation5 + $0x288] sm:$0xf0] %v3233
        %3274 = vst [vmem:[#allocation5 + $0x290] sm:$0xf0] %v3234
        %3275 = vst [vmem:[#allocation5 + $0x298] sm:$0xf0] %v3235
        %3276 = vst [vmem:[#allocation5 + $0x2a0] sm:$0xf0] %v3236
        %3277 = vst [vmem:[#allocation5 + $0x2a8] sm:$0xf0] %v3237
        %3278 = vst [vmem:[#allocation5 + $0x2b0] sm:$0xf0] %v3238
        %3279 = vst [vmem:[#allocation5 + $0x2b8] sm:$0xf0] %v3239
        %3280 = vst [vmem:[#allocation5 + $0x2c0] sm:$0xff] %v3241
        %3281 = vst [vmem:[#allocation5 + $0x2c8] sm:$0xff] %v3243
        %3282 = vst [vmem:[#allocation5 + $0x2d0] sm:$0xff] %v3245
        %3283 = vst [vmem:[#allocation5 + $0x2d8] sm:$0xff] %v3247
        %3284 = vst [vmem:[#allocation5 + $0x2e0] sm:$0xff] %v3249
        %3285 = vst [vmem:[#allocation5 + $0x2e8] sm:$0xff] %v3251
        %3286 = vst [vmem:[#allocation5 + $0x2f0] sm:$0xff] %v3253
        %3287 = vst [vmem:[#allocation5 + $0x2f8] sm:$0xff] %v3255
        %3288 = vrot.lane.b32.xlu0 %v2328, 95
        %v3289 = vpop.permute.xlu0 %3288
        %3290 = vrot.lane.b32.xlu0 %v2336, 95
        %v3291 = vpop.permute.xlu0 %3290
        %3292 = vrot.lane.b32.xlu0 %v2329, 95
        %v3293 = vpop.permute.xlu0 %3292
        %3294 = vrot.lane.b32.xlu0 %v2337, 95
        %v3295 = vpop.permute.xlu0 %3294
        %3296 = vrot.lane.b32.xlu0 %v2330, 95
        %v3297 = vpop.permute.xlu0 %3296
        %3298 = vrot.lane.b32.xlu0 %v2338, 95
        %v3299 = vpop.permute.xlu0 %3298
        %3300 = vrot.lane.b32.xlu0 %v2331, 95
        %v3301 = vpop.permute.xlu0 %3300
        %3302 = vrot.lane.b32.xlu0 %v2339, 95
        %v3303 = vpop.permute.xlu0 %3302
        %3304 = vrot.lane.b32.xlu0 %v2332, 95
        %v3305 = vpop.permute.xlu0 %3304
        %3306 = vrot.lane.b32.xlu0 %v2340, 95
        %v3307 = vpop.permute.xlu0 %3306
        %3308 = vrot.lane.b32.xlu0 %v2333, 95
        %v3309 = vpop.permute.xlu0 %3308
        %3310 = vrot.lane.b32.xlu0 %v2341, 95
        %v3311 = vpop.permute.xlu0 %3310
        %3312 = vrot.lane.b32.xlu0 %v2334, 95
        %v3313 = vpop.permute.xlu0 %3312
        %3314 = vrot.lane.b32.xlu0 %v2342, 95
        %v3315 = vpop.permute.xlu0 %3314
        %3316 = vrot.lane.b32.xlu0 %v2335, 95
        %v3317 = vpop.permute.xlu0 %3316
        %3318 = vrot.lane.b32.xlu0 %v2343, 95
        %v3319 = vpop.permute.xlu0 %3318
        %vm3320 = vcmp.lt.s32.totalorder %v2240, 95
        %v3321 = vsel %vm3320, %v3313, %v3317
        %v3322 = vsel %vm3320, %v3315, %v3319
        %v3323 = vsel %vm3320, %v3309, %v3313
        %v3324 = vsel %vm3320, %v3311, %v3315
        %v3325 = vsel %vm3320, %v3305, %v3309
        %v3326 = vsel %vm3320, %v3307, %v3311
        %v3327 = vsel %vm3320, %v3301, %v3305
        %v3328 = vsel %vm3320, %v3303, %v3307
        %v3329 = vsel %vm3320, %v3297, %v3301
        %v3330 = vsel %vm3320, %v3299, %v3303
        %v3331 = vsel %vm3320, %v3293, %v3297
        %v3332 = vsel %vm3320, %v3295, %v3299
        %v3333 = vsel %vm3320, %v3289, %v3293
        %v3334 = vsel %vm3320, %v3291, %v3295
        %v3335 = vsel %vm3320, %v3317, %v3289
        %v3336 = vsel %vm3320, %v3319, %v3291
        %vm3337 = vmand %vm2304, %vm2320
        %vm3338 = vmand %vm2305, %vm2321
        %vm3339 = vmand %vm2306, %vm2322
        %vm3340 = vmand %vm2307, %vm2323
        %vm3341 = vmand %vm2308, %vm2324
        %vm3342 = vmand %vm2309, %vm2325
        %vm3343 = vmand %vm2310, %vm2326
        %vm3344 = vmand %vm2311, %vm2327
        %v3345 = vsel %vm3337, 1, 0
        %v3346 = vsel %vm3338, 1, 0
        %v3347 = vsel %vm3339, 1, 0
        %v3348 = vsel %vm3340, 1, 0
        %v3349 = vsel %vm3341, 1, 0
        %v3350 = vsel %vm3342, 1, 0
        %v3351 = vsel %vm3343, 1, 0
        %v3352 = vsel %vm3344, 1, 0
        %vm3353 = vcmp.eq.s32.totalorder %v3345, 1
        %vm3354 = vcmp.eq.s32.totalorder %v3346, 1
        %vm3355 = vcmp.eq.s32.totalorder %v3347, 1
        %vm3356 = vcmp.eq.s32.totalorder %v3348, 1
        %vm3357 = vcmp.eq.s32.totalorder %v3349, 1
        %vm3358 = vcmp.eq.s32.totalorder %v3350, 1
        %vm3359 = vcmp.eq.s32.totalorder %v3351, 1
        %vm3360 = vcmp.eq.s32.totalorder %v3352, 1
        %v3361 = vsel %vm3353, %v3333, 0.0
        %v3362 = vsel %vm3354, %v3331, 0.0
        %v3363 = vsel %vm3355, %v3329, 0.0
        %v3364 = vsel %vm3356, %v3327, 0.0
        %v3365 = vsel %vm3357, %v3325, 0.0
        %v3366 = vsel %vm3358, %v3323, 0.0
        %v3367 = vsel %vm3359, %v3321, 0.0
        %v3368 = vsel %vm3360, %v3335, 0.0
        %v3369 = vsel %vm3353, %v3334, 0.0
        %v3370 = vsel %vm3354, %v3332, 0.0
        %v3371 = vsel %vm3355, %v3330, 0.0
        %v3372 = vsel %vm3356, %v3328, 0.0
        %v3373 = vsel %vm3357, %v3326, 0.0
        %v3374 = vsel %vm3358, %v3324, 0.0
        %v3375 = vsel %vm3359, %v3322, 0.0
        %v3376 = vsel %vm3360, %v3336, 0.0
        %3377 = vst [vmem:[#allocation5 + $0x300] sm:$0xff] %v3361
        %3378 = vst [vmem:[#allocation5 + $0x308] sm:$0xff] %v3362
        %3379 = vst [vmem:[#allocation5 + $0x310] sm:$0xff] %v3363
        %3380 = vst [vmem:[#allocation5 + $0x318] sm:$0xff] %v3364
        %3381 = vst [vmem:[#allocation5 + $0x320] sm:$0xff] %v3365
        %3382 = vst [vmem:[#allocation5 + $0x328] sm:$0xff] %v3366
        %3383 = vst [vmem:[#allocation5 + $0x330] sm:$0xff] %v3367
        %3384 = vst [vmem:[#allocation5 + $0x338] sm:$0xff] %v3368
        %3385 = vst [vmem:[#allocation5 + $0x340] sm:$0xf] %v3369
        %3386 = vst [vmem:[#allocation5 + $0x348] sm:$0xf] %v3370
        %3387 = vst [vmem:[#allocation5 + $0x350] sm:$0xf] %v3371
        %3388 = vst [vmem:[#allocation5 + $0x358] sm:$0xf] %v3372
        %3389 = vst [vmem:[#allocation5 + $0x360] sm:$0xf] %v3373
        %3390 = vst [vmem:[#allocation5 + $0x368] sm:$0xf] %v3374
        %3391 = vst [vmem:[#allocation5 + $0x370] sm:$0xf] %v3375
        %3392 = vst [vmem:[#allocation5 + $0x378] sm:$0xf] %v3376
        %v3393 = vld [vmem:[%s6] sm:$0xff]
        %v3394 = vld [vmem:[#allocation5] sm:$0xff]
        %v3395 = vld [vmem:[#allocation5 + $0x8] sm:$0xff]
        %v3396 = vld [vmem:[#allocation5 + $0x10] sm:$0xff]
        %v3397 = vld [vmem:[#allocation5 + $0x18] sm:$0xff]
        %v3398 = vld [vmem:[#allocation5 + $0x20] sm:$0xff]
        %v3399 = vld [vmem:[#allocation5 + $0x28] sm:$0xff]
        %v3400 = vld [vmem:[#allocation5 + $0x30] sm:$0xff]
        %v3401 = vld [vmem:[#allocation5 + $0x38] sm:$0xff]
        %v3402 = vld [vmem:[#allocation5 + $0x40] sm:$0xff]
        %v3403 = vld [vmem:[#allocation5 + $0x48] sm:$0xff]
        %v3404 = vld [vmem:[#allocation5 + $0x50] sm:$0xff]
        %v3405 = vld [vmem:[#allocation5 + $0x58] sm:$0xff]
        %v3406 = vld [vmem:[#allocation5 + $0x60] sm:$0xff]
        %v3407 = vld [vmem:[#allocation5 + $0x68] sm:$0xff]
        %v3408 = vld [vmem:[#allocation5 + $0x70] sm:$0xff]
        %v3409 = vld [vmem:[#allocation5 + $0x78] sm:$0xff]
        %v3410 = vld [vmem:[#allocation5 + $0x80] sm:$0xff]
        %v3411 = vld [vmem:[#allocation5 + $0x88] sm:$0xff]
        %v3412 = vld [vmem:[#allocation5 + $0x90] sm:$0xff]
        %v3413 = vld [vmem:[#allocation5 + $0x98] sm:$0xff]
        %v3414 = vld [vmem:[#allocation5 + $0xa0] sm:$0xff]
        %v3415 = vld [vmem:[#allocation5 + $0xa8] sm:$0xff]
        %v3416 = vld [vmem:[#allocation5 + $0xb0] sm:$0xff]
        %v3417 = vld [vmem:[#allocation5 + $0xb8] sm:$0xff]
        %v3418 = vld [vmem:[#allocation5 + $0xc0] sm:$0xff]
        %v3419 = vld [vmem:[#allocation5 + $0xc8] sm:$0xff]
        %v3420 = vld [vmem:[#allocation5 + $0xd0] sm:$0xff]
        %v3421 = vld [vmem:[#allocation5 + $0xd8] sm:$0xff]
        %v3422 = vld [vmem:[#allocation5 + $0xe0] sm:$0xff]
        %v3423 = vld [vmem:[#allocation5 + $0xe8] sm:$0xff]
        %v3424 = vld [vmem:[#allocation5 + $0xf0] sm:$0xff]
        %v3425 = vld [vmem:[#allocation5 + $0xf8] sm:$0xff]
        %v3426 = vld [vmem:[#allocation5 + $0x100] sm:$0xff]
        %v3427 = vld [vmem:[#allocation5 + $0x108] sm:$0xff]
        %v3428 = vld [vmem:[#allocation5 + $0x110] sm:$0xff]
        %v3429 = vld [vmem:[#allocation5 + $0x118] sm:$0xff]
        %v3430 = vld [vmem:[#allocation5 + $0x120] sm:$0xff]
        %v3431 = vld [vmem:[#allocation5 + $0x128] sm:$0xff]
        %v3432 = vld [vmem:[#allocation5 + $0x130] sm:$0xff]
        %v3433 = vld [vmem:[#allocation5 + $0x138] sm:$0xff]
        %v3434 = vld [vmem:[#allocation5 + $0x140] sm:$0xff]
        %v3435 = vld [vmem:[#allocation5 + $0x148] sm:$0xff]
        %v3436 = vld [vmem:[#allocation5 + $0x150] sm:$0xff]
        %v3437 = vld [vmem:[#allocation5 + $0x158] sm:$0xff]
        %v3438 = vld [vmem:[#allocation5 + $0x160] sm:$0xff]
        %v3439 = vld [vmem:[#allocation5 + $0x168] sm:$0xff]
        %v3440 = vld [vmem:[#allocation5 + $0x170] sm:$0xff]
        %v3441 = vld [vmem:[#allocation5 + $0x178] sm:$0xff]
        %v3442 = vld [vmem:[#allocation5 + $0x180] sm:$0xff]
        %v3443 = vld [vmem:[#allocation5 + $0x188] sm:$0xff]
        %v3444 = vld [vmem:[#allocation5 + $0x190] sm:$0xff]
        %v3445 = vld [vmem:[#allocation5 + $0x198] sm:$0xff]
        %v3446 = vld [vmem:[#allocation5 + $0x1a0] sm:$0xff]
        %v3447 = vld [vmem:[#allocation5 + $0x1a8] sm:$0xff]
        %v3448 = vld [vmem:[#allocation5 + $0x1b0] sm:$0xff]
        %v3449 = vld [vmem:[#allocation5 + $0x1b8] sm:$0xff]
        %v3450 = vld [vmem:[#allocation5 + $0x1c0] sm:$0xff]
        %v3451 = vld [vmem:[#allocation5 + $0x1c8] sm:$0xff]
        %v3452 = vld [vmem:[#allocation5 + $0x1d0] sm:$0xff]
        %v3453 = vld [vmem:[#allocation5 + $0x1d8] sm:$0xff]
        %v3454 = vld [vmem:[#allocation5 + $0x1e0] sm:$0xff]
        %v3455 = vld [vmem:[#allocation5 + $0x1e8] sm:$0xff]
        %v3456 = vld [vmem:[#allocation5 + $0x1f0] sm:$0xff]
        %v3457 = vld [vmem:[#allocation5 + $0x1f8] sm:$0xff]
        %v3458 = vld [vmem:[#allocation5 + $0x200] sm:$0xff]
        %v3459 = vld [vmem:[#allocation5 + $0x208] sm:$0xff]
        %v3460 = vld [vmem:[#allocation5 + $0x210] sm:$0xff]
        %v3461 = vld [vmem:[#allocation5 + $0x218] sm:$0xff]
        %v3462 = vld [vmem:[#allocation5 + $0x220] sm:$0xff]
        %v3463 = vld [vmem:[#allocation5 + $0x228] sm:$0xff]
        %v3464 = vld [vmem:[#allocation5 + $0x230] sm:$0xff]
        %v3465 = vld [vmem:[#allocation5 + $0x238] sm:$0xff]
        %v3466 = vld [vmem:[#allocation5 + $0x240] sm:$0xff]
        %v3467 = vld [vmem:[#allocation5 + $0x248] sm:$0xff]
        %v3468 = vld [vmem:[#allocation5 + $0x250] sm:$0xff]
        %v3469 = vld [vmem:[#allocation5 + $0x258] sm:$0xff]
        %v3470 = vld [vmem:[#allocation5 + $0x260] sm:$0xff]
        %v3471 = vld [vmem:[#allocation5 + $0x268] sm:$0xff]
        %v3472 = vld [vmem:[#allocation5 + $0x270] sm:$0xff]
        %v3473 = vld [vmem:[#allocation5 + $0x278] sm:$0xff]
        %v3474 = vld [vmem:[#allocation5 + $0x280] sm:$0xff]
        %v3475 = vld [vmem:[#allocation5 + $0x288] sm:$0xff]
        %v3476 = vld [vmem:[#allocation5 + $0x290] sm:$0xff]
        %v3477 = vld [vmem:[#allocation5 + $0x298] sm:$0xff]
        %v3478 = vld [vmem:[#allocation5 + $0x2a0] sm:$0xff]
        %v3479 = vld [vmem:[#allocation5 + $0x2a8] sm:$0xff]
        %v3480 = vld [vmem:[#allocation5 + $0x2b0] sm:$0xff]
        %v3481 = vld [vmem:[#allocation5 + $0x2b8] sm:$0xff]
        %v3482 = vld [vmem:[#allocation5 + $0x2c0] sm:$0xff]
        %v3483 = vld [vmem:[#allocation5 + $0x2c8] sm:$0xff]
        %v3484 = vld [vmem:[#allocation5 + $0x2d0] sm:$0xff]
        %v3485 = vld [vmem:[#allocation5 + $0x2d8] sm:$0xff]
        %v3486 = vld [vmem:[#allocation5 + $0x2e0] sm:$0xff]
        %v3487 = vld [vmem:[#allocation5 + $0x2e8] sm:$0xff]
        %v3488 = vld [vmem:[#allocation5 + $0x2f0] sm:$0xff]
        %v3489 = vld [vmem:[#allocation5 + $0x2f8] sm:$0xff]
        %v3490 = vld [vmem:[#allocation5 + $0x300] sm:$0xff]
        %v3491 = vld [vmem:[#allocation5 + $0x308] sm:$0xff]
        %v3492 = vld [vmem:[#allocation5 + $0x310] sm:$0xff]
        %v3493 = vld [vmem:[#allocation5 + $0x318] sm:$0xff]
        %v3494 = vld [vmem:[#allocation5 + $0x320] sm:$0xff]
        %v3495 = vld [vmem:[#allocation5 + $0x328] sm:$0xff]
        %v3496 = vld [vmem:[#allocation5 + $0x330] sm:$0xff]
        %v3497 = vld [vmem:[#allocation5 + $0x338] sm:$0xff]
        %v3498 = vld [vmem:[#allocation5 + $0x340] sm:$0xf]
        %v3499 = vld [vmem:[#allocation5 + $0x348] sm:$0xf]
        %v3500 = vld [vmem:[#allocation5 + $0x350] sm:$0xf]
        %v3501 = vld [vmem:[#allocation5 + $0x358] sm:$0xf]
        %v3502 = vld [vmem:[#allocation5 + $0x360] sm:$0xf]
        %v3503 = vld [vmem:[#allocation5 + $0x368] sm:$0xf]
        %v3504 = vld [vmem:[#allocation5 + $0x370] sm:$0xf]
        %v3505 = vld [vmem:[#allocation5 + $0x378] sm:$0xf]
        %v3506 = vld [vmem:[%s7] sm:$0xff]
        %3508 = vset.pattern.permute.xlu0 0
        %3509 = vperm.xlu0 %3508, %v3506
        %v3510 = vpop.permute.xlu0 %3509
        %vm3512 = vcmask 883712
        %v3514 = vsel %vm3512, %v3393, 0
        %v3517 = vsel %vm2546, %v3498, 0
        %v3520 = vsel %vm2546, %v3499, 0
        %v3523 = vsel %vm2546, %v3500, 0
        %v3526 = vsel %vm2546, %v3501, 0
        %v3529 = vsel %vm2546, %v3502, 0
        %v3532 = vsel %vm2546, %v3503, 0
        %v3535 = vsel %vm2546, %v3504, 0
        %v3538 = vsel %vm2546, %v3505, 0
        %3540 = vmatprep.subr.mxu0 %v3395
        %3541 = vmatpush1.msra.mxu0 %v3394
        %3542 = vmatprep.subr.mxu0 %v3403
        %3543 = vmatpush1.msra.mxu0 %v3402
        %3544 = vmatprep.subr.mxu0 %v3411
        %3545 = vmatpush1.msra.mxu0 %v3410
        %3546 = vmatprep.subr.mxu0 %v3419
        %3547 = vmatpush1.msra.mxu0 %v3418
        %3548 = vmatprep.subr.mxu0 %v3427
        %3549 = vmatpush1.msra.mxu0 %v3426
        %3550 = vmatprep.subr.mxu0 %v3435
        %3551 = vmatpush1.msra.mxu0 %v3434
        %3552 = vmatprep.subr.mxu0 %v3443
        %3553 = vmatpush1.msra.mxu0 %v3442
        %3554 = vmatprep.subr.mxu0 %v3451
        %3555 = vmatpush1.msra.mxu0 %v3450
        %3556 = vmatprep.subr.mxu0 %v3459
        %3557 = vmatpush1.msra.mxu0 %v3458
        %3558 = vmatprep.subr.mxu0 %v3467
        %3559 = vmatpush1.msra.mxu0 %v3466
        %3560 = vmatprep.subr.mxu0 %v3475
        %3561 = vmatpush1.msra.mxu0 %v3474
        %3562 = vmatprep.subr.mxu0 %v3483
        %3563 = vmatpush1.msra.mxu0 %v3482
        %3564 = vmatprep.subr.mxu0 %v3491
        %3565 = vmatpush1.msra.mxu0 %v3490
        %3566 = vmatprep.subr.mxu0 %v3520
        %3567 = vmatpush1.msra.mxu0 %v3517
        %3568 = vmatprep.subr.mxu0 0.0
        %3569 = vmatpush1.msra.mxu0 0.0
        %3570 = vmatprep.subr.mxu0 0.0
        %3571 = vmatpush1.msra.mxu0 0.0
        %3572 = vmatprep.subr.mxu0 0.0
        %3573 = vmatpush1.msra.mxu0 0.0
        %3574 = vmatprep.subr.mxu0 0.0
        %3575 = vmatpush1.msra.mxu0 0.0
        %3576 = vmatprep.subr.mxu0 0.0
        %3577 = vmatpush1.msra.mxu0 0.0
        %3578 = vmatprep.subr.mxu0 0.0
        %3579 = vmatpush1.msra.mxu0 0.0
        %3580 = vmatprep.subr.mxu0 0.0
        %3581 = vmatpush1.msra.mxu0 0.0
        %3582 = vmatprep.subr.mxu0 0.0
        %3583 = vmatpush1.msra.mxu0 0.0
        %3584 = vmatprep.subr.mxu0 0.0
        %3585 = vmatpush1.msra.mxu0 0.0
        %3586 = vmatprep.subr.mxu0 0.0
        %3587 = vmatpush1.msra.mxu0 0.0
        %3588 = vmatprep.subr.mxu0 0.0
        %3589 = vmatpush1.msra.mxu0 0.0
        %3590 = vmatprep.subr.mxu0 0.0
        %3591 = vmatpush1.msra.mxu0 0.0
        %3592 = vmatprep.subr.mxu0 0.0
        %3593 = vmatpush1.msra.mxu0 0.0
        %3594 = vmatprep.subr.mxu0 0.0
        %3595 = vmatpush1.msra.mxu0 0.0
        %3596 = vmatprep.subr.mxu0 0.0
        %3597 = vmatpush1.msra.mxu0 0.0
        %3598 = vmatprep.subr.mxu0 0.0
        %3599 = vmatpush1.msra.mxu0 0.0
        %3600 = vmatprep.subr.mxu0 0.0
        %3601 = vmatpush1.msra.mxu0 0.0
        %3602 = vmatprep.subr.mxu0 0.0
        %3603 = vmatpush1.msra.mxu0 0.0
        %3604 = vmatprep.mubr.f32.mxu0 0.0
        %3605 = vmatmul.mubr.f32.gmra.mrb[0].mxu0 %v3514
        %v3606 = vpop.f32.mrb[0].mxu0
        %v3607 = vadd.f32 %v3510, %v3606
        %v3608 = vpop.f32.mrb[0].mxu0
        %v3609 = vadd.f32 %v3510, %v3608
        %3610 = vdwg.mxu0
        %3611 = vmatprep.subr.mxu0 %v3397
        %3612 = vmatpush1.msra.mxu0 %v3396
        %3613 = vmatprep.subr.mxu0 %v3405
        %3614 = vmatpush1.msra.mxu0 %v3404
        %3615 = vmatprep.subr.mxu0 %v3413
        %3616 = vmatpush1.msra.mxu0 %v3412
        %3617 = vmatprep.subr.mxu0 %v3421
        %3618 = vmatpush1.msra.mxu0 %v3420
        %3619 = vmatprep.subr.mxu0 %v3429
        %3620 = vmatpush1.msra.mxu0 %v3428
        %3621 = vmatprep.subr.mxu0 %v3437
        %3622 = vmatpush1.msra.mxu0 %v3436
        %3623 = vmatprep.subr.mxu0 %v3445
        %3624 = vmatpush1.msra.mxu0 %v3444
        %3625 = vmatprep.subr.mxu0 %v3453
        %3626 = vmatpush1.msra.mxu0 %v3452
        %3627 = vmatprep.subr.mxu0 %v3461
        %3628 = vmatpush1.msra.mxu0 %v3460
        %3629 = vmatprep.subr.mxu0 %v3469
        %3630 = vmatpush1.msra.mxu0 %v3468
        %3631 = vmatprep.subr.mxu0 %v3477
        %3632 = vmatpush1.msra.mxu0 %v3476
        %3633 = vmatprep.subr.mxu0 %v3485
        %3634 = vmatpush1.msra.mxu0 %v3484
        %3635 = vmatprep.subr.mxu0 %v3493
        %3636 = vmatpush1.msra.mxu0 %v3492
        %3637 = vmatprep.subr.mxu0 %v3526
        %3638 = vmatpush1.msra.mxu0 %v3523
        %3639 = vmatprep.subr.mxu0 0.0
        %3640 = vmatpush1.msra.mxu0 0.0
        %3641 = vmatprep.subr.mxu0 0.0
        %3642 = vmatpush1.msra.mxu0 0.0
        %3643 = vmatprep.subr.mxu0 0.0
        %3644 = vmatpush1.msra.mxu0 0.0
        %3645 = vmatprep.subr.mxu0 0.0
        %3646 = vmatpush1.msra.mxu0 0.0
        %3647 = vmatprep.subr.mxu0 0.0
        %3648 = vmatpush1.msra.mxu0 0.0
        %3649 = vmatprep.subr.mxu0 0.0
        %3650 = vmatpush1.msra.mxu0 0.0
        %3651 = vmatprep.subr.mxu0 0.0
        %3652 = vmatpush1.msra.mxu0 0.0
        %3653 = vmatprep.subr.mxu0 0.0
        %3654 = vmatpush1.msra.mxu0 0.0
        %3655 = vmatprep.subr.mxu0 0.0
        %3656 = vmatpush1.msra.mxu0 0.0
        %3657 = vmatprep.subr.mxu0 0.0
        %3658 = vmatpush1.msra.mxu0 0.0
        %3659 = vmatprep.subr.mxu0 0.0
        %3660 = vmatpush1.msra.mxu0 0.0
        %3661 = vmatprep.subr.mxu0 0.0
        %3662 = vmatpush1.msra.mxu0 0.0
        %3663 = vmatprep.subr.mxu0 0.0
        %3664 = vmatpush1.msra.mxu0 0.0
        %3665 = vmatprep.subr.mxu0 0.0
        %3666 = vmatpush1.msra.mxu0 0.0
        %3667 = vmatprep.subr.mxu0 0.0
        %3668 = vmatpush1.msra.mxu0 0.0
        %3669 = vmatprep.subr.mxu0 0.0
        %3670 = vmatpush1.msra.mxu0 0.0
        %3671 = vmatprep.subr.mxu0 0.0
        %3672 = vmatpush1.msra.mxu0 0.0
        %3673 = vmatprep.subr.mxu0 0.0
        %3674 = vmatpush1.msra.mxu0 0.0
        %3675 = vmatprep.mubr.f32.mxu0 0.0
        %3676 = vmatmul.mubr.f32.gmra.mrb[0].mxu0 %v3514
        %v3677 = vpop.f32.mrb[0].mxu0
        %v3678 = vadd.f32 %v3510, %v3677
        %v3679 = vpop.f32.mrb[0].mxu0
        %v3680 = vadd.f32 %v3510, %v3679
        %3681 = vdwg.mxu0
        %3682 = vmatprep.subr.mxu0 %v3399
        %3683 = vmatpush1.msra.mxu0 %v3398
        %3684 = vmatprep.subr.mxu0 %v3407
        %3685 = vmatpush1.msra.mxu0 %v3406
        %3686 = vmatprep.subr.mxu0 %v3415
        %3687 = vmatpush1.msra.mxu0 %v3414
        %3688 = vmatprep.subr.mxu0 %v3423
        %3689 = vmatpush1.msra.mxu0 %v3422
        %3690 = vmatprep.subr.mxu0 %v3431
        %3691 = vmatpush1.msra.mxu0 %v3430
        %3692 = vmatprep.subr.mxu0 %v3439
        %3693 = vmatpush1.msra.mxu0 %v3438
        %3694 = vmatprep.subr.mxu0 %v3447
        %3695 = vmatpush1.msra.mxu0 %v3446
        %3696 = vmatprep.subr.mxu0 %v3455
        %3697 = vmatpush1.msra.mxu0 %v3454
        %3698 = vmatprep.subr.mxu0 %v3463
        %3699 = vmatpush1.msra.mxu0 %v3462
        %3700 = vmatprep.subr.mxu0 %v3471
        %3701 = vmatpush1.msra.mxu0 %v3470
        %3702 = vmatprep.subr.mxu0 %v3479
        %3703 = vmatpush1.msra.mxu0 %v3478
        %3704 = vmatprep.subr.mxu0 %v3487
        %3705 = vmatpush1.msra.mxu0 %v3486
        %3706 = vmatprep.subr.mxu0 %v3495
        %3707 = vmatpush1.msra.mxu0 %v3494
        %3708 = vmatprep.subr.mxu0 %v3532
        %3709 = vmatpush1.msra.mxu0 %v3529
        %3710 = vmatprep.subr.mxu0 0.0
        %3711 = vmatpush1.msra.mxu0 0.0
        %3712 = vmatprep.subr.mxu0 0.0
        %3713 = vmatpush1.msra.mxu0 0.0
        %3714 = vmatprep.subr.mxu0 0.0
        %3715 = vmatpush1.msra.mxu0 0.0
        %3716 = vmatprep.subr.mxu0 0.0
        %3717 = vmatpush1.msra.mxu0 0.0
        %3718 = vmatprep.subr.mxu0 0.0
        %3719 = vmatpush1.msra.mxu0 0.0
        %3720 = vmatprep.subr.mxu0 0.0
        %3721 = vmatpush1.msra.mxu0 0.0
        %3722 = vmatprep.subr.mxu0 0.0
        %3723 = vmatpush1.msra.mxu0 0.0
        %3724 = vmatprep.subr.mxu0 0.0
        %3725 = vmatpush1.msra.mxu0 0.0
        %3726 = vmatprep.subr.mxu0 0.0
        %3727 = vmatpush1.msra.mxu0 0.0
        %3728 = vmatprep.subr.mxu0 0.0
        %3729 = vmatpush1.msra.mxu0 0.0
        %3730 = vmatprep.subr.mxu0 0.0
        %3731 = vmatpush1.msra.mxu0 0.0
        %3732 = vmatprep.subr.mxu0 0.0
        %3733 = vmatpush1.msra.mxu0 0.0
        %3734 = vmatprep.subr.mxu0 0.0
        %3735 = vmatpush1.msra.mxu0 0.0
        %3736 = vmatprep.subr.mxu0 0.0
        %3737 = vmatpush1.msra.mxu0 0.0
        %3738 = vmatprep.subr.mxu0 0.0
        %3739 = vmatpush1.msra.mxu0 0.0
        %3740 = vmatprep.subr.mxu0 0.0
        %3741 = vmatpush1.msra.mxu0 0.0
        %3742 = vmatprep.subr.mxu0 0.0
        %3743 = vmatpush1.msra.mxu0 0.0
        %3744 = vmatprep.subr.mxu0 0.0
        %3745 = vmatpush1.msra.mxu0 0.0
        %3746 = vmatprep.mubr.f32.mxu0 0.0
        %3747 = vmatmul.mubr.f32.gmra.mrb[0].mxu0 %v3514
        %v3748 = vpop.f32.mrb[0].mxu0
        %v3749 = vadd.f32 %v3510, %v3748
        %v3750 = vpop.f32.mrb[0].mxu0
        %v3751 = vadd.f32 %v3510, %v3750
        %3752 = vdwg.mxu0
        %3753 = vmatprep.subr.mxu0 %v3401
        %3754 = vmatpush1.msra.mxu0 %v3400
        %3755 = vmatprep.subr.mxu0 %v3409
        %3756 = vmatpush1.msra.mxu0 %v3408
        %3757 = vmatprep.subr.mxu0 %v3417
        %3758 = vmatpush1.msra.mxu0 %v3416
        %3759 = vmatprep.subr.mxu0 %v3425
        %3760 = vmatpush1.msra.mxu0 %v3424
        %3761 = vmatprep.subr.mxu0 %v3433
        %3762 = vmatpush1.msra.mxu0 %v3432
        %3763 = vmatprep.subr.mxu0 %v3441
        %3764 = vmatpush1.msra.mxu0 %v3440
        %3765 = vmatprep.subr.mxu0 %v3449
        %3766 = vmatpush1.msra.mxu0 %v3448
        %3767 = vmatprep.subr.mxu0 %v3457
        %3768 = vmatpush1.msra.mxu0 %v3456
        %3769 = vmatprep.subr.mxu0 %v3465
        %3770 = vmatpush1.msra.mxu0 %v3464
        %3771 = vmatprep.subr.mxu0 %v3473
        %3772 = vmatpush1.msra.mxu0 %v3472
        %3773 = vmatprep.subr.mxu0 %v3481
        %3774 = vmatpush1.msra.mxu0 %v3480
        %3775 = vmatprep.subr.mxu0 %v3489
        %3776 = vmatpush1.msra.mxu0 %v3488
        %3777 = vmatprep.subr.mxu0 %v3497
        %3778 = vmatpush1.msra.mxu0 %v3496
        %3779 = vmatprep.subr.mxu0 %v3538
        %3780 = vmatpush1.msra.mxu0 %v3535
        %3781 = vmatprep.subr.mxu0 0.0
        %3782 = vmatpush1.msra.mxu0 0.0
        %3783 = vmatprep.subr.mxu0 0.0
        %3784 = vmatpush1.msra.mxu0 0.0
        %3785 = vmatprep.subr.mxu0 0.0
        %3786 = vmatpush1.msra.mxu0 0.0
        %3787 = vmatprep.subr.mxu0 0.0
        %3788 = vmatpush1.msra.mxu0 0.0
        %3789 = vmatprep.subr.mxu0 0.0
        %3790 = vmatpush1.msra.mxu0 0.0
        %3791 = vmatprep.subr.mxu0 0.0
        %3792 = vmatpush1.msra.mxu0 0.0
        %3793 = vmatprep.subr.mxu0 0.0
        %3794 = vmatpush1.msra.mxu0 0.0
        %3795 = vmatprep.subr.mxu0 0.0
        %3796 = vmatpush1.msra.mxu0 0.0
        %3797 = vmatprep.subr.mxu0 0.0
        %3798 = vmatpush1.msra.mxu0 0.0
        %3799 = vmatprep.subr.mxu0 0.0
        %3800 = vmatpush1.msra.mxu0 0.0
        %3801 = vmatprep.subr.mxu0 0.0
        %3802 = vmatpush1.msra.mxu0 0.0
        %3803 = vmatprep.subr.mxu0 0.0
        %3804 = vmatpush1.msra.mxu0 0.0
        %3805 = vmatprep.subr.mxu0 0.0
        %3806 = vmatpush1.msra.mxu0 0.0
        %3807 = vmatprep.subr.mxu0 0.0
        %3808 = vmatpush1.msra.mxu0 0.0
        %3809 = vmatprep.subr.mxu0 0.0
        %3810 = vmatpush1.msra.mxu0 0.0
        %3811 = vmatprep.subr.mxu0 0.0
        %3812 = vmatpush1.msra.mxu0 0.0
        %3813 = vmatprep.subr.mxu0 0.0
        %3814 = vmatpush1.msra.mxu0 0.0
        %3815 = vmatprep.subr.mxu0 0.0
        %3816 = vmatpush1.msra.mxu0 0.0
        %3817 = vmatprep.mubr.f32.mxu0 0.0
        %3818 = vmatmul.mubr.f32.gmra.mrb[0].mxu0 %v3514
        %v3819 = vpop.f32.mrb[0].mxu0
        %v3820 = vadd.f32 %v3510, %v3819
        %v3821 = vpop.f32.mrb[0].mxu0
        %v3822 = vadd.f32 %v3510, %v3821
        %3823 = vdwg.mxu0
        %vm3824 = vcmp.gt.f32.partialorder %v3607, 0.0
        %vm3825 = vcmp.gt.f32.partialorder %v3609, 0.0
        %vm3826 = vcmp.gt.f32.partialorder %v3678, 0.0
        %vm3827 = vcmp.gt.f32.partialorder %v3680, 0.0
        %vm3828 = vcmp.gt.f32.partialorder %v3749, 0.0
        %vm3829 = vcmp.gt.f32.partialorder %v3751, 0.0
        %vm3830 = vcmp.gt.f32.partialorder %v3820, 0.0
        %vm3831 = vcmp.gt.f32.partialorder %v3822, 0.0
        %v3832 = vmul.f32 %v3607, 0.01
        %v3833 = vmul.f32 %v3609, 0.01
        %v3834 = vmul.f32 %v3678, 0.01
        %v3835 = vmul.f32 %v3680, 0.01
        %v3836 = vmul.f32 %v3749, 0.01
        %v3837 = vmul.f32 %v3751, 0.01
        %v3838 = vmul.f32 %v3820, 0.01
        %v3839 = vmul.f32 %v3822, 0.01
        %v3840 = vsel %vm3824, %v3607, %v3832
        %v3841 = vsel %vm3825, %v3609, %v3833
        %v3842 = vsel %vm3826, %v3678, %v3834
        %v3843 = vsel %vm3827, %v3680, %v3835
        %v3844 = vsel %vm3828, %v3749, %v3836
        %v3845 = vsel %vm3829, %v3751, %v3837
        %v3846 = vsel %vm3830, %v3820, %v3838
        %v3847 = vsel %vm3831, %v3822, %v3839
        %3848 = vrot.lane.b32.xlu0 %v3840, 33
        %v3849 = vpop.permute.xlu0 %3848
        %3850 = vrot.lane.b32.xlu0 %v3841, 33
        %v3851 = vpop.permute.xlu0 %3850
        %3852 = vrot.lane.b32.xlu0 %v3842, 33
        %v3853 = vpop.permute.xlu0 %3852
        %3854 = vrot.lane.b32.xlu0 %v3843, 33
        %v3855 = vpop.permute.xlu0 %3854
        %3856 = vrot.lane.b32.xlu0 %v3844, 33
        %v3857 = vpop.permute.xlu0 %3856
        %3858 = vrot.lane.b32.xlu0 %v3845, 33
        %v3859 = vpop.permute.xlu0 %3858
        %3860 = vrot.lane.b32.xlu0 %v3846, 33
        %v3861 = vpop.permute.xlu0 %3860
        %3862 = vrot.lane.b32.xlu0 %v3847, 33
        %v3863 = vpop.permute.xlu0 %3862
        %v3864 = vsel %vm2376, %v3861, %v3863
        %v3865 = vsel %vm2376, %v3859, %v3861
        %v3866 = vsel %vm2376, %v3857, %v3859
        %v3867 = vsel %vm2376, %v3855, %v3857
        %v3868 = vsel %vm2376, %v3853, %v3855
        %v3869 = vsel %vm2376, %v3851, %v3853
        %v3870 = vsel %vm2376, %v3849, %v3851
        %v3871 = vsel %vm2376, %v3863, %v3849
        %v3872 = vsel %vm2409, %v3871, 0.0
        %v3873 = vsel %vm2410, %v3870, 0.0
        %v3874 = vsel %vm2411, %v3869, 0.0
        %v3875 = vsel %vm2412, %v3868, 0.0
        %v3876 = vsel %vm2413, %v3867, 0.0
        %v3877 = vsel %vm2414, %v3866, 0.0
        %v3878 = vsel %vm2415, %v3865, 0.0
        %v3879 = vsel %vm2416, %v3864, 0.0
        %3880 = vst [vmem:[#allocation5] sm:$0xff] %v3872
        %3881 = vst [vmem:[#allocation5 + $0x8] sm:$0xff] %v3873
        %3882 = vst [vmem:[#allocation5 + $0x10] sm:$0xff] %v3874
        %3883 = vst [vmem:[#allocation5 + $0x18] sm:$0xff] %v3875
        %3884 = vst [vmem:[#allocation5 + $0x20] sm:$0xff] %v3876
        %3885 = vst [vmem:[#allocation5 + $0x28] sm:$0xff] %v3877
        %3886 = vst [vmem:[#allocation5 + $0x30] sm:$0xff] %v3878
        %3887 = vst [vmem:[#allocation5 + $0x38] sm:$0xff] %v3879
        %3888 = vrot.lane.b32.xlu0 %v3840, 32
        %v3889 = vpop.permute.xlu0 %3888
        %3890 = vrot.lane.b32.xlu0 %v3841, 32
        %v3891 = vpop.permute.xlu0 %3890
        %3892 = vrot.lane.b32.xlu0 %v3842, 32
        %v3893 = vpop.permute.xlu0 %3892
        %3894 = vrot.lane.b32.xlu0 %v3843, 32
        %v3895 = vpop.permute.xlu0 %3894
        %3896 = vrot.lane.b32.xlu0 %v3844, 32
        %v3897 = vpop.permute.xlu0 %3896
        %3898 = vrot.lane.b32.xlu0 %v3845, 32
        %v3899 = vpop.permute.xlu0 %3898
        %3900 = vrot.lane.b32.xlu0 %v3846, 32
        %v3901 = vpop.permute.xlu0 %3900
        %3902 = vrot.lane.b32.xlu0 %v3847, 32
        %v3903 = vpop.permute.xlu0 %3902
        %v3904 = vsel %vm2481, %v3901, %v3903
        %v3905 = vsel %vm2481, %v3899, %v3901
        %v3906 = vsel %vm2481, %v3897, %v3899
        %v3907 = vsel %vm2481, %v3895, %v3897
        %v3908 = vsel %vm2481, %v3893, %v3895
        %v3909 = vsel %vm2481, %v3891, %v3893
        %v3910 = vsel %vm2481, %v3889, %v3891
        %v3911 = vsel %vm2481, %v3903, %v3889
        %v3912 = vsel %vm2506, %v3911, 0.0
        %v3913 = vsel %vm2507, %v3910, 0.0
        %v3914 = vsel %vm2508, %v3909, 0.0
        %v3915 = vsel %vm2509, %v3908, 0.0
        %v3916 = vsel %vm2510, %v3907, 0.0
        %v3917 = vsel %vm2511, %v3906, 0.0
        %v3918 = vsel %vm2512, %v3905, 0.0
        %v3919 = vsel %vm2513, %v3904, 0.0
        %3920 = vst [vmem:[#allocation5 + $0x40] sm:$0xff] %v3912
        %3921 = vst [vmem:[#allocation5 + $0x48] sm:$0xff] %v3913
        %3922 = vst [vmem:[#allocation5 + $0x50] sm:$0xff] %v3914
        %3923 = vst [vmem:[#allocation5 + $0x58] sm:$0xff] %v3915
        %3924 = vst [vmem:[#allocation5 + $0x60] sm:$0xff] %v3916
        %3925 = vst [vmem:[#allocation5 + $0x68] sm:$0xff] %v3917
        %3926 = vst [vmem:[#allocation5 + $0x70] sm:$0xff] %v3918
        %3927 = vst [vmem:[#allocation5 + $0x78] sm:$0xff] %v3919
        %3928 = vrot.lane.b32.xlu0 %v3840, 31
        %v3929 = vpop.permute.xlu0 %3928
        %3930 = vrot.lane.b32.xlu0 %v3841, 31
        %v3931 = vpop.permute.xlu0 %3930
        %3932 = vrot.lane.b32.xlu0 %v3842, 31
        %v3933 = vpop.permute.xlu0 %3932
        %3934 = vrot.lane.b32.xlu0 %v3843, 31
        %v3935 = vpop.permute.xlu0 %3934
        %3936 = vrot.lane.b32.xlu0 %v3844, 31
        %v3937 = vpop.permute.xlu0 %3936
        %3938 = vrot.lane.b32.xlu0 %v3845, 31
        %v3939 = vpop.permute.xlu0 %3938
        %3940 = vrot.lane.b32.xlu0 %v3846, 31
        %v3941 = vpop.permute.xlu0 %3940
        %3942 = vrot.lane.b32.xlu0 %v3847, 31
        %v3943 = vpop.permute.xlu0 %3942
        %v3944 = vsel %vm2635, %v3941, %v3943
        %v3945 = vsel %vm2635, %v3939, %v3941
        %v3946 = vsel %vm2635, %v3937, %v3939
        %v3947 = vsel %vm2635, %v3935, %v3937
        %v3948 = vsel %vm2635, %v3933, %v3935
        %v3949 = vsel %vm2635, %v3931, %v3933
        %v3950 = vsel %vm2635, %v3929, %v3931
        %v3951 = vsel %vm2635, %v3943, %v3929
        %v3952 = vsel %vm2668, %v3951, 0.0
        %v3953 = vsel %vm2669, %v3950, 0.0
        %v3954 = vsel %vm2670, %v3949, 0.0
        %v3955 = vsel %vm2671, %v3948, 0.0
        %v3956 = vsel %vm2672, %v3947, 0.0
        %v3957 = vsel %vm2673, %v3946, 0.0
        %v3958 = vsel %vm2674, %v3945, 0.0
        %v3959 = vsel %vm2675, %v3944, 0.0
        %3960 = vst [vmem:[#allocation5 + $0x80] sm:$0xff] %v3952
        %3961 = vst [vmem:[#allocation5 + $0x88] sm:$0xff] %v3953
        %3962 = vst [vmem:[#allocation5 + $0x90] sm:$0xff] %v3954
        %3963 = vst [vmem:[#allocation5 + $0x98] sm:$0xff] %v3955
        %3964 = vst [vmem:[#allocation5 + $0xa0] sm:$0xff] %v3956
        %3965 = vst [vmem:[#allocation5 + $0xa8] sm:$0xff] %v3957
        %3966 = vst [vmem:[#allocation5 + $0xb0] sm:$0xff] %v3958
        %3967 = vst [vmem:[#allocation5 + $0xb8] sm:$0xff] %v3959
        %3968 = vrot.lane.b32.xlu0 %v3840, 1
        %v3969 = vpop.permute.xlu0 %3968
        %3970 = vrot.lane.b32.xlu0 %v3841, 1
        %v3971 = vpop.permute.xlu0 %3970
        %3972 = vrot.lane.b32.xlu0 %v3842, 1
        %v3973 = vpop.permute.xlu0 %3972
        %3974 = vrot.lane.b32.xlu0 %v3843, 1
        %v3975 = vpop.permute.xlu0 %3974
        %3976 = vrot.lane.b32.xlu0 %v3844, 1
        %v3977 = vpop.permute.xlu0 %3976
        %3978 = vrot.lane.b32.xlu0 %v3845, 1
        %v3979 = vpop.permute.xlu0 %3978
        %3980 = vrot.lane.b32.xlu0 %v3846, 1
        %v3981 = vpop.permute.xlu0 %3980
        %3982 = vrot.lane.b32.xlu0 %v3847, 1
        %v3983 = vpop.permute.xlu0 %3982
        %v3984 = vsel %vm2740, %v3981, %v3983
        %v3985 = vsel %vm2740, %v3979, %v3981
        %v3986 = vsel %vm2740, %v3977, %v3979
        %v3987 = vsel %vm2740, %v3975, %v3977
        %v3988 = vsel %vm2740, %v3973, %v3975
        %v3989 = vsel %vm2740, %v3971, %v3973
        %v3990 = vsel %vm2740, %v3969, %v3971
        %v3991 = vsel %vm2740, %v3983, %v3969
        %v3992 = vsel %vm2765, %v3991, 0.0
        %v3993 = vsel %vm2766, %v3990, 0.0
        %v3994 = vsel %vm2767, %v3989, 0.0
        %v3995 = vsel %vm2768, %v3988, 0.0
        %v3996 = vsel %vm2769, %v3987, 0.0
        %v3997 = vsel %vm2770, %v3986, 0.0
        %v3998 = vsel %vm2771, %v3985, 0.0
        %v3999 = vsel %vm2772, %v3984, 0.0
        %4000 = vst [vmem:[#allocation5 + $0xc0] sm:$0xff] %v3992
        %4001 = vst [vmem:[#allocation5 + $0xc8] sm:$0xff] %v3993
        %4002 = vst [vmem:[#allocation5 + $0xd0] sm:$0xff] %v3994
        %4003 = vst [vmem:[#allocation5 + $0xd8] sm:$0xff] %v3995
        %4004 = vst [vmem:[#allocation5 + $0xe0] sm:$0xff] %v3996
        %4005 = vst [vmem:[#allocation5 + $0xe8] sm:$0xff] %v3997
        %4006 = vst [vmem:[#allocation5 + $0xf0] sm:$0xff] %v3998
        %4007 = vst [vmem:[#allocation5 + $0xf8] sm:$0xff] %v3999
        %4008 = vst [vmem:[#allocation5 + $0x100] sm:$0xff] %v3840
        %4009 = vst [vmem:[#allocation5 + $0x108] sm:$0xff] %v3841
        %4010 = vst [vmem:[#allocation5 + $0x110] sm:$0xff] %v3842
        %4011 = vst [vmem:[#allocation5 + $0x118] sm:$0xff] %v3843
        %4012 = vst [vmem:[#allocation5 + $0x120] sm:$0xff] %v3844
        %4013 = vst [vmem:[#allocation5 + $0x128] sm:$0xff] %v3845
        %4014 = vst [vmem:[#allocation5 + $0x130] sm:$0xff] %v3846
        %4015 = vst [vmem:[#allocation5 + $0x138] sm:$0xff] %v3847
        %4016 = vrot.lane.b32.xlu0 %v3840, 127
        %v4017 = vpop.permute.xlu0 %4016
        %4018 = vrot.lane.b32.xlu0 %v3841, 127
        %v4019 = vpop.permute.xlu0 %4018
        %4020 = vrot.lane.b32.xlu0 %v3842, 127
        %v4021 = vpop.permute.xlu0 %4020
        %4022 = vrot.lane.b32.xlu0 %v3843, 127
        %v4023 = vpop.permute.xlu0 %4022
        %4024 = vrot.lane.b32.xlu0 %v3844, 127
        %v4025 = vpop.permute.xlu0 %4024
        %4026 = vrot.lane.b32.xlu0 %v3845, 127
        %v4027 = vpop.permute.xlu0 %4026
        %4028 = vrot.lane.b32.xlu0 %v3846, 127
        %v4029 = vpop.permute.xlu0 %4028
        %4030 = vrot.lane.b32.xlu0 %v3847, 127
        %v4031 = vpop.permute.xlu0 %4030
        %v4032 = vsel %vm2909, %v4029, %v4031
        %v4033 = vsel %vm2909, %v4027, %v4029
        %v4034 = vsel %vm2909, %v4025, %v4027
        %v4035 = vsel %vm2909, %v4023, %v4025
        %v4036 = vsel %vm2909, %v4021, %v4023
        %v4037 = vsel %vm2909, %v4019, %v4021
        %v4038 = vsel %vm2909, %v4017, %v4019
        %v4039 = vsel %vm2909, %v4031, %v4017
        %v4040 = vsel %vm2934, %v4038, 0.0
        %v4041 = vsel %vm2935, %v4037, 0.0
        %v4042 = vsel %vm2936, %v4036, 0.0
        %v4043 = vsel %vm2937, %v4035, 0.0
        %v4044 = vsel %vm2938, %v4034, 0.0
        %v4045 = vsel %vm2939, %v4033, 0.0
        %v4046 = vsel %vm2940, %v4032, 0.0
        %v4047 = vsel %vm2941, %v4039, 0.0
        %4048 = vst [vmem:[#allocation5 + $0x140] sm:$0xff] %v4040
        %4049 = vst [vmem:[#allocation5 + $0x148] sm:$0xff] %v4041
        %4050 = vst [vmem:[#allocation5 + $0x150] sm:$0xff] %v4042
        %4051 = vst [vmem:[#allocation5 + $0x158] sm:$0xff] %v4043
        %4052 = vst [vmem:[#allocation5 + $0x160] sm:$0xff] %v4044
        %4053 = vst [vmem:[#allocation5 + $0x168] sm:$0xff] %v4045
        %4054 = vst [vmem:[#allocation5 + $0x170] sm:$0xff] %v4046
        %4055 = vst [vmem:[#allocation5 + $0x178] sm:$0xff] %v4047
        %4056 = vrot.lane.b32.xlu0 %v3840, 97
        %v4057 = vpop.permute.xlu0 %4056
        %4058 = vrot.lane.b32.xlu0 %v3841, 97
        %v4059 = vpop.permute.xlu0 %4058
        %4060 = vrot.lane.b32.xlu0 %v3842, 97
        %v4061 = vpop.permute.xlu0 %4060
        %4062 = vrot.lane.b32.xlu0 %v3843, 97
        %v4063 = vpop.permute.xlu0 %4062
        %4064 = vrot.lane.b32.xlu0 %v3844, 97
        %v4065 = vpop.permute.xlu0 %4064
        %4066 = vrot.lane.b32.xlu0 %v3845, 97
        %v4067 = vpop.permute.xlu0 %4066
        %4068 = vrot.lane.b32.xlu0 %v3846, 97
        %v4069 = vpop.permute.xlu0 %4068
        %4070 = vrot.lane.b32.xlu0 %v3847, 97
        %v4071 = vpop.permute.xlu0 %4070
        %v4072 = vsel %vm3062, %v4069, %v4071
        %v4073 = vsel %vm3062, %v4067, %v4069
        %v4074 = vsel %vm3062, %v4065, %v4067
        %v4075 = vsel %vm3062, %v4063, %v4065
        %v4076 = vsel %vm3062, %v4061, %v4063
        %v4077 = vsel %vm3062, %v4059, %v4061
        %v4078 = vsel %vm3062, %v4057, %v4059
        %v4079 = vsel %vm3062, %v4071, %v4057
        %v4080 = vsel %vm3095, %v4078, 0.0
        %v4081 = vsel %vm3096, %v4077, 0.0
        %v4082 = vsel %vm3097, %v4076, 0.0
        %v4083 = vsel %vm3098, %v4075, 0.0
        %v4084 = vsel %vm3099, %v4074, 0.0
        %v4085 = vsel %vm3100, %v4073, 0.0
        %v4086 = vsel %vm3101, %v4072, 0.0
        %v4087 = vsel %vm3102, %v4079, 0.0
        %4088 = vst [vmem:[#allocation5 + $0x180] sm:$0xff] %v4080
        %4089 = vst [vmem:[#allocation5 + $0x188] sm:$0xff] %v4081
        %4090 = vst [vmem:[#allocation5 + $0x190] sm:$0xff] %v4082
        %4091 = vst [vmem:[#allocation5 + $0x198] sm:$0xff] %v4083
        %4092 = vst [vmem:[#allocation5 + $0x1a0] sm:$0xff] %v4084
        %4093 = vst [vmem:[#allocation5 + $0x1a8] sm:$0xff] %v4085
        %4094 = vst [vmem:[#allocation5 + $0x1b0] sm:$0xff] %v4086
        %4095 = vst [vmem:[#allocation5 + $0x1b8] sm:$0xff] %v4087
        %4096 = vrot.lane.b32.xlu0 %v3840, 96
        %v4097 = vpop.permute.xlu0 %4096
        %4098 = vrot.lane.b32.xlu0 %v3841, 96
        %v4099 = vpop.permute.xlu0 %4098
        %4100 = vrot.lane.b32.xlu0 %v3842, 96
        %v4101 = vpop.permute.xlu0 %4100
        %4102 = vrot.lane.b32.xlu0 %v3843, 96
        %v4103 = vpop.permute.xlu0 %4102
        %4104 = vrot.lane.b32.xlu0 %v3844, 96
        %v4105 = vpop.permute.xlu0 %4104
        %4106 = vrot.lane.b32.xlu0 %v3845, 96
        %v4107 = vpop.permute.xlu0 %4106
        %4108 = vrot.lane.b32.xlu0 %v3846, 96
        %v4109 = vpop.permute.xlu0 %4108
        %4110 = vrot.lane.b32.xlu0 %v3847, 96
        %v4111 = vpop.permute.xlu0 %4110
        %v4112 = vsel %vm3167, %v4109, %v4111
        %v4113 = vsel %vm3167, %v4107, %v4109
        %v4114 = vsel %vm3167, %v4105, %v4107
        %v4115 = vsel %vm3167, %v4103, %v4105
        %v4116 = vsel %vm3167, %v4101, %v4103
        %v4117 = vsel %vm3167, %v4099, %v4101
        %v4118 = vsel %vm3167, %v4097, %v4099
        %v4119 = vsel %vm3167, %v4111, %v4097
        %v4120 = vsel %vm3192, %v4118, 0.0
        %v4121 = vsel %vm3193, %v4117, 0.0
        %v4122 = vsel %vm3194, %v4116, 0.0
        %v4123 = vsel %vm3195, %v4115, 0.0
        %v4124 = vsel %vm3196, %v4114, 0.0
        %v4125 = vsel %vm3197, %v4113, 0.0
        %v4126 = vsel %vm3198, %v4112, 0.0
        %v4127 = vsel %vm3199, %v4119, 0.0
        %4128 = vst [vmem:[#allocation5 + $0x1c0] sm:$0xff] %v4120
        %4129 = vst [vmem:[#allocation5 + $0x1c8] sm:$0xff] %v4121
        %4130 = vst [vmem:[#allocation5 + $0x1d0] sm:$0xff] %v4122
        %4131 = vst [vmem:[#allocation5 + $0x1d8] sm:$0xff] %v4123
        %4132 = vst [vmem:[#allocation5 + $0x1e0] sm:$0xff] %v4124
        %4133 = vst [vmem:[#allocation5 + $0x1e8] sm:$0xff] %v4125
        %4134 = vst [vmem:[#allocation5 + $0x1f0] sm:$0xff] %v4126
        %4135 = vst [vmem:[#allocation5 + $0x1f8] sm:$0xff] %v4127
        %4136 = vrot.lane.b32.xlu0 %v3840, 95
        %v4137 = vpop.permute.xlu0 %4136
        %4138 = vrot.lane.b32.xlu0 %v3841, 95
        %v4139 = vpop.permute.xlu0 %4138
        %4140 = vrot.lane.b32.xlu0 %v3842, 95
        %v4141 = vpop.permute.xlu0 %4140
        %4142 = vrot.lane.b32.xlu0 %v3843, 95
        %v4143 = vpop.permute.xlu0 %4142
        %4144 = vrot.lane.b32.xlu0 %v3844, 95
        %v4145 = vpop.permute.xlu0 %4144
        %4146 = vrot.lane.b32.xlu0 %v3845, 95
        %v4147 = vpop.permute.xlu0 %4146
        %4148 = vrot.lane.b32.xlu0 %v3846, 95
        %v4149 = vpop.permute.xlu0 %4148
        %4150 = vrot.lane.b32.xlu0 %v3847, 95
        %v4151 = vpop.permute.xlu0 %4150
        %v4152 = vsel %vm3320, %v4149, %v4151
        %v4153 = vsel %vm3320, %v4147, %v4149
        %v4154 = vsel %vm3320, %v4145, %v4147
        %v4155 = vsel %vm3320, %v4143, %v4145
        %v4156 = vsel %vm3320, %v4141, %v4143
        %v4157 = vsel %vm3320, %v4139, %v4141
        %v4158 = vsel %vm3320, %v4137, %v4139
        %v4159 = vsel %vm3320, %v4151, %v4137
        %v4160 = vsel %vm3353, %v4158, 0.0
        %v4161 = vsel %vm3354, %v4157, 0.0
        %v4162 = vsel %vm3355, %v4156, 0.0
        %v4163 = vsel %vm3356, %v4155, 0.0
        %v4164 = vsel %vm3357, %v4154, 0.0
        %v4165 = vsel %vm3358, %v4153, 0.0
        %v4166 = vsel %vm3359, %v4152, 0.0
        %v4167 = vsel %vm3360, %v4159, 0.0
        %4168 = vst [vmem:[#allocation5 + $0x200] sm:$0xff] %v4160
        %4169 = vst [vmem:[#allocation5 + $0x208] sm:$0xff] %v4161
        %4170 = vst [vmem:[#allocation5 + $0x210] sm:$0xff] %v4162
        %4171 = vst [vmem:[#allocation5 + $0x218] sm:$0xff] %v4163
        %4172 = vst [vmem:[#allocation5 + $0x220] sm:$0xff] %v4164
        %4173 = vst [vmem:[#allocation5 + $0x228] sm:$0xff] %v4165
        %4174 = vst [vmem:[#allocation5 + $0x230] sm:$0xff] %v4166
        %4175 = vst [vmem:[#allocation5 + $0x238] sm:$0xff] %v4167
        %v4176 = vld [vmem:[%s8] sm:$0xff]
        %v4177 = vld [vmem:[#allocation5] sm:$0xff]
        %v4178 = vld [vmem:[#allocation5 + $0x8] sm:$0xff]
        %v4179 = vld [vmem:[#allocation5 + $0x10] sm:$0xff]
        %v4180 = vld [vmem:[#allocation5 + $0x18] sm:$0xff]
        %v4181 = vld [vmem:[#allocation5 + $0x20] sm:$0xff]
        %v4182 = vld [vmem:[#allocation5 + $0x28] sm:$0xff]
        %v4183 = vld [vmem:[#allocation5 + $0x30] sm:$0xff]
        %v4184 = vld [vmem:[#allocation5 + $0x38] sm:$0xff]
        %v4185 = vld [vmem:[#allocation5 + $0x40] sm:$0xff]
        %v4186 = vld [vmem:[#allocation5 + $0x48] sm:$0xff]
        %v4187 = vld [vmem:[#allocation5 + $0x50] sm:$0xff]
        %v4188 = vld [vmem:[#allocation5 + $0x58] sm:$0xff]
        %v4189 = vld [vmem:[#allocation5 + $0x60] sm:$0xff]
        %v4190 = vld [vmem:[#allocation5 + $0x68] sm:$0xff]
        %v4191 = vld [vmem:[#allocation5 + $0x70] sm:$0xff]
        %v4192 = vld [vmem:[#allocation5 + $0x78] sm:$0xff]
        %v4193 = vld [vmem:[#allocation5 + $0x80] sm:$0xff]
        %v4194 = vld [vmem:[#allocation5 + $0x88] sm:$0xff]
        %v4195 = vld [vmem:[#allocation5 + $0x90] sm:$0xff]
        %v4196 = vld [vmem:[#allocation5 + $0x98] sm:$0xff]
        %v4197 = vld [vmem:[#allocation5 + $0xa0] sm:$0xff]
        %v4198 = vld [vmem:[#allocation5 + $0xa8] sm:$0xff]
        %v4199 = vld [vmem:[#allocation5 + $0xb0] sm:$0xff]
        %v4200 = vld [vmem:[#allocation5 + $0xb8] sm:$0xff]
        %v4201 = vld [vmem:[#allocation5 + $0xc0] sm:$0xff]
        %v4202 = vld [vmem:[#allocation5 + $0xc8] sm:$0xff]
        %v4203 = vld [vmem:[#allocation5 + $0xd0] sm:$0xff]
        %v4204 = vld [vmem:[#allocation5 + $0xd8] sm:$0xff]
        %v4205 = vld [vmem:[#allocation5 + $0xe0] sm:$0xff]
        %v4206 = vld [vmem:[#allocation5 + $0xe8] sm:$0xff]
        %v4207 = vld [vmem:[#allocation5 + $0xf0] sm:$0xff]
        %v4208 = vld [vmem:[#allocation5 + $0xf8] sm:$0xff]
        %v4209 = vld [vmem:[#allocation5 + $0x100] sm:$0xff]
        %v4210 = vld [vmem:[#allocation5 + $0x108] sm:$0xff]
        %v4211 = vld [vmem:[#allocation5 + $0x110] sm:$0xff]
        %v4212 = vld [vmem:[#allocation5 + $0x118] sm:$0xff]
        %v4213 = vld [vmem:[#allocation5 + $0x120] sm:$0xff]
        %v4214 = vld [vmem:[#allocation5 + $0x128] sm:$0xff]
        %v4215 = vld [vmem:[#allocation5 + $0x130] sm:$0xff]
        %v4216 = vld [vmem:[#allocation5 + $0x138] sm:$0xff]
        %v4217 = vld [vmem:[#allocation5 + $0x140] sm:$0xff]
        %v4218 = vld [vmem:[#allocation5 + $0x148] sm:$0xff]
        %v4219 = vld [vmem:[#allocation5 + $0x150] sm:$0xff]
        %v4220 = vld [vmem:[#allocation5 + $0x158] sm:$0xff]
        %v4221 = vld [vmem:[#allocation5 + $0x160] sm:$0xff]
        %v4222 = vld [vmem:[#allocation5 + $0x168] sm:$0xff]
        %v4223 = vld [vmem:[#allocation5 + $0x170] sm:$0xff]
        %v4224 = vld [vmem:[#allocation5 + $0x178] sm:$0xff]
        %v4225 = vld [vmem:[#allocation5 + $0x180] sm:$0xff]
        %v4226 = vld [vmem:[#allocation5 + $0x188] sm:$0xff]
        %v4227 = vld [vmem:[#allocation5 + $0x190] sm:$0xff]
        %v4228 = vld [vmem:[#allocation5 + $0x198] sm:$0xff]
        %v4229 = vld [vmem:[#allocation5 + $0x1a0] sm:$0xff]
        %v4230 = vld [vmem:[#allocation5 + $0x1a8] sm:$0xff]
        %v4231 = vld [vmem:[#allocation5 + $0x1b0] sm:$0xff]
        %v4232 = vld [vmem:[#allocation5 + $0x1b8] sm:$0xff]
        %v4233 = vld [vmem:[#allocation5 + $0x1c0] sm:$0xff]
        %v4234 = vld [vmem:[#allocation5 + $0x1c8] sm:$0xff]
        %v4235 = vld [vmem:[#allocation5 + $0x1d0] sm:$0xff]
        %v4236 = vld [vmem:[#allocation5 + $0x1d8] sm:$0xff]
        %v4237 = vld [vmem:[#allocation5 + $0x1e0] sm:$0xff]
        %v4238 = vld [vmem:[#allocation5 + $0x1e8] sm:$0xff]
        %v4239 = vld [vmem:[#allocation5 + $0x1f0] sm:$0xff]
        %v4240 = vld [vmem:[#allocation5 + $0x1f8] sm:$0xff]
        %v4241 = vld [vmem:[#allocation5 + $0x200] sm:$0xff]
        %v4242 = vld [vmem:[#allocation5 + $0x208] sm:$0xff]
        %v4243 = vld [vmem:[#allocation5 + $0x210] sm:$0xff]
        %v4244 = vld [vmem:[#allocation5 + $0x218] sm:$0xff]
        %v4245 = vld [vmem:[#allocation5 + $0x220] sm:$0xff]
        %v4246 = vld [vmem:[#allocation5 + $0x228] sm:$0xff]
        %v4247 = vld [vmem:[#allocation5 + $0x230] sm:$0xff]
        %v4248 = vld [vmem:[#allocation5 + $0x238] sm:$0xff]
        %v4249 = vld [vmem:[%s9] sm:$0xff]
        %4251 = vset.pattern.permute.xlu0 0
        %4252 = vperm.xlu0 %4251, %v4249
        %v4253 = vpop.permute.xlu0 %4252
        %vm4255 = vcmask 588800
        %v4257 = vsel %vm4255, %v4176, 0
        %4259 = vmatprep.subr.mxu0 %v4178
        %4260 = vmatpush1.msra.mxu0 %v4177
        %4261 = vmatprep.subr.mxu0 %v4186
        %4262 = vmatpush1.msra.mxu0 %v4185
        %4263 = vmatprep.subr.mxu0 %v4194
        %4264 = vmatpush1.msra.mxu0 %v4193
        %4265 = vmatprep.subr.mxu0 %v4202
        %4266 = vmatpush1.msra.mxu0 %v4201
        %4267 = vmatprep.subr.mxu0 %v4210
        %4268 = vmatpush1.msra.mxu0 %v4209
        %4269 = vmatprep.subr.mxu0 %v4218
        %4270 = vmatpush1.msra.mxu0 %v4217
        %4271 = vmatprep.subr.mxu0 %v4226
        %4272 = vmatpush1.msra.mxu0 %v4225
        %4273 = vmatprep.subr.mxu0 %v4234
        %4274 = vmatpush1.msra.mxu0 %v4233
        %4275 = vmatprep.subr.mxu0 %v4242
        %4276 = vmatpush1.msra.mxu0 %v4241
        %4277 = vmatprep.subr.mxu0 0.0
        %4278 = vmatpush1.msra.mxu0 0.0
        %4279 = vmatprep.subr.mxu0 0.0
        %4280 = vmatpush1.msra.mxu0 0.0
        %4281 = vmatprep.subr.mxu0 0.0
        %4282 = vmatpush1.msra.mxu0 0.0
        %4283 = vmatprep.subr.mxu0 0.0
        %4284 = vmatpush1.msra.mxu0 0.0
        %4285 = vmatprep.subr.mxu0 0.0
        %4286 = vmatpush1.msra.mxu0 0.0
        %4287 = vmatprep.subr.mxu0 0.0
        %4288 = vmatpush1.msra.mxu0 0.0
        %4289 = vmatprep.subr.mxu0 0.0
        %4290 = vmatpush1.msra.mxu0 0.0
        %4291 = vmatprep.subr.mxu0 0.0
        %4292 = vmatpush1.msra.mxu0 0.0
        %4293 = vmatprep.subr.mxu0 0.0
        %4294 = vmatpush1.msra.mxu0 0.0
        %4295 = vmatprep.subr.mxu0 0.0
        %4296 = vmatpush1.msra.mxu0 0.0
        %4297 = vmatprep.subr.mxu0 0.0
        %4298 = vmatpush1.msra.mxu0 0.0
        %4299 = vmatprep.subr.mxu0 0.0
        %4300 = vmatpush1.msra.mxu0 0.0
        %4301 = vmatprep.subr.mxu0 0.0
        %4302 = vmatpush1.msra.mxu0 0.0
        %4303 = vmatprep.subr.mxu0 0.0
        %4304 = vmatpush1.msra.mxu0 0.0
        %4305 = vmatprep.subr.mxu0 0.0
        %4306 = vmatpush1.msra.mxu0 0.0
        %4307 = vmatprep.subr.mxu0 0.0
        %4308 = vmatpush1.msra.mxu0 0.0
        %4309 = vmatprep.subr.mxu0 0.0
        %4310 = vmatpush1.msra.mxu0 0.0
        %4311 = vmatprep.subr.mxu0 0.0
        %4312 = vmatpush1.msra.mxu0 0.0
        %4313 = vmatprep.subr.mxu0 0.0
        %4314 = vmatpush1.msra.mxu0 0.0
        %4315 = vmatprep.subr.mxu0 0.0
        %4316 = vmatpush1.msra.mxu0 0.0
        %4317 = vmatprep.subr.mxu0 0.0
        %4318 = vmatpush1.msra.mxu0 0.0
        %4319 = vmatprep.subr.mxu0 0.0
        %4320 = vmatpush1.msra.mxu0 0.0
        %4321 = vmatprep.subr.mxu0 0.0
        %4322 = vmatpush1.msra.mxu0 0.0
        %4323 = vmatprep.mubr.f32.mxu0 0.0
        %4324 = vmatmul.mubr.f32.gmra.mrb[0].mxu0 %v4257
        %v4325 = vpop.f32.mrb[0].mxu0
        %v4326 = vadd.f32 %v4253, %v4325
        %v4327 = vpop.f32.mrb[0].mxu0
        %v4328 = vadd.f32 %v4253, %v4327
        %4329 = vdwg.mxu0
        %4330 = vmatprep.subr.mxu0 %v4180
        %4331 = vmatpush1.msra.mxu0 %v4179
        %4332 = vmatprep.subr.mxu0 %v4188
        %4333 = vmatpush1.msra.mxu0 %v4187
        %4334 = vmatprep.subr.mxu0 %v4196
        %4335 = vmatpush1.msra.mxu0 %v4195
        %4336 = vmatprep.subr.mxu0 %v4204
        %4337 = vmatpush1.msra.mxu0 %v4203
        %4338 = vmatprep.subr.mxu0 %v4212
        %4339 = vmatpush1.msra.mxu0 %v4211
        %4340 = vmatprep.subr.mxu0 %v4220
        %4341 = vmatpush1.msra.mxu0 %v4219
        %4342 = vmatprep.subr.mxu0 %v4228
        %4343 = vmatpush1.msra.mxu0 %v4227
        %4344 = vmatprep.subr.mxu0 %v4236
        %4345 = vmatpush1.msra.mxu0 %v4235
        %4346 = vmatprep.subr.mxu0 %v4244
        %4347 = vmatpush1.msra.mxu0 %v4243
        %4348 = vmatprep.subr.mxu0 0.0
        %4349 = vmatpush1.msra.mxu0 0.0
        %4350 = vmatprep.subr.mxu0 0.0
        %4351 = vmatpush1.msra.mxu0 0.0
        %4352 = vmatprep.subr.mxu0 0.0
        %4353 = vmatpush1.msra.mxu0 0.0
        %4354 = vmatprep.subr.mxu0 0.0
        %4355 = vmatpush1.msra.mxu0 0.0
        %4356 = vmatprep.subr.mxu0 0.0
        %4357 = vmatpush1.msra.mxu0 0.0
        %4358 = vmatprep.subr.mxu0 0.0
        %4359 = vmatpush1.msra.mxu0 0.0
        %4360 = vmatprep.subr.mxu0 0.0
        %4361 = vmatpush1.msra.mxu0 0.0
        %4362 = vmatprep.subr.mxu0 0.0
        %4363 = vmatpush1.msra.mxu0 0.0
        %4364 = vmatprep.subr.mxu0 0.0
        %4365 = vmatpush1.msra.mxu0 0.0
        %4366 = vmatprep.subr.mxu0 0.0
        %4367 = vmatpush1.msra.mxu0 0.0
        %4368 = vmatprep.subr.mxu0 0.0
        %4369 = vmatpush1.msra.mxu0 0.0
        %4370 = vmatprep.subr.mxu0 0.0
        %4371 = vmatpush1.msra.mxu0 0.0
        %4372 = vmatprep.subr.mxu0 0.0
        %4373 = vmatpush1.msra.mxu0 0.0
        %4374 = vmatprep.subr.mxu0 0.0
        %4375 = vmatpush1.msra.mxu0 0.0
        %4376 = vmatprep.subr.mxu0 0.0
        %4377 = vmatpush1.msra.mxu0 0.0
        %4378 = vmatprep.subr.mxu0 0.0
        %4379 = vmatpush1.msra.mxu0 0.0
        %4380 = vmatprep.subr.mxu0 0.0
        %4381 = vmatpush1.msra.mxu0 0.0
        %4382 = vmatprep.subr.mxu0 0.0
        %4383 = vmatpush1.msra.mxu0 0.0
        %4384 = vmatprep.subr.mxu0 0.0
        %4385 = vmatpush1.msra.mxu0 0.0
        %4386 = vmatprep.subr.mxu0 0.0
        %4387 = vmatpush1.msra.mxu0 0.0
        %4388 = vmatprep.subr.mxu0 0.0
        %4389 = vmatpush1.msra.mxu0 0.0
        %4390 = vmatprep.subr.mxu0 0.0
        %4391 = vmatpush1.msra.mxu0 0.0
        %4392 = vmatprep.subr.mxu0 0.0
        %4393 = vmatpush1.msra.mxu0 0.0
        %4394 = vmatprep.mubr.f32.mxu0 0.0
        %4395 = vmatmul.mubr.f32.gmra.mrb[0].mxu0 %v4257
        %v4396 = vpop.f32.mrb[0].mxu0
        %v4397 = vadd.f32 %v4253, %v4396
        %v4398 = vpop.f32.mrb[0].mxu0
        %v4399 = vadd.f32 %v4253, %v4398
        %4400 = vdwg.mxu0
        %4401 = vmatprep.subr.mxu0 %v4182
        %4402 = vmatpush1.msra.mxu0 %v4181
        %4403 = vmatprep.subr.mxu0 %v4190
        %4404 = vmatpush1.msra.mxu0 %v4189
        %4405 = vmatprep.subr.mxu0 %v4198
        %4406 = vmatpush1.msra.mxu0 %v4197
        %4407 = vmatprep.subr.mxu0 %v4206
        %4408 = vmatpush1.msra.mxu0 %v4205
        %4409 = vmatprep.subr.mxu0 %v4214
        %4410 = vmatpush1.msra.mxu0 %v4213
        %4411 = vmatprep.subr.mxu0 %v4222
        %4412 = vmatpush1.msra.mxu0 %v4221
        %4413 = vmatprep.subr.mxu0 %v4230
        %4414 = vmatpush1.msra.mxu0 %v4229
        %4415 = vmatprep.subr.mxu0 %v4238
        %4416 = vmatpush1.msra.mxu0 %v4237
        %4417 = vmatprep.subr.mxu0 %v4246
        %4418 = vmatpush1.msra.mxu0 %v4245
        %4419 = vmatprep.subr.mxu0 0.0
        %4420 = vmatpush1.msra.mxu0 0.0
        %4421 = vmatprep.subr.mxu0 0.0
        %4422 = vmatpush1.msra.mxu0 0.0
        %4423 = vmatprep.subr.mxu0 0.0
        %4424 = vmatpush1.msra.mxu0 0.0
        %4425 = vmatprep.subr.mxu0 0.0
        %4426 = vmatpush1.msra.mxu0 0.0
        %4427 = vmatprep.subr.mxu0 0.0
        %4428 = vmatpush1.msra.mxu0 0.0
        %4429 = vmatprep.subr.mxu0 0.0
        %4430 = vmatpush1.msra.mxu0 0.0
        %4431 = vmatprep.subr.mxu0 0.0
        %4432 = vmatpush1.msra.mxu0 0.0
        %4433 = vmatprep.subr.mxu0 0.0
        %4434 = vmatpush1.msra.mxu0 0.0
        %4435 = vmatprep.subr.mxu0 0.0
        %4436 = vmatpush1.msra.mxu0 0.0
        %4437 = vmatprep.subr.mxu0 0.0
        %4438 = vmatpush1.msra.mxu0 0.0
        %4439 = vmatprep.subr.mxu0 0.0
        %4440 = vmatpush1.msra.mxu0 0.0
        %4441 = vmatprep.subr.mxu0 0.0
        %4442 = vmatpush1.msra.mxu0 0.0
        %4443 = vmatprep.subr.mxu0 0.0
        %4444 = vmatpush1.msra.mxu0 0.0
        %4445 = vmatprep.subr.mxu0 0.0
        %4446 = vmatpush1.msra.mxu0 0.0
        %4447 = vmatprep.subr.mxu0 0.0
        %4448 = vmatpush1.msra.mxu0 0.0
        %4449 = vmatprep.subr.mxu0 0.0
        %4450 = vmatpush1.msra.mxu0 0.0
        %4451 = vmatprep.subr.mxu0 0.0
        %4452 = vmatpush1.msra.mxu0 0.0
        %4453 = vmatprep.subr.mxu0 0.0
        %4454 = vmatpush1.msra.mxu0 0.0
        %4455 = vmatprep.subr.mxu0 0.0
        %4456 = vmatpush1.msra.mxu0 0.0
        %4457 = vmatprep.subr.mxu0 0.0
        %4458 = vmatpush1.msra.mxu0 0.0
        %4459 = vmatprep.subr.mxu0 0.0
        %4460 = vmatpush1.msra.mxu0 0.0
        %4461 = vmatprep.subr.mxu0 0.0
        %4462 = vmatpush1.msra.mxu0 0.0
        %4463 = vmatprep.subr.mxu0 0.0
        %4464 = vmatpush1.msra.mxu0 0.0
        %4465 = vmatprep.mubr.f32.mxu0 0.0
        %4466 = vmatmul.mubr.f32.gmra.mrb[0].mxu0 %v4257
        %v4467 = vpop.f32.mrb[0].mxu0
        %v4468 = vadd.f32 %v4253, %v4467
        %v4469 = vpop.f32.mrb[0].mxu0
        %v4470 = vadd.f32 %v4253, %v4469
        %4471 = vdwg.mxu0
        %4472 = vmatprep.subr.mxu0 %v4184
        %4473 = vmatpush1.msra.mxu0 %v4183
        %4474 = vmatprep.subr.mxu0 %v4192
        %4475 = vmatpush1.msra.mxu0 %v4191
        %4476 = vmatprep.subr.mxu0 %v4200
        %4477 = vmatpush1.msra.mxu0 %v4199
        %4478 = vmatprep.subr.mxu0 %v4208
        %4479 = vmatpush1.msra.mxu0 %v4207
        %4480 = vmatprep.subr.mxu0 %v4216
        %4481 = vmatpush1.msra.mxu0 %v4215
        %4482 = vmatprep.subr.mxu0 %v4224
        %4483 = vmatpush1.msra.mxu0 %v4223
        %4484 = vmatprep.subr.mxu0 %v4232
        %4485 = vmatpush1.msra.mxu0 %v4231
        %4486 = vmatprep.subr.mxu0 %v4240
        %4487 = vmatpush1.msra.mxu0 %v4239
        %4488 = vmatprep.subr.mxu0 %v4248
        %4489 = vmatpush1.msra.mxu0 %v4247
        %4490 = vmatprep.subr.mxu0 0.0
        %4491 = vmatpush1.msra.mxu0 0.0
        %4492 = vmatprep.subr.mxu0 0.0
        %4493 = vmatpush1.msra.mxu0 0.0
        %4494 = vmatprep.subr.mxu0 0.0
        %4495 = vmatpush1.msra.mxu0 0.0
        %4496 = vmatprep.subr.mxu0 0.0
        %4497 = vmatpush1.msra.mxu0 0.0
        %4498 = vmatprep.subr.mxu0 0.0
        %4499 = vmatpush1.msra.mxu0 0.0
        %4500 = vmatprep.subr.mxu0 0.0
        %4501 = vmatpush1.msra.mxu0 0.0
        %4502 = vmatprep.subr.mxu0 0.0
        %4503 = vmatpush1.msra.mxu0 0.0
        %4504 = vmatprep.subr.mxu0 0.0
        %4505 = vmatpush1.msra.mxu0 0.0
        %4506 = vmatprep.subr.mxu0 0.0
        %4507 = vmatpush1.msra.mxu0 0.0
        %4508 = vmatprep.subr.mxu0 0.0
        %4509 = vmatpush1.msra.mxu0 0.0
        %4510 = vmatprep.subr.mxu0 0.0
        %4511 = vmatpush1.msra.mxu0 0.0
        %4512 = vmatprep.subr.mxu0 0.0
        %4513 = vmatpush1.msra.mxu0 0.0
        %4514 = vmatprep.subr.mxu0 0.0
        %4515 = vmatpush1.msra.mxu0 0.0
        %4516 = vmatprep.subr.mxu0 0.0
        %4517 = vmatpush1.msra.mxu0 0.0
        %4518 = vmatprep.subr.mxu0 0.0
        %4519 = vmatpush1.msra.mxu0 0.0
        %4520 = vmatprep.subr.mxu0 0.0
        %4521 = vmatpush1.msra.mxu0 0.0
        %4522 = vmatprep.subr.mxu0 0.0
        %4523 = vmatpush1.msra.mxu0 0.0
        %4524 = vmatprep.subr.mxu0 0.0
        %4525 = vmatpush1.msra.mxu0 0.0
        %4526 = vmatprep.subr.mxu0 0.0
        %4527 = vmatpush1.msra.mxu0 0.0
        %4528 = vmatprep.subr.mxu0 0.0
        %4529 = vmatpush1.msra.mxu0 0.0
        %4530 = vmatprep.subr.mxu0 0.0
        %4531 = vmatpush1.msra.mxu0 0.0
        %4532 = vmatprep.subr.mxu0 0.0
        %4533 = vmatpush1.msra.mxu0 0.0
        %4534 = vmatprep.subr.mxu0 0.0
        %4535 = vmatpush1.msra.mxu0 0.0
        %4536 = vmatprep.mubr.f32.mxu0 0.0
        %4537 = vmatmul.mubr.f32.gmra.mrb[0].mxu0 %v4257
        %v4538 = vpop.f32.mrb[0].mxu0
        %v4539 = vadd.f32 %v4253, %v4538
        %v4540 = vpop.f32.mrb[0].mxu0
        %v4541 = vadd.f32 %v4253, %v4540
        %4542 = vdwg.mxu0
        %vm4543 = vcmp.gt.f32.partialorder %v4326, 0.0
        %vm4544 = vcmp.gt.f32.partialorder %v4328, 0.0
        %vm4545 = vcmp.gt.f32.partialorder %v4397, 0.0
        %vm4546 = vcmp.gt.f32.partialorder %v4399, 0.0
        %vm4547 = vcmp.gt.f32.partialorder %v4468, 0.0
        %vm4548 = vcmp.gt.f32.partialorder %v4470, 0.0
        %vm4549 = vcmp.gt.f32.partialorder %v4539, 0.0
        %vm4550 = vcmp.gt.f32.partialorder %v4541, 0.0
        %v4551 = vmul.f32 %v4326, 0.01
        %v4552 = vmul.f32 %v4328, 0.01
        %v4553 = vmul.f32 %v4397, 0.01
        %v4554 = vmul.f32 %v4399, 0.01
        %v4555 = vmul.f32 %v4468, 0.01
        %v4556 = vmul.f32 %v4470, 0.01
        %v4557 = vmul.f32 %v4539, 0.01
        %v4558 = vmul.f32 %v4541, 0.01
        %v4559 = vsel %vm4543, %v4326, %v4551
        %v4560 = vsel %vm4544, %v4328, %v4552
        %v4561 = vsel %vm4545, %v4397, %v4553
        %v4562 = vsel %vm4546, %v4399, %v4554
        %v4563 = vsel %vm4547, %v4468, %v4555
        %v4564 = vsel %vm4548, %v4470, %v4556
        %v4565 = vsel %vm4549, %v4539, %v4557
        %v4566 = vsel %vm4550, %v4541, %v4558
        %4567 = vst [vmem:[%s440] sm:$0xff] %v4559
        %4568 = vst [vmem:[%s440 + $0x8] sm:$0xff] %v4560
        %4569 = vst [vmem:[%s440 + $0x10] sm:$0xff] %v4561
        %4570 = vst [vmem:[%s440 + $0x18] sm:$0xff] %v4562
        %4571 = vst [vmem:[%s440 + $0x20] sm:$0xff] %v4563
        %4572 = vst [vmem:[%s440 + $0x28] sm:$0xff] %v4564
        %4573 = vst [vmem:[%s440 + $0x30] sm:$0xff] %v4565
        %4574 = vst [vmem:[%s440 + $0x38] sm:$0xff] %v4566
        %s4575 = sand.u32 %s263, 1
        %s4576 = scalar_lea.sflag [#allocation8], %s4575
        %s4577 = sand.u32 %s263, 1
        %s4578 = smul.addr %s4577, 64
        %s4579 = scalar_lea.vmem [#allocation12], %s4578
        // Predicated region
        $region73: #{tpu_custom_call.1} parent=59 // pred_check
          %p4580 = pneg %p273
        $region74: #{tpu_custom_call.1} parent=59 // pred_check_branch
          %4582 = sbr.rel (%p4580) target = $region76
        $region75: #{tpu_custom_call.1} parent=59 // pred_region
          %s4584 = ssub.s32 1024, 1024
          %4585 = vsyncadd %s4576, %s4584
          %s4586 = smul.addr %s30, 8
          %s4587 = smul.addr %s4586, 128
          %s4588 = scalar_lea.hbm %s10, %s4587
          %s4590 = sshll.u32 %s4579, 4
          %s4591 = int_to_ptr.vmem [resolvable:$true] %s4590
          %4593 = dma.vmem_to_hbm [thread:$0]  %s4591, 1024, %s4588, %s4576
        $region76: #{tpu_custom_call.1} parent=59 // pred_fallthru
          _
      $region60: #{tpu_custom_call.1} parent=5 // pred_fallthru
        _
      %p4594 = scmp.le.s32.totalorder 2, %s25
      // Predicated region
      $region77: #{tpu_custom_call.1} parent=5 // pred_check
        %p4595 = pneg %p4594
      $region78: #{tpu_custom_call.1} parent=5 // pred_check_branch
        %4597 = sbr.rel (%p4595) target = $region80
      $region79: #{tpu_custom_call.1} parent=5 // pred_region
        %s4598 = ssub.s32 %s25, 2
        // Predicated region
        $region81: #{tpu_custom_call.1} parent=79 // pred_check
          %p4599 = pneg %p279
        $region82: #{tpu_custom_call.1} parent=79 // pred_check_branch
          %4601 = sbr.rel (%p4599) target = $region84
        $region83: #{tpu_custom_call.1} parent=79 // pred_region
          %s4602 = sand.u32 %s264, 1
          %s4603 = scalar_lea.sflag [#allocation8], %s4602
          %s4604 = sand.u32 %s264, 1
          %s4605 = smul.addr %s4604, 64
          %s4606 = scalar_lea.vmem [#allocation12], %s4605
          %4607 = dma.done %s4603, 1024
        $region84: #{tpu_custom_call.1} parent=79 // pred_fallthru
          _
      $region80: #{tpu_custom_call.1} parent=5 // pred_fallthru
        _
    $region6: #{tpu_custom_call.1} parent=1 // loop_footer
      %s29 = sadd.s32 1, %s25
    $region7: #{tpu_custom_call.1} parent=1 // loop_footer_branch
      %24 = sbr.rel target = $region3
    $region8: #{tpu_custom_call.1} parent=1 // loop_exit
      _
    %4608 = vsyncpa [#allocation7], 1
    %s4609 = scalar_lea.sflag [#allocation7], 1
    %4610 = vsyncpa %s4609, 1
    %4611 = vsyncpa [#allocation10], 1
    %s4612 = scalar_lea.sflag [#allocation10], 1
    %4613 = vsyncpa %s4612, 1
    %4614 = vsyncpa [#allocation8], 1
    %s4615 = scalar_lea.sflag [#allocation8], 1
    %4616 = vsyncpa %s4615, 1

</llo_original>
